<compile_context>
chip_gen: v7x
topology: tpu7x:2x2x1
jax: 0.10.0
libtpu: 0.0.40
codegen_flags: <defaults>
</compile_context>

<pallas_src>
import functools

import jax
import jax.numpy as jnp
from jax.experimental import pallas as pl
from jax.experimental.pallas import tpu as pltpu

INPUT_DIMS = 784
HIDDEN1 = 32
HIDDEN2 = 16
OUTPUT_DIMS = 10

# Mem-bound sweet spot: big tiles amortize per-step overhead. f32 x at 2048
# rows double-buffers to ~12.8 MiB, comfortably inside the 32 MiB VMEM limit on
# v5e/v6e/v7x. (v5e could go to 4096+, v7x should stay <= ~4096; 2048 is a safe
# portable default.)
DEFAULT_TILE_B = 2048


def _round_up(n, m):
    return ((n + m - 1) // m) * m


def mlp_kernel(x_ref, w1_ref, b1_ref, w2_ref, b2_ref, w3_ref, b3_ref, o_ref,
               *, precision):
    # Hoist loop-invariant bias reads once per tile (JAX does not CSE broadcasts).
    b1 = b1_ref[...]
    b2 = b2_ref[...]
    b3 = b3_ref[...]

    x = x_ref[...]
    # Three fused MXU matmuls with f32 accumulation; ReLU on the VPU.
    h1 = jnp.dot(x, w1_ref[...], preferred_element_type=jnp.float32,
                 precision=precision) + b1
    h1 = jnp.maximum(h1, 0.0)
    h2 = jnp.dot(h1.astype(w2_ref.dtype), w2_ref[...],
                 preferred_element_type=jnp.float32, precision=precision) + b2
    h2 = jnp.maximum(h2, 0.0)
    out = jnp.dot(h2.astype(w3_ref.dtype), w3_ref[...],
                  preferred_element_type=jnp.float32, precision=precision) + b3
    o_ref[...] = out.astype(o_ref.dtype)


def _select_tile(batch, tile_b, sublane, min_grid_steps):
    """Pick a batch tile: multiple of the sublane packing, never larger than
    needed, and split into >= min_grid_steps tiles (when the batch allows) so
    the 'parallel' grid axis can shard across v7x's two TensorCores."""
    tb = min(tile_b, _round_up(batch, sublane))
    if min_grid_steps > 1:
        tb = min(tb, _round_up(pl.cdiv(batch, min_grid_steps), sublane))
    return max(sublane, _round_up(tb, sublane))


def net_forward(x, params, *, tile_b=DEFAULT_TILE_B, min_grid_steps=2):
    """Forward pass of Net. Pass bf16 (or int8-quantized) x and weights from
    the producer to shrink the dominant HBM stream; no casts are done here.
    Accumulation is always f32 inside the kernel; logits are returned as f32."""
    w1, b1, w2, b2, w3, b3 = params
    B = x.shape[0]
    assert x.shape[1] == INPUT_DIMS, x.shape

    itemsize = jnp.dtype(x.dtype).itemsize
    # Sublane packing: 8 rows/vreg for 4-byte dtypes, 16 for bf16, 32 for int8.
    sublane = max(8, 32 // itemsize)
    tb = _select_tile(B, tile_b, sublane, min_grid_steps)
    grid = (pl.cdiv(B, tb),)  # partial tail block is masked by Pallas on writeback

    x_spec = pl.BlockSpec((tb, INPUT_DIMS), lambda i: (i, 0))
    out_spec = pl.BlockSpec((tb, OUTPUT_DIMS), lambda i: (i, 0))
    # Weights/biases: same block every grid step -> stay VMEM-resident.
    resident = lambda shape: pl.BlockSpec(shape, lambda i: (0, 0))

    # Full-precision MXU passes for f32 parity with the PyTorch module; native
    # precision for narrow dtypes (bf16 etc.).
    precision = (jax.lax.Precision.HIGHEST
                 if x.dtype == jnp.float32 else jax.lax.Precision.DEFAULT)

    flops = 2 * B * (INPUT_DIMS * HIDDEN1 + HIDDEN1 * HIDDEN2
                     + HIDDEN2 * OUTPUT_DIMS)
    bytes_accessed = (
        B * INPUT_DIMS * itemsize                      # stream x (dominant)
        + B * OUTPUT_DIMS * 4                          # store logits (f32)
        + sum(w.size * jnp.dtype(w.dtype).itemsize for w in (w1, w2, w3))
        + sum(b.size * jnp.dtype(b.dtype).itemsize for b in (b1, b2, b3))
    )

    return pl.pallas_call(
        functools.partial(mlp_kernel, precision=precision),
        out_shape=jax.ShapeDtypeStruct((B, OUTPUT_DIMS), jnp.float32),
        grid=grid,
        in_specs=[
            x_spec,
            resident(w1.shape),
            resident(b1.shape),
            resident(w2.shape),
            resident(b2.shape),
            resident(w3.shape),
            resident(b3.shape),
        ],
        out_specs=out_spec,
        compiler_params=pltpu.CompilerParams(
            dimension_semantics=("parallel",),       # megacore sharding on v7x
            vmem_limit_bytes=32 * 1024 * 1024,       # safe on v5e/v6e/v7x
        ),
        cost_estimate=pl.CostEstimate(
            flops=flops, transcendentals=0, bytes_accessed=bytes_accessed
        ),
    )(x, w1, b1, w2, b2, w3, b3)


def init_params(key, dtype=jnp.float32):
    # Mimic PyTorch Linear default init: U(-1/sqrt(fan_in), +1/sqrt(fan_in)).
    def linear(key, fan_in, fan_out):
        kw, kb = jax.random.split(key)
        bound = 1.0 / jnp.sqrt(fan_in)
        w = jax.random.uniform(kw, (fan_in, fan_out), jnp.float32,
                               -bound, bound).astype(dtype)
        b = jax.random.uniform(kb, (1, fan_out), jnp.float32, -bound, bound)
        return w, b  # biases stay f32 (added post-accumulation in the kernel)

    k1, k2, k3 = jax.random.split(key, 3)
    w1, b1 = linear(k1, INPUT_DIMS, HIDDEN1)
    w2, b2 = linear(k2, HIDDEN1, HIDDEN2)
    w3, b3 = linear(k3, HIDDEN2, OUTPUT_DIMS)
    return (w1, b1, w2, b2, w3, b3)


def reference_forward(x, params, precision=jax.lax.Precision.HIGHEST):
    w1, b1, w2, b2, w3, b3 = params
    h1 = jnp.maximum(jnp.dot(x, w1, precision=precision) + b1, 0.0)
    h2 = jnp.maximum(jnp.dot(h1, w2, precision=precision) + b2, 0.0)
    return jnp.dot(h2, w3, precision=precision) + b3


if __name__ == "__main__":
    key = jax.random.PRNGKey(0)
    kx, kp, kx2 = jax.random.split(key, 3)
    params = init_params(kp)

    # Small primary test (single tile).
    B = 8
    x = jax.random.normal(kx, (B, INPUT_DIMS), dtype=jnp.float32)
    out = jax.block_until_ready(net_forward(x, params))
    ref = reference_forward(x, params)
    assert out.shape == (B, OUTPUT_DIMS), out.shape
    assert jnp.allclose(out, ref, atol=1e-4, rtol=1e-4), "mismatch vs reference (B=8)"

    # Exercise the multi-tile grid AND the unpadded partial tail block
    # (B=13, tb=8 -> 2 grid steps, last block has 3 masked rows).
    B2 = 13
    x2 = jax.random.normal(kx2, (B2, INPUT_DIMS), dtype=jnp.float32)
    out2 = jax.block_until_ready(net_forward(x2, params, tile_b=8))
    ref2 = reference_forward(x2, params)
    assert out2.shape == (B2, OUTPUT_DIMS), out2.shape
    assert jnp.allclose(out2, ref2, atol=1e-4, rtol=1e-4), "mismatch vs reference (B=13)"

    # bf16 path "at the source": cast x/weights before calling (no wrapper cast).
    xb = x.astype(jnp.bfloat16)
    params_b = tuple(p.astype(jnp.bfloat16) if p.ndim == 2 and p.shape[0] > 1 else p
                     for p in params)
    out_b = jax.block_until_ready(net_forward(xb, params_b))
    assert out_b.shape == (B, OUTPUT_DIMS), out_b.shape
    assert jnp.allclose(out_b, ref, atol=5e-2, rtol=5e-2), "mismatch vs reference (bf16)"

    print("KERNEL_OK")
</pallas_src>

<mosaic_0001>
module attributes {stable_mosaic.version = 11 : i64} {
  func.func @mlp_kernel(%arg0: i32, %arg1: memref<8x784xf32, #tpu.memory_space<vmem>>, %arg2: memref<784x32xf32, #tpu.memory_space<vmem>>, %arg3: memref<1x32xf32, #tpu.memory_space<vmem>>, %arg4: memref<32x16xf32, #tpu.memory_space<vmem>>, %arg5: memref<1x16xf32, #tpu.memory_space<vmem>>, %arg6: memref<16x10xf32, #tpu.memory_space<vmem>>, %arg7: memref<1x10xf32, #tpu.memory_space<vmem>>, %arg8: memref<8x10xf32, #tpu.memory_space<vmem>>) attributes {dimension_semantics = [#tpu.dimension_semantics<parallel>], iteration_bounds = array<i64: 1>, scalar_prefetch = 0 : i64, scratch_operands = 0 : i64, tpu.core_type = #tpu.core_type<tc>, window_params = [{transform_indices = @transform_0, window_bounds = array<i64: 8, 784>}, {pipeline_mode = #tpu.pipeline_mode<synchronous>, transform_indices = @transform_1, window_bounds = array<i64: 784, 32>}, {pipeline_mode = #tpu.pipeline_mode<synchronous>, transform_indices = @transform_2, window_bounds = array<i64: 1, 32>}, {pipeline_mode = #tpu.pipeline_mode<synchronous>, transform_indices = @transform_3, window_bounds = array<i64: 32, 16>}, {pipeline_mode = #tpu.pipeline_mode<synchronous>, transform_indices = @transform_4, window_bounds = array<i64: 1, 16>}, {pipeline_mode = #tpu.pipeline_mode<synchronous>, transform_indices = @transform_5, window_bounds = array<i64: 16, 10>}, {pipeline_mode = #tpu.pipeline_mode<synchronous>, transform_indices = @transform_6, window_bounds = array<i64: 1, 10>}, {transform_indices = @transform_7, window_bounds = array<i64: 8, 10>}]} {
    %c0 = arith.constant 0 : index
    %c0_0 = arith.constant 0 : index
    %0 = vector.load %arg3[%c0, %c0_0] : memref<1x32xf32, #tpu.memory_space<vmem>>, vector<1x32xf32>
    %c0_1 = arith.constant 0 : index
    %c0_2 = arith.constant 0 : index
    %1 = vector.load %arg5[%c0_1, %c0_2] : memref<1x16xf32, #tpu.memory_space<vmem>>, vector<1x16xf32>
    %c0_3 = arith.constant 0 : index
    %c0_4 = arith.constant 0 : index
    %2 = vector.load %arg7[%c0_3, %c0_4] : memref<1x10xf32, #tpu.memory_space<vmem>>, vector<1x10xf32>
    %c0_5 = arith.constant 0 : index
    %c0_6 = arith.constant 0 : index
    %3 = vector.load %arg1[%c0_5, %c0_6] : memref<8x784xf32, #tpu.memory_space<vmem>>, vector<8x784xf32>
    %c0_7 = arith.constant 0 : index
    %c0_8 = arith.constant 0 : index
    %4 = vector.load %arg2[%c0_7, %c0_8] : memref<784x32xf32, #tpu.memory_space<vmem>>, vector<784x32xf32>
    %cst = arith.constant dense<0.000000e+00> : vector<8x32xf32>
    %5 = tpu.matmul %3, %4, %cst {dimension_numbers = #tpu.dot_dimension_numbers<[1], [0], [0], [1], [0, 0, 1, 1], [], []>, precision = #tpu.contract_precision<fp32>} : vector<8x784xf32>, vector<784x32xf32>, vector<8x32xf32> -> vector<8x32xf32>
    %6 = vector.broadcast %0 : vector<1x32xf32> to vector<8x32xf32>
    %7 = arith.addf %5, %6 : vector<8x32xf32>
    %cst_9 = arith.constant 0.000000e+00 : f32
    %8 = vector.broadcast %cst_9 : f32 to vector<8x32xf32>
    %9 = arith.maximumf %7, %8 : vector<8x32xf32>
    %c0_10 = arith.constant 0 : index
    %c0_11 = arith.constant 0 : index
    %10 = vector.load %arg4[%c0_10, %c0_11] : memref<32x16xf32, #tpu.memory_space<vmem>>, vector<32x16xf32>
    %cst_12 = arith.constant dense<0.000000e+00> : vector<8x16xf32>
    %11 = tpu.matmul %9, %10, %cst_12 {dimension_numbers = #tpu.dot_dimension_numbers<[1], [0], [0], [1], [0, 0, 1, 1], [], []>, precision = #tpu.contract_precision<fp32>} : vector<8x32xf32>, vector<32x16xf32>, vector<8x16xf32> -> vector<8x16xf32>
    %12 = vector.broadcast %1 : vector<1x16xf32> to vector<8x16xf32>
    %13 = arith.addf %11, %12 : vector<8x16xf32>
    %cst_13 = arith.constant 0.000000e+00 : f32
    %14 = vector.broadcast %cst_13 : f32 to vector<8x16xf32>
    %15 = arith.maximumf %13, %14 : vector<8x16xf32>
    %c0_14 = arith.constant 0 : index
    %c0_15 = arith.constant 0 : index
    %16 = vector.load %arg6[%c0_14, %c0_15] : memref<16x10xf32, #tpu.memory_space<vmem>>, vector<16x10xf32>
    %cst_16 = arith.constant dense<0.000000e+00> : vector<8x10xf32>
    %17 = tpu.matmul %15, %16, %cst_16 {dimension_numbers = #tpu.dot_dimension_numbers<[1], [0], [0], [1], [0, 0, 1, 1], [], []>, precision = #tpu.contract_precision<fp32>} : vector<8x16xf32>, vector<16x10xf32>, vector<8x10xf32> -> vector<8x10xf32>
    %18 = vector.broadcast %2 : vector<1x10xf32> to vector<8x10xf32>
    %19 = arith.addf %17, %18 : vector<8x10xf32>
    %c0_17 = arith.constant 0 : index
    %c0_18 = arith.constant 0 : index
    %20 = vector.load %arg8[%c0_17, %c0_18] : memref<8x10xf32, #tpu.memory_space<vmem>>, vector<8x10xf32>
    tpu.vector_store %arg8[%c0_17, %c0_18], %19 {strides = array<i32>} : memref<8x10xf32, #tpu.memory_space<vmem>>, vector<8x10xf32>,
    return
  }
  func.func @transform_0(%arg0: i32) -> (i32, i32) {
    %c0_i32 = arith.constant 0 : i32
    %c0_i32_0 = arith.constant 0 : i32
    return %arg0, %c0_i32 : i32, i32
  }
  func.func @transform_1(%arg0: i32) -> (i32, i32) {
    %c0_i32 = arith.constant 0 : i32
    %c0_i32_0 = arith.constant 0 : i32
    %c0_i32_1 = arith.constant 0 : i32
    return %c0_i32, %c0_i32_0 : i32, i32
  }
  func.func @transform_2(%arg0: i32) -> (i32, i32) {
    %c0_i32 = arith.constant 0 : i32
    %c0_i32_0 = arith.constant 0 : i32
    %c0_i32_1 = arith.constant 0 : i32
    return %c0_i32, %c0_i32_0 : i32, i32
  }
  func.func @transform_3(%arg0: i32) -> (i32, i32) {
    %c0_i32 = arith.constant 0 : i32
    %c0_i32_0 = arith.constant 0 : i32
    %c0_i32_1 = arith.constant 0 : i32
    return %c0_i32, %c0_i32_0 : i32, i32
  }
  func.func @transform_4(%arg0: i32) -> (i32, i32) {
    %c0_i32 = arith.constant 0 : i32
    %c0_i32_0 = arith.constant 0 : i32
    %c0_i32_1 = arith.constant 0 : i32
    return %c0_i32, %c0_i32_0 : i32, i32
  }
  func.func @transform_5(%arg0: i32) -> (i32, i32) {
    %c0_i32 = arith.constant 0 : i32
    %c0_i32_0 = arith.constant 0 : i32
    %c0_i32_1 = arith.constant 0 : i32
    return %c0_i32, %c0_i32_0 : i32, i32
  }
  func.func @transform_6(%arg0: i32) -> (i32, i32) {
    %c0_i32 = arith.constant 0 : i32
    %c0_i32_0 = arith.constant 0 : i32
    %c0_i32_1 = arith.constant 0 : i32
    return %c0_i32, %c0_i32_0 : i32, i32
  }
  func.func @transform_7(%arg0: i32) -> (i32, i32) {
    %c0_i32 = arith.constant 0 : i32
    %c0_i32_0 = arith.constant 0 : i32
    return %arg0, %c0_i32 : i32, i32
  }
}

</mosaic_0001>

<llo_original>
// kernel: tpu_custom_call.1
$region0: #{tpu_custom_call.1}
  #allocation0 [shape = 'u32[]', space=smem, size = 0x4, offset = 0x4, fixed_abs, tag = 'smem constant byte address 0x4 - core index']
  #allocation1 [shape = 'u32[144,128]{1,0:T(1,128)}', space=vmem, size = 0x12000, scoped, tag = 'internal scratch']
  %s0 = inlined_call_operand.vmem [shape: f32[8,784], index: 0, kind: input, shape index: {}]
  %s1 = inlined_call_operand.vmem [shape: f32[784,32], index: 1, kind: input, shape index: {}]
  %s2 = inlined_call_operand.vmem [shape: f32[1,32], index: 2, kind: input, shape index: {}]
  %s3 = inlined_call_operand.vmem [shape: f32[32,16], index: 3, kind: input, shape index: {}]
  %s4 = inlined_call_operand.vmem [shape: f32[1,16], index: 4, kind: input, shape index: {}]
  %s5 = inlined_call_operand.vmem [shape: f32[16,10], index: 5, kind: input, shape index: {}]
  %s6 = inlined_call_operand.vmem [shape: f32[1,10], index: 6, kind: input, shape index: {}]
  %s7 = inlined_call_operand.hbm [shape: f32[8,10], index: 7, kind: output, shape index: {}]
  %s8 = sld [smem:[#allocation0]]
  $region38: #{tpu_custom_call.1} parent=0
    _
  %s10 = ssub.s32 1, %s8
  %s11 = scalar_select 0, %s10, %s8
  $region1: #{tpu_custom_call.1} parent=0
    #allocation2 [shape = 'u8[4096]{0}', space=vmem, size = 0x1000, scoped, tag = 'output window, operand 0, single buffered']
    #allocation3 [shape = 's32[1]{0}', space=sflag, size = 0x4, scoped, tag = 'scoped memory for tpu_custom_call.1']
    %12 = vsyncpa [#allocation3], 0
    // Predicated region
    $region2: #{tpu_custom_call.1} parent=1 // pred_check
      _
    $region3: #{tpu_custom_call.1} parent=1 // pred_check_branch
      %14 = sbr.rel (0) target = $region5
    $region4: #{tpu_custom_call.1} parent=1 // pred_region
      _
    $region5: #{tpu_custom_call.1} parent=1 // pred_fallthru
      _
    // Predicated region
    $region6: #{tpu_custom_call.1} parent=1 // pred_check
      _
    $region7: #{tpu_custom_call.1} parent=1 // pred_check_branch
      %16 = sbr.rel (0) target = $region9
    $region8: #{tpu_custom_call.1} parent=1 // pred_region
      _
    $region9: #{tpu_custom_call.1} parent=1 // pred_fallthru
      _
    // Predicated region
    $region10: #{tpu_custom_call.1} parent=1 // pred_check
      _
    $region11: #{tpu_custom_call.1} parent=1 // pred_check_branch
      %18 = sbr.rel (0) target = $region13
    $region12: #{tpu_custom_call.1} parent=1 // pred_region
      _
    $region13: #{tpu_custom_call.1} parent=1 // pred_fallthru
      _
    // Predicated region
    $region14: #{tpu_custom_call.1} parent=1 // pred_check
      _
    $region15: #{tpu_custom_call.1} parent=1 // pred_check_branch
      %20 = sbr.rel (0) target = $region17
    $region16: #{tpu_custom_call.1} parent=1 // pred_region
      _
    $region17: #{tpu_custom_call.1} parent=1 // pred_fallthru
      _
    // Predicated region
    $region18: #{tpu_custom_call.1} parent=1 // pred_check
      _
    $region19: #{tpu_custom_call.1} parent=1 // pred_check_branch
      %22 = sbr.rel (0) target = $region21
    $region20: #{tpu_custom_call.1} parent=1 // pred_region
      _
    $region21: #{tpu_custom_call.1} parent=1 // pred_fallthru
      _
    // Predicated region
    $region22: #{tpu_custom_call.1} parent=1 // pred_check
      _
    $region23: #{tpu_custom_call.1} parent=1 // pred_check_branch
      %24 = sbr.rel (0) target = $region25
    $region24: #{tpu_custom_call.1} parent=1 // pred_region
      _
    $region25: #{tpu_custom_call.1} parent=1 // pred_fallthru
      _
    // Predicated region
    $region26: #{tpu_custom_call.1} parent=1 // pred_check
      _
    $region27: #{tpu_custom_call.1} parent=1 // pred_check_branch
      %26 = sbr.rel (0) target = $region29
    $region28: #{tpu_custom_call.1} parent=1 // pred_region
      _
    $region29: #{tpu_custom_call.1} parent=1 // pred_fallthru
      _
    %v27 = vld [vmem:[%s2] sm:$0x1]
    %v28 = vld [vmem:[%s4] sm:$0x1]
    %v29 = vld [vmem:[%s6] sm:$0x1]
    %v30 = vld [vmem:[%s0] sm:$0xff]
    %v31 = vld [vmem:[%s0 + $0x8] sm:$0xff]
    %v32 = vld [vmem:[%s0 + $0x10] sm:$0xff]
    %v33 = vld [vmem:[%s0 + $0x18] sm:$0xff]
    %v34 = vld [vmem:[%s0 + $0x20] sm:$0xff]
    %v35 = vld [vmem:[%s0 + $0x28] sm:$0xff]
    %v36 = vld [vmem:[%s0 + $0x30] sm:$0xff]
    %v37 = vld [vmem:[%s1] sm:$0xff]
    %v38 = vld [vmem:[%s1 + $0x8] sm:$0xff]
    %v39 = vld [vmem:[%s1 + $0x10] sm:$0xff]
    %v40 = vld [vmem:[%s1 + $0x18] sm:$0xff]
    %v41 = vld [vmem:[%s1 + $0x20] sm:$0xff]
    %v42 = vld [vmem:[%s1 + $0x28] sm:$0xff]
    %v43 = vld [vmem:[%s1 + $0x30] sm:$0xff]
    %v44 = vld [vmem:[%s1 + $0x38] sm:$0xff]
    %v45 = vld [vmem:[%s1 + $0x40] sm:$0xff]
    %v46 = vld [vmem:[%s1 + $0x48] sm:$0xff]
    %v47 = vld [vmem:[%s1 + $0x50] sm:$0xff]
    %v48 = vld [vmem:[%s1 + $0x58] sm:$0xff]
    %v49 = vld [vmem:[%s1 + $0x60] sm:$0xff]
    %v50 = vld [vmem:[%s1 + $0x68] sm:$0xff]
    %v51 = vld [vmem:[%s1 + $0x70] sm:$0xff]
    %v52 = vld [vmem:[%s1 + $0x78] sm:$0xff]
    %v53 = vld [vmem:[%s1 + $0x80] sm:$0xff]
    %v54 = vld [vmem:[%s1 + $0x88] sm:$0xff]
    %v55 = vld [vmem:[%s1 + $0x90] sm:$0xff]
    %v56 = vld [vmem:[%s1 + $0x98] sm:$0xff]
    %v57 = vld [vmem:[%s1 + $0xa0] sm:$0xff]
    %v58 = vld [vmem:[%s1 + $0xa8] sm:$0xff]
    %v59 = vld [vmem:[%s1 + $0xb0] sm:$0xff]
    %v60 = vld [vmem:[%s1 + $0xb8] sm:$0xff]
    %v61 = vld [vmem:[%s1 + $0xc0] sm:$0xff]
    %v62 = vld [vmem:[%s1 + $0xc8] sm:$0xff]
    %v63 = vld [vmem:[%s1 + $0xd0] sm:$0xff]
    %v64 = vld [vmem:[%s1 + $0xd8] sm:$0xff]
    %v65 = vld [vmem:[%s1 + $0xe0] sm:$0xff]
    %v66 = vld [vmem:[%s1 + $0xe8] sm:$0xff]
    %v67 = vld [vmem:[%s1 + $0xf0] sm:$0xff]
    %v68 = vld [vmem:[%s1 + $0xf8] sm:$0xff]
    %v69 = vld [vmem:[%s1 + $0x100] sm:$0xff]
    %v70 = vld [vmem:[%s1 + $0x108] sm:$0xff]
    %v71 = vld [vmem:[%s1 + $0x110] sm:$0xff]
    %v72 = vld [vmem:[%s1 + $0x118] sm:$0xff]
    %v73 = vld [vmem:[%s1 + $0x120] sm:$0xff]
    %v74 = vld [vmem:[%s1 + $0x128] sm:$0xff]
    %v75 = vld [vmem:[%s1 + $0x130] sm:$0xff]
    %v76 = vld [vmem:[%s1 + $0x138] sm:$0xff]
    %v77 = vld [vmem:[%s1 + $0x140] sm:$0xff]
    %v78 = vld [vmem:[%s1 + $0x148] sm:$0xff]
    %v79 = vld [vmem:[%s1 + $0x150] sm:$0xff]
    %v80 = vld [vmem:[%s1 + $0x158] sm:$0xff]
    %v81 = vld [vmem:[%s1 + $0x160] sm:$0xff]
    %v82 = vld [vmem:[%s1 + $0x168] sm:$0xff]
    %v83 = vld [vmem:[%s1 + $0x170] sm:$0xff]
    %v84 = vld [vmem:[%s1 + $0x178] sm:$0xff]
    %v85 = vld [vmem:[%s1 + $0x180] sm:$0xff]
    %v86 = vld [vmem:[%s1 + $0x188] sm:$0xff]
    %v87 = vld [vmem:[%s1 + $0x190] sm:$0xff]
    %v88 = vld [vmem:[%s1 + $0x198] sm:$0xff]
    %v89 = vld [vmem:[%s1 + $0x1a0] sm:$0xff]
    %v90 = vld [vmem:[%s1 + $0x1a8] sm:$0xff]
    %v91 = vld [vmem:[%s1 + $0x1b0] sm:$0xff]
    %v92 = vld [vmem:[%s1 + $0x1b8] sm:$0xff]
    %v93 = vld [vmem:[%s1 + $0x1c0] sm:$0xff]
    %v94 = vld [vmem:[%s1 + $0x1c8] sm:$0xff]
    %v95 = vld [vmem:[%s1 + $0x1d0] sm:$0xff]
    %v96 = vld [vmem:[%s1 + $0x1d8] sm:$0xff]
    %v97 = vld [vmem:[%s1 + $0x1e0] sm:$0xff]
    %v98 = vld [vmem:[%s1 + $0x1e8] sm:$0xff]
    %v99 = vld [vmem:[%s1 + $0x1f0] sm:$0xff]
    %v100 = vld [vmem:[%s1 + $0x1f8] sm:$0xff]
    %v101 = vld [vmem:[%s1 + $0x200] sm:$0xff]
    %v102 = vld [vmem:[%s1 + $0x208] sm:$0xff]
    %v103 = vld [vmem:[%s1 + $0x210] sm:$0xff]
    %v104 = vld [vmem:[%s1 + $0x218] sm:$0xff]
    %v105 = vld [vmem:[%s1 + $0x220] sm:$0xff]
    %v106 = vld [vmem:[%s1 + $0x228] sm:$0xff]
    %v107 = vld [vmem:[%s1 + $0x230] sm:$0xff]
    %v108 = vld [vmem:[%s1 + $0x238] sm:$0xff]
    %v109 = vld [vmem:[%s1 + $0x240] sm:$0xff]
    %v110 = vld [vmem:[%s1 + $0x248] sm:$0xff]
    %v111 = vld [vmem:[%s1 + $0x250] sm:$0xff]
    %v112 = vld [vmem:[%s1 + $0x258] sm:$0xff]
    %v113 = vld [vmem:[%s1 + $0x260] sm:$0xff]
    %v114 = vld [vmem:[%s1 + $0x268] sm:$0xff]
    %v115 = vld [vmem:[%s1 + $0x270] sm:$0xff]
    %v116 = vld [vmem:[%s1 + $0x278] sm:$0xff]
    %v117 = vld [vmem:[%s1 + $0x280] sm:$0xff]
    %v118 = vld [vmem:[%s1 + $0x288] sm:$0xff]
    %v119 = vld [vmem:[%s1 + $0x290] sm:$0xff]
    %v120 = vld [vmem:[%s1 + $0x298] sm:$0xff]
    %v121 = vld [vmem:[%s1 + $0x2a0] sm:$0xff]
    %v122 = vld [vmem:[%s1 + $0x2a8] sm:$0xff]
    %v123 = vld [vmem:[%s1 + $0x2b0] sm:$0xff]
    %v124 = vld [vmem:[%s1 + $0x2b8] sm:$0xff]
    %v125 = vld [vmem:[%s1 + $0x2c0] sm:$0xff]
    %v126 = vld [vmem:[%s1 + $0x2c8] sm:$0xff]
    %v127 = vld [vmem:[%s1 + $0x2d0] sm:$0xff]
    %v128 = vld [vmem:[%s1 + $0x2d8] sm:$0xff]
    %v129 = vld [vmem:[%s1 + $0x2e0] sm:$0xff]
    %v130 = vld [vmem:[%s1 + $0x2e8] sm:$0xff]
    %v131 = vld [vmem:[%s1 + $0x2f0] sm:$0xff]
    %v132 = vld [vmem:[%s1 + $0x2f8] sm:$0xff]
    %v133 = vld [vmem:[%s1 + $0x300] sm:$0xff]
    %v134 = vld [vmem:[%s1 + $0x308] sm:$0xff]
    %v136 = vlaneseq
    %v137 = vshrl.u32 %v136, 7
    %v138 = vsub.s32 0, %v137
    %v139 = vrot.slane %v27, %v138
    %vm141 = vcmask 130048
    %v143 = vsel %vm141, %v36, 0
    %145 = vmatprep.subr.mxu0 0.0
    %v146 = vand.u32 %v37, 4294901760
    %147 = vmatpush1.msra.mxu0 %v146
    %148 = vmatprep.subr.mxu0 0.0
    %v149 = vand.u32 %v38, 4294901760
    %150 = vmatpush1.msra.mxu0 %v149
    %151 = vmatprep.subr.mxu0 0.0
    %v152 = vand.u32 %v39, 4294901760
    %153 = vmatpush1.msra.mxu0 %v152
    %154 = vmatprep.subr.mxu0 0.0
    %v155 = vand.u32 %v40, 4294901760
    %156 = vmatpush1.msra.mxu0 %v155
    %157 = vmatprep.subr.mxu0 0.0
    %v158 = vand.u32 %v41, 4294901760
    %159 = vmatpush1.msra.mxu0 %v158
    %160 = vmatprep.subr.mxu0 0.0
    %v161 = vand.u32 %v42, 4294901760
    %162 = vmatpush1.msra.mxu0 %v161
    %163 = vmatprep.subr.mxu0 0.0
    %v164 = vand.u32 %v43, 4294901760
    %165 = vmatpush1.msra.mxu0 %v164
    %166 = vmatprep.subr.mxu0 0.0
    %v167 = vand.u32 %v44, 4294901760
    %168 = vmatpush1.msra.mxu0 %v167
    %169 = vmatprep.subr.mxu0 0.0
    %v170 = vand.u32 %v45, 4294901760
    %171 = vmatpush1.msra.mxu0 %v170
    %172 = vmatprep.subr.mxu0 0.0
    %v173 = vand.u32 %v46, 4294901760
    %174 = vmatpush1.msra.mxu0 %v173
    %175 = vmatprep.subr.mxu0 0.0
    %v176 = vand.u32 %v47, 4294901760
    %177 = vmatpush1.msra.mxu0 %v176
    %178 = vmatprep.subr.mxu0 0.0
    %v179 = vand.u32 %v48, 4294901760
    %180 = vmatpush1.msra.mxu0 %v179
    %181 = vmatprep.subr.mxu0 0.0
    %v182 = vand.u32 %v49, 4294901760
    %183 = vmatpush1.msra.mxu0 %v182
    %184 = vmatprep.subr.mxu0 0.0
    %v185 = vand.u32 %v50, 4294901760
    %186 = vmatpush1.msra.mxu0 %v185
    %187 = vmatprep.subr.mxu0 0.0
    %v188 = vand.u32 %v51, 4294901760
    %189 = vmatpush1.msra.mxu0 %v188
    %190 = vmatprep.subr.mxu0 0.0
    %v191 = vand.u32 %v52, 4294901760
    %192 = vmatpush1.msra.mxu0 %v191
    %193 = vmatprep.subr.mxu0 0.0
    %v194 = vand.u32 %v53, 4294901760
    %195 = vmatpush1.msra.mxu0 %v194
    %196 = vmatprep.subr.mxu0 0.0
    %v197 = vand.u32 %v54, 4294901760
    %198 = vmatpush1.msra.mxu0 %v197
    %199 = vmatprep.subr.mxu0 0.0
    %v200 = vand.u32 %v55, 4294901760
    %201 = vmatpush1.msra.mxu0 %v200
    %202 = vmatprep.subr.mxu0 0.0
    %v203 = vand.u32 %v56, 4294901760
    %204 = vmatpush1.msra.mxu0 %v203
    %205 = vmatprep.subr.mxu0 0.0
    %v206 = vand.u32 %v57, 4294901760
    %207 = vmatpush1.msra.mxu0 %v206
    %208 = vmatprep.subr.mxu0 0.0
    %v209 = vand.u32 %v58, 4294901760
    %210 = vmatpush1.msra.mxu0 %v209
    %211 = vmatprep.subr.mxu0 0.0
    %v212 = vand.u32 %v59, 4294901760
    %213 = vmatpush1.msra.mxu0 %v212
    %214 = vmatprep.subr.mxu0 0.0
    %v215 = vand.u32 %v60, 4294901760
    %216 = vmatpush1.msra.mxu0 %v215
    %217 = vmatprep.subr.mxu0 0.0
    %v218 = vand.u32 %v61, 4294901760
    %219 = vmatpush1.msra.mxu0 %v218
    %220 = vmatprep.subr.mxu0 0.0
    %v221 = vand.u32 %v62, 4294901760
    %222 = vmatpush1.msra.mxu0 %v221
    %223 = vmatprep.subr.mxu0 0.0
    %v224 = vand.u32 %v63, 4294901760
    %225 = vmatpush1.msra.mxu0 %v224
    %226 = vmatprep.subr.mxu0 0.0
    %v227 = vand.u32 %v64, 4294901760
    %228 = vmatpush1.msra.mxu0 %v227
    %229 = vmatprep.subr.mxu0 0.0
    %v230 = vand.u32 %v65, 4294901760
    %231 = vmatpush1.msra.mxu0 %v230
    %232 = vmatprep.subr.mxu0 0.0
    %v233 = vand.u32 %v66, 4294901760
    %234 = vmatpush1.msra.mxu0 %v233
    %235 = vmatprep.subr.mxu0 0.0
    %v236 = vand.u32 %v67, 4294901760
    %237 = vmatpush1.msra.mxu0 %v236
    %238 = vmatprep.subr.mxu0 0.0
    %v239 = vand.u32 %v68, 4294901760
    %240 = vmatpush1.msra.mxu0 %v239
    %v241 = vand.u32 %v31, 4294901760
    %v242 = vsub.f32 %v31, %v241
    %v243 = vand.u32 %v242, 4294901760
    %v244 = vsub.f32 %v242, %v243
    %v245 = vand.u32 %v244, 4294901760
    %246 = vmatprep.mubr.f32.mxu0 %v245
    %v247 = vand.u32 %v30, 4294901760
    %v248 = vsub.f32 %v30, %v247
    %v249 = vand.u32 %v248, 4294901760
    %v250 = vsub.f32 %v248, %v249
    %v251 = vand.u32 %v250, 4294901760
    %252 = vmatmul.mubr.f32.gmra.mrb[0].mxu0 %v251
    %v253 = vpop.f32.mrb[0].mxu0
    %v254 = vadd.f32 %v139, %v253
    %v255 = vpop.f32.mrb[0].mxu0
    %256 = vdwg.mxu0
    %257 = vmatprep.subr.mxu0 0.0
    %v258 = vand.u32 %v37, 4294901760
    %v259 = vsub.f32 %v37, %v258
    %v260 = vand.u32 %v259, 4294901760
    %v261 = vsub.f32 %v259, %v260
    %v262 = vand.u32 %v261, 4294901760
    %263 = vmatpush1.msra.mxu0 %v262
    %264 = vmatprep.subr.mxu0 0.0
    %v265 = vand.u32 %v38, 4294901760
    %v266 = vsub.f32 %v38, %v265
    %v267 = vand.u32 %v266, 4294901760
    %v268 = vsub.f32 %v266, %v267
    %v269 = vand.u32 %v268, 4294901760
    %270 = vmatpush1.msra.mxu0 %v269
    %271 = vmatprep.subr.mxu0 0.0
    %v272 = vand.u32 %v39, 4294901760
    %v273 = vsub.f32 %v39, %v272
    %v274 = vand.u32 %v273, 4294901760
    %v275 = vsub.f32 %v273, %v274
    %v276 = vand.u32 %v275, 4294901760
    %277 = vmatpush1.msra.mxu0 %v276
    %278 = vmatprep.subr.mxu0 0.0
    %v279 = vand.u32 %v40, 4294901760
    %v280 = vsub.f32 %v40, %v279
    %v281 = vand.u32 %v280, 4294901760
    %v282 = vsub.f32 %v280, %v281
    %v283 = vand.u32 %v282, 4294901760
    %284 = vmatpush1.msra.mxu0 %v283
    %285 = vmatprep.subr.mxu0 0.0
    %v286 = vand.u32 %v41, 4294901760
    %v287 = vsub.f32 %v41, %v286
    %v288 = vand.u32 %v287, 4294901760
    %v289 = vsub.f32 %v287, %v288
    %v290 = vand.u32 %v289, 4294901760
    %291 = vmatpush1.msra.mxu0 %v290
    %292 = vmatprep.subr.mxu0 0.0
    %v293 = vand.u32 %v42, 4294901760
    %v294 = vsub.f32 %v42, %v293
    %v295 = vand.u32 %v294, 4294901760
    %v296 = vsub.f32 %v294, %v295
    %v297 = vand.u32 %v296, 4294901760
    %298 = vmatpush1.msra.mxu0 %v297
    %299 = vmatprep.subr.mxu0 0.0
    %v300 = vand.u32 %v43, 4294901760
    %v301 = vsub.f32 %v43, %v300
    %v302 = vand.u32 %v301, 4294901760
    %v303 = vsub.f32 %v301, %v302
    %v304 = vand.u32 %v303, 4294901760
    %305 = vmatpush1.msra.mxu0 %v304
    %306 = vmatprep.subr.mxu0 0.0
    %v307 = vand.u32 %v44, 4294901760
    %v308 = vsub.f32 %v44, %v307
    %v309 = vand.u32 %v308, 4294901760
    %v310 = vsub.f32 %v308, %v309
    %v311 = vand.u32 %v310, 4294901760
    %312 = vmatpush1.msra.mxu0 %v311
    %313 = vmatprep.subr.mxu0 0.0
    %v314 = vand.u32 %v45, 4294901760
    %v315 = vsub.f32 %v45, %v314
    %v316 = vand.u32 %v315, 4294901760
    %v317 = vsub.f32 %v315, %v316
    %v318 = vand.u32 %v317, 4294901760
    %319 = vmatpush1.msra.mxu0 %v318
    %320 = vmatprep.subr.mxu0 0.0
    %v321 = vand.u32 %v46, 4294901760
    %v322 = vsub.f32 %v46, %v321
    %v323 = vand.u32 %v322, 4294901760
    %v324 = vsub.f32 %v322, %v323
    %v325 = vand.u32 %v324, 4294901760
    %326 = vmatpush1.msra.mxu0 %v325
    %327 = vmatprep.subr.mxu0 0.0
    %v328 = vand.u32 %v47, 4294901760
    %v329 = vsub.f32 %v47, %v328
    %v330 = vand.u32 %v329, 4294901760
    %v331 = vsub.f32 %v329, %v330
    %v332 = vand.u32 %v331, 4294901760
    %333 = vmatpush1.msra.mxu0 %v332
    %334 = vmatprep.subr.mxu0 0.0
    %v335 = vand.u32 %v48, 4294901760
    %v336 = vsub.f32 %v48, %v335
    %v337 = vand.u32 %v336, 4294901760
    %v338 = vsub.f32 %v336, %v337
    %v339 = vand.u32 %v338, 4294901760
    %340 = vmatpush1.msra.mxu0 %v339
    %341 = vmatprep.subr.mxu0 0.0
    %v342 = vand.u32 %v49, 4294901760
    %v343 = vsub.f32 %v49, %v342
    %v344 = vand.u32 %v343, 4294901760
    %v345 = vsub.f32 %v343, %v344
    %v346 = vand.u32 %v345, 4294901760
    %347 = vmatpush1.msra.mxu0 %v346
    %348 = vmatprep.subr.mxu0 0.0
    %v349 = vand.u32 %v50, 4294901760
    %v350 = vsub.f32 %v50, %v349
    %v351 = vand.u32 %v350, 4294901760
    %v352 = vsub.f32 %v350, %v351
    %v353 = vand.u32 %v352, 4294901760
    %354 = vmatpush1.msra.mxu0 %v353
    %355 = vmatprep.subr.mxu0 0.0
    %v356 = vand.u32 %v51, 4294901760
    %v357 = vsub.f32 %v51, %v356
    %v358 = vand.u32 %v357, 4294901760
    %v359 = vsub.f32 %v357, %v358
    %v360 = vand.u32 %v359, 4294901760
    %361 = vmatpush1.msra.mxu0 %v360
    %362 = vmatprep.subr.mxu0 0.0
    %v363 = vand.u32 %v52, 4294901760
    %v364 = vsub.f32 %v52, %v363
    %v365 = vand.u32 %v364, 4294901760
    %v366 = vsub.f32 %v364, %v365
    %v367 = vand.u32 %v366, 4294901760
    %368 = vmatpush1.msra.mxu0 %v367
    %369 = vmatprep.subr.mxu0 0.0
    %v370 = vand.u32 %v53, 4294901760
    %v371 = vsub.f32 %v53, %v370
    %v372 = vand.u32 %v371, 4294901760
    %v373 = vsub.f32 %v371, %v372
    %v374 = vand.u32 %v373, 4294901760
    %375 = vmatpush1.msra.mxu0 %v374
    %376 = vmatprep.subr.mxu0 0.0
    %v377 = vand.u32 %v54, 4294901760
    %v378 = vsub.f32 %v54, %v377
    %v379 = vand.u32 %v378, 4294901760
    %v380 = vsub.f32 %v378, %v379
    %v381 = vand.u32 %v380, 4294901760
    %382 = vmatpush1.msra.mxu0 %v381
    %383 = vmatprep.subr.mxu0 0.0
    %v384 = vand.u32 %v55, 4294901760
    %v385 = vsub.f32 %v55, %v384
    %v386 = vand.u32 %v385, 4294901760
    %v387 = vsub.f32 %v385, %v386
    %v388 = vand.u32 %v387, 4294901760
    %389 = vmatpush1.msra.mxu0 %v388
    %390 = vmatprep.subr.mxu0 0.0
    %v391 = vand.u32 %v56, 4294901760
    %v392 = vsub.f32 %v56, %v391
    %v393 = vand.u32 %v392, 4294901760
    %v394 = vsub.f32 %v392, %v393
    %v395 = vand.u32 %v394, 4294901760
    %396 = vmatpush1.msra.mxu0 %v395
    %397 = vmatprep.subr.mxu0 0.0
    %v398 = vand.u32 %v57, 4294901760
    %v399 = vsub.f32 %v57, %v398
    %v400 = vand.u32 %v399, 4294901760
    %v401 = vsub.f32 %v399, %v400
    %v402 = vand.u32 %v401, 4294901760
    %403 = vmatpush1.msra.mxu0 %v402
    %404 = vmatprep.subr.mxu0 0.0
    %v405 = vand.u32 %v58, 4294901760
    %v406 = vsub.f32 %v58, %v405
    %v407 = vand.u32 %v406, 4294901760
    %v408 = vsub.f32 %v406, %v407
    %v409 = vand.u32 %v408, 4294901760
    %410 = vmatpush1.msra.mxu0 %v409
    %411 = vmatprep.subr.mxu0 0.0
    %v412 = vand.u32 %v59, 4294901760
    %v413 = vsub.f32 %v59, %v412
    %v414 = vand.u32 %v413, 4294901760
    %v415 = vsub.f32 %v413, %v414
    %v416 = vand.u32 %v415, 4294901760
    %417 = vmatpush1.msra.mxu0 %v416
    %418 = vmatprep.subr.mxu0 0.0
    %v419 = vand.u32 %v60, 4294901760
    %v420 = vsub.f32 %v60, %v419
    %v421 = vand.u32 %v420, 4294901760
    %v422 = vsub.f32 %v420, %v421
    %v423 = vand.u32 %v422, 4294901760
    %424 = vmatpush1.msra.mxu0 %v423
    %425 = vmatprep.subr.mxu0 0.0
    %v426 = vand.u32 %v61, 4294901760
    %v427 = vsub.f32 %v61, %v426
    %v428 = vand.u32 %v427, 4294901760
    %v429 = vsub.f32 %v427, %v428
    %v430 = vand.u32 %v429, 4294901760
    %431 = vmatpush1.msra.mxu0 %v430
    %432 = vmatprep.subr.mxu0 0.0
    %v433 = vand.u32 %v62, 4294901760
    %v434 = vsub.f32 %v62, %v433
    %v435 = vand.u32 %v434, 4294901760
    %v436 = vsub.f32 %v434, %v435
    %v437 = vand.u32 %v436, 4294901760
    %438 = vmatpush1.msra.mxu0 %v437
    %439 = vmatprep.subr.mxu0 0.0
    %v440 = vand.u32 %v63, 4294901760
    %v441 = vsub.f32 %v63, %v440
    %v442 = vand.u32 %v441, 4294901760
    %v443 = vsub.f32 %v441, %v442
    %v444 = vand.u32 %v443, 4294901760
    %445 = vmatpush1.msra.mxu0 %v444
    %446 = vmatprep.subr.mxu0 0.0
    %v447 = vand.u32 %v64, 4294901760
    %v448 = vsub.f32 %v64, %v447
    %v449 = vand.u32 %v448, 4294901760
    %v450 = vsub.f32 %v448, %v449
    %v451 = vand.u32 %v450, 4294901760
    %452 = vmatpush1.msra.mxu0 %v451
    %453 = vmatprep.subr.mxu0 0.0
    %v454 = vand.u32 %v65, 4294901760
    %v455 = vsub.f32 %v65, %v454
    %v456 = vand.u32 %v455, 4294901760
    %v457 = vsub.f32 %v455, %v456
    %v458 = vand.u32 %v457, 4294901760
    %459 = vmatpush1.msra.mxu0 %v458
    %460 = vmatprep.subr.mxu0 0.0
    %v461 = vand.u32 %v66, 4294901760
    %v462 = vsub.f32 %v66, %v461
    %v463 = vand.u32 %v462, 4294901760
    %v464 = vsub.f32 %v462, %v463
    %v465 = vand.u32 %v464, 4294901760
    %466 = vmatpush1.msra.mxu0 %v465
    %467 = vmatprep.subr.mxu0 0.0
    %v468 = vand.u32 %v67, 4294901760
    %v469 = vsub.f32 %v67, %v468
    %v470 = vand.u32 %v469, 4294901760
    %v471 = vsub.f32 %v469, %v470
    %v472 = vand.u32 %v471, 4294901760
    %473 = vmatpush1.msra.mxu0 %v472
    %474 = vmatprep.subr.mxu0 0.0
    %v475 = vand.u32 %v68, 4294901760
    %v476 = vsub.f32 %v68, %v475
    %v477 = vand.u32 %v476, 4294901760
    %v478 = vsub.f32 %v476, %v477
    %v479 = vand.u32 %v478, 4294901760
    %480 = vmatpush1.msra.mxu0 %v479
    %v481 = vand.u32 %v31, 4294901760
    %482 = vmatprep.mubr.f32.mxu0 %v481
    %v483 = vand.u32 %v30, 4294901760
    %484 = vmatmul.mubr.f32.gmra.mrb[0].mxu0 %v483
    %v485 = vpop.f32.mrb[0].mxu0
    %v486 = vadd.f32 %v254, %v485
    %v487 = vpop.f32.mrb[0].mxu0
    %488 = vdwg.mxu0
    %489 = vmatprep.subr.mxu0 0.0
    %v490 = vand.u32 %v37, 4294901760
    %v491 = vsub.f32 %v37, %v490
    %492 = vmatpush1.msra.mxu0 %v491
    %493 = vmatprep.subr.mxu0 0.0
    %v494 = vand.u32 %v38, 4294901760
    %v495 = vsub.f32 %v38, %v494
    %496 = vmatpush1.msra.mxu0 %v495
    %497 = vmatprep.subr.mxu0 0.0
    %v498 = vand.u32 %v39, 4294901760
    %v499 = vsub.f32 %v39, %v498
    %500 = vmatpush1.msra.mxu0 %v499
    %501 = vmatprep.subr.mxu0 0.0
    %v502 = vand.u32 %v40, 4294901760
    %v503 = vsub.f32 %v40, %v502
    %504 = vmatpush1.msra.mxu0 %v503
    %505 = vmatprep.subr.mxu0 0.0
    %v506 = vand.u32 %v41, 4294901760
    %v507 = vsub.f32 %v41, %v506
    %508 = vmatpush1.msra.mxu0 %v507
    %509 = vmatprep.subr.mxu0 0.0
    %v510 = vand.u32 %v42, 4294901760
    %v511 = vsub.f32 %v42, %v510
    %512 = vmatpush1.msra.mxu0 %v511
    %513 = vmatprep.subr.mxu0 0.0
    %v514 = vand.u32 %v43, 4294901760
    %v515 = vsub.f32 %v43, %v514
    %516 = vmatpush1.msra.mxu0 %v515
    %517 = vmatprep.subr.mxu0 0.0
    %v518 = vand.u32 %v44, 4294901760
    %v519 = vsub.f32 %v44, %v518
    %520 = vmatpush1.msra.mxu0 %v519
    %521 = vmatprep.subr.mxu0 0.0
    %v522 = vand.u32 %v45, 4294901760
    %v523 = vsub.f32 %v45, %v522
    %524 = vmatpush1.msra.mxu0 %v523
    %525 = vmatprep.subr.mxu0 0.0
    %v526 = vand.u32 %v46, 4294901760
    %v527 = vsub.f32 %v46, %v526
    %528 = vmatpush1.msra.mxu0 %v527
    %529 = vmatprep.subr.mxu0 0.0
    %v530 = vand.u32 %v47, 4294901760
    %v531 = vsub.f32 %v47, %v530
    %532 = vmatpush1.msra.mxu0 %v531
    %533 = vmatprep.subr.mxu0 0.0
    %v534 = vand.u32 %v48, 4294901760
    %v535 = vsub.f32 %v48, %v534
    %536 = vmatpush1.msra.mxu0 %v535
    %537 = vmatprep.subr.mxu0 0.0
    %v538 = vand.u32 %v49, 4294901760
    %v539 = vsub.f32 %v49, %v538
    %540 = vmatpush1.msra.mxu0 %v539
    %541 = vmatprep.subr.mxu0 0.0
    %v542 = vand.u32 %v50, 4294901760
    %v543 = vsub.f32 %v50, %v542
    %544 = vmatpush1.msra.mxu0 %v543
    %545 = vmatprep.subr.mxu0 0.0
    %v546 = vand.u32 %v51, 4294901760
    %v547 = vsub.f32 %v51, %v546
    %548 = vmatpush1.msra.mxu0 %v547
    %549 = vmatprep.subr.mxu0 0.0
    %v550 = vand.u32 %v52, 4294901760
    %v551 = vsub.f32 %v52, %v550
    %552 = vmatpush1.msra.mxu0 %v551
    %553 = vmatprep.subr.mxu0 0.0
    %v554 = vand.u32 %v53, 4294901760
    %v555 = vsub.f32 %v53, %v554
    %556 = vmatpush1.msra.mxu0 %v555
    %557 = vmatprep.subr.mxu0 0.0
    %v558 = vand.u32 %v54, 4294901760
    %v559 = vsub.f32 %v54, %v558
    %560 = vmatpush1.msra.mxu0 %v559
    %561 = vmatprep.subr.mxu0 0.0
    %v562 = vand.u32 %v55, 4294901760
    %v563 = vsub.f32 %v55, %v562
    %564 = vmatpush1.msra.mxu0 %v563
    %565 = vmatprep.subr.mxu0 0.0
    %v566 = vand.u32 %v56, 4294901760
    %v567 = vsub.f32 %v56, %v566
    %568 = vmatpush1.msra.mxu0 %v567
    %569 = vmatprep.subr.mxu0 0.0
    %v570 = vand.u32 %v57, 4294901760
    %v571 = vsub.f32 %v57, %v570
    %572 = vmatpush1.msra.mxu0 %v571
    %573 = vmatprep.subr.mxu0 0.0
    %v574 = vand.u32 %v58, 4294901760
    %v575 = vsub.f32 %v58, %v574
    %576 = vmatpush1.msra.mxu0 %v575
    %577 = vmatprep.subr.mxu0 0.0
    %v578 = vand.u32 %v59, 4294901760
    %v579 = vsub.f32 %v59, %v578
    %580 = vmatpush1.msra.mxu0 %v579
    %581 = vmatprep.subr.mxu0 0.0
    %v582 = vand.u32 %v60, 4294901760
    %v583 = vsub.f32 %v60, %v582
    %584 = vmatpush1.msra.mxu0 %v583
    %585 = vmatprep.subr.mxu0 0.0
    %v586 = vand.u32 %v61, 4294901760
    %v587 = vsub.f32 %v61, %v586
    %588 = vmatpush1.msra.mxu0 %v587
    %589 = vmatprep.subr.mxu0 0.0
    %v590 = vand.u32 %v62, 4294901760
    %v591 = vsub.f32 %v62, %v590
    %592 = vmatpush1.msra.mxu0 %v591
    %593 = vmatprep.subr.mxu0 0.0
    %v594 = vand.u32 %v63, 4294901760
    %v595 = vsub.f32 %v63, %v594
    %596 = vmatpush1.msra.mxu0 %v595
    %597 = vmatprep.subr.mxu0 0.0
    %v598 = vand.u32 %v64, 4294901760
    %v599 = vsub.f32 %v64, %v598
    %600 = vmatpush1.msra.mxu0 %v599
    %601 = vmatprep.subr.mxu0 0.0
    %v602 = vand.u32 %v65, 4294901760
    %v603 = vsub.f32 %v65, %v602
    %604 = vmatpush1.msra.mxu0 %v603
    %605 = vmatprep.subr.mxu0 0.0
    %v606 = vand.u32 %v66, 4294901760
    %v607 = vsub.f32 %v66, %v606
    %608 = vmatpush1.msra.mxu0 %v607
    %609 = vmatprep.subr.mxu0 0.0
    %v610 = vand.u32 %v67, 4294901760
    %v611 = vsub.f32 %v67, %v610
    %612 = vmatpush1.msra.mxu0 %v611
    %613 = vmatprep.subr.mxu0 0.0
    %v614 = vand.u32 %v68, 4294901760
    %v615 = vsub.f32 %v68, %v614
    %616 = vmatpush1.msra.mxu0 %v615
    %v617 = vand.u32 %v31, 4294901760
    %v618 = vsub.f32 %v31, %v617
    %619 = vmatprep.mubr.f32.mxu0 %v618
    %v620 = vand.u32 %v30, 4294901760
    %v621 = vsub.f32 %v30, %v620
    %622 = vmatmul.mubr.f32.gmra.mrb[0].mxu0 %v621
    %v623 = vpop.f32.mrb[0].mxu0
    %v624 = vadd.f32 %v486, %v623
    %v625 = vpop.f32.mrb[0].mxu0
    %626 = vdwg.mxu0
    %627 = vmatprep.subr.mxu0 0.0
    %v628 = vand.u32 %v37, 4294901760
    %629 = vmatpush1.msra.mxu0 %v628
    %630 = vmatprep.subr.mxu0 0.0
    %v631 = vand.u32 %v38, 4294901760
    %632 = vmatpush1.msra.mxu0 %v631
    %633 = vmatprep.subr.mxu0 0.0
    %v634 = vand.u32 %v39, 4294901760
    %635 = vmatpush1.msra.mxu0 %v634
    %636 = vmatprep.subr.mxu0 0.0
    %v637 = vand.u32 %v40, 4294901760
    %638 = vmatpush1.msra.mxu0 %v637
    %639 = vmatprep.subr.mxu0 0.0
    %v640 = vand.u32 %v41, 4294901760
    %641 = vmatpush1.msra.mxu0 %v640
    %642 = vmatprep.subr.mxu0 0.0
    %v643 = vand.u32 %v42, 4294901760
    %644 = vmatpush1.msra.mxu0 %v643
    %645 = vmatprep.subr.mxu0 0.0
    %v646 = vand.u32 %v43, 4294901760
    %647 = vmatpush1.msra.mxu0 %v646
    %648 = vmatprep.subr.mxu0 0.0
    %v649 = vand.u32 %v44, 4294901760
    %650 = vmatpush1.msra.mxu0 %v649
    %651 = vmatprep.subr.mxu0 0.0
    %v652 = vand.u32 %v45, 4294901760
    %653 = vmatpush1.msra.mxu0 %v652
    %654 = vmatprep.subr.mxu0 0.0
    %v655 = vand.u32 %v46, 4294901760
    %656 = vmatpush1.msra.mxu0 %v655
    %657 = vmatprep.subr.mxu0 0.0
    %v658 = vand.u32 %v47, 4294901760
    %659 = vmatpush1.msra.mxu0 %v658
    %660 = vmatprep.subr.mxu0 0.0
    %v661 = vand.u32 %v48, 4294901760
    %662 = vmatpush1.msra.mxu0 %v661
    %663 = vmatprep.subr.mxu0 0.0
    %v664 = vand.u32 %v49, 4294901760
    %665 = vmatpush1.msra.mxu0 %v664
    %666 = vmatprep.subr.mxu0 0.0
    %v667 = vand.u32 %v50, 4294901760
    %668 = vmatpush1.msra.mxu0 %v667
    %669 = vmatprep.subr.mxu0 0.0
    %v670 = vand.u32 %v51, 4294901760
    %671 = vmatpush1.msra.mxu0 %v670
    %672 = vmatprep.subr.mxu0 0.0
    %v673 = vand.u32 %v52, 4294901760
    %674 = vmatpush1.msra.mxu0 %v673
    %675 = vmatprep.subr.mxu0 0.0
    %v676 = vand.u32 %v53, 4294901760
    %677 = vmatpush1.msra.mxu0 %v676
    %678 = vmatprep.subr.mxu0 0.0
    %v679 = vand.u32 %v54, 4294901760
    %680 = vmatpush1.msra.mxu0 %v679
    %681 = vmatprep.subr.mxu0 0.0
    %v682 = vand.u32 %v55, 4294901760
    %683 = vmatpush1.msra.mxu0 %v682
    %684 = vmatprep.subr.mxu0 0.0
    %v685 = vand.u32 %v56, 4294901760
    %686 = vmatpush1.msra.mxu0 %v685
    %687 = vmatprep.subr.mxu0 0.0
    %v688 = vand.u32 %v57, 4294901760
    %689 = vmatpush1.msra.mxu0 %v688
    %690 = vmatprep.subr.mxu0 0.0
    %v691 = vand.u32 %v58, 4294901760
    %692 = vmatpush1.msra.mxu0 %v691
    %693 = vmatprep.subr.mxu0 0.0
    %v694 = vand.u32 %v59, 4294901760
    %695 = vmatpush1.msra.mxu0 %v694
    %696 = vmatprep.subr.mxu0 0.0
    %v697 = vand.u32 %v60, 4294901760
    %698 = vmatpush1.msra.mxu0 %v697
    %699 = vmatprep.subr.mxu0 0.0
    %v700 = vand.u32 %v61, 4294901760
    %701 = vmatpush1.msra.mxu0 %v700
    %702 = vmatprep.subr.mxu0 0.0
    %v703 = vand.u32 %v62, 4294901760
    %704 = vmatpush1.msra.mxu0 %v703
    %705 = vmatprep.subr.mxu0 0.0
    %v706 = vand.u32 %v63, 4294901760
    %707 = vmatpush1.msra.mxu0 %v706
    %708 = vmatprep.subr.mxu0 0.0
    %v709 = vand.u32 %v64, 4294901760
    %710 = vmatpush1.msra.mxu0 %v709
    %711 = vmatprep.subr.mxu0 0.0
    %v712 = vand.u32 %v65, 4294901760
    %713 = vmatpush1.msra.mxu0 %v712
    %714 = vmatprep.subr.mxu0 0.0
    %v715 = vand.u32 %v66, 4294901760
    %716 = vmatpush1.msra.mxu0 %v715
    %717 = vmatprep.subr.mxu0 0.0
    %v718 = vand.u32 %v67, 4294901760
    %719 = vmatpush1.msra.mxu0 %v718
    %720 = vmatprep.subr.mxu0 0.0
    %v721 = vand.u32 %v68, 4294901760
    %722 = vmatpush1.msra.mxu0 %v721
    %v723 = vand.u32 %v31, 4294901760
    %v724 = vsub.f32 %v31, %v723
    %v725 = vand.u32 %v724, 4294901760
    %726 = vmatprep.mubr.f32.mxu0 %v725
    %v727 = vand.u32 %v30, 4294901760
    %v728 = vsub.f32 %v30, %v727
    %v729 = vand.u32 %v728, 4294901760
    %730 = vmatmul.mubr.f32.gmra.mrb[0].mxu0 %v729
    %v731 = vpop.f32.mrb[0].mxu0
    %v732 = vadd.f32 %v624, %v731
    %v733 = vpop.f32.mrb[0].mxu0
    %734 = vdwg.mxu0
    %735 = vmatprep.subr.mxu0 0.0
    %v736 = vand.u32 %v37, 4294901760
    %v737 = vsub.f32 %v37, %v736
    %v738 = vand.u32 %v737, 4294901760
    %739 = vmatpush1.msra.mxu0 %v738
    %740 = vmatprep.subr.mxu0 0.0
    %v741 = vand.u32 %v38, 4294901760
    %v742 = vsub.f32 %v38, %v741
    %v743 = vand.u32 %v742, 4294901760
    %744 = vmatpush1.msra.mxu0 %v743
    %745 = vmatprep.subr.mxu0 0.0
    %v746 = vand.u32 %v39, 4294901760
    %v747 = vsub.f32 %v39, %v746
    %v748 = vand.u32 %v747, 4294901760
    %749 = vmatpush1.msra.mxu0 %v748
    %750 = vmatprep.subr.mxu0 0.0
    %v751 = vand.u32 %v40, 4294901760
    %v752 = vsub.f32 %v40, %v751
    %v753 = vand.u32 %v752, 4294901760
    %754 = vmatpush1.msra.mxu0 %v753
    %755 = vmatprep.subr.mxu0 0.0
    %v756 = vand.u32 %v41, 4294901760
    %v757 = vsub.f32 %v41, %v756
    %v758 = vand.u32 %v757, 4294901760
    %759 = vmatpush1.msra.mxu0 %v758
    %760 = vmatprep.subr.mxu0 0.0
    %v761 = vand.u32 %v42, 4294901760
    %v762 = vsub.f32 %v42, %v761
    %v763 = vand.u32 %v762, 4294901760
    %764 = vmatpush1.msra.mxu0 %v763
    %765 = vmatprep.subr.mxu0 0.0
    %v766 = vand.u32 %v43, 4294901760
    %v767 = vsub.f32 %v43, %v766
    %v768 = vand.u32 %v767, 4294901760
    %769 = vmatpush1.msra.mxu0 %v768
    %770 = vmatprep.subr.mxu0 0.0
    %v771 = vand.u32 %v44, 4294901760
    %v772 = vsub.f32 %v44, %v771
    %v773 = vand.u32 %v772, 4294901760
    %774 = vmatpush1.msra.mxu0 %v773
    %775 = vmatprep.subr.mxu0 0.0
    %v776 = vand.u32 %v45, 4294901760
    %v777 = vsub.f32 %v45, %v776
    %v778 = vand.u32 %v777, 4294901760
    %779 = vmatpush1.msra.mxu0 %v778
    %780 = vmatprep.subr.mxu0 0.0
    %v781 = vand.u32 %v46, 4294901760
    %v782 = vsub.f32 %v46, %v781
    %v783 = vand.u32 %v782, 4294901760
    %784 = vmatpush1.msra.mxu0 %v783
    %785 = vmatprep.subr.mxu0 0.0
    %v786 = vand.u32 %v47, 4294901760
    %v787 = vsub.f32 %v47, %v786
    %v788 = vand.u32 %v787, 4294901760
    %789 = vmatpush1.msra.mxu0 %v788
    %790 = vmatprep.subr.mxu0 0.0
    %v791 = vand.u32 %v48, 4294901760
    %v792 = vsub.f32 %v48, %v791
    %v793 = vand.u32 %v792, 4294901760
    %794 = vmatpush1.msra.mxu0 %v793
    %795 = vmatprep.subr.mxu0 0.0
    %v796 = vand.u32 %v49, 4294901760
    %v797 = vsub.f32 %v49, %v796
    %v798 = vand.u32 %v797, 4294901760
    %799 = vmatpush1.msra.mxu0 %v798
    %800 = vmatprep.subr.mxu0 0.0
    %v801 = vand.u32 %v50, 4294901760
    %v802 = vsub.f32 %v50, %v801
    %v803 = vand.u32 %v802, 4294901760
    %804 = vmatpush1.msra.mxu0 %v803
    %805 = vmatprep.subr.mxu0 0.0
    %v806 = vand.u32 %v51, 4294901760
    %v807 = vsub.f32 %v51, %v806
    %v808 = vand.u32 %v807, 4294901760
    %809 = vmatpush1.msra.mxu0 %v808
    %810 = vmatprep.subr.mxu0 0.0
    %v811 = vand.u32 %v52, 4294901760
    %v812 = vsub.f32 %v52, %v811
    %v813 = vand.u32 %v812, 4294901760
    %814 = vmatpush1.msra.mxu0 %v813
    %815 = vmatprep.subr.mxu0 0.0
    %v816 = vand.u32 %v53, 4294901760
    %v817 = vsub.f32 %v53, %v816
    %v818 = vand.u32 %v817, 4294901760
    %819 = vmatpush1.msra.mxu0 %v818
    %820 = vmatprep.subr.mxu0 0.0
    %v821 = vand.u32 %v54, 4294901760
    %v822 = vsub.f32 %v54, %v821
    %v823 = vand.u32 %v822, 4294901760
    %824 = vmatpush1.msra.mxu0 %v823
    %825 = vmatprep.subr.mxu0 0.0
    %v826 = vand.u32 %v55, 4294901760
    %v827 = vsub.f32 %v55, %v826
    %v828 = vand.u32 %v827, 4294901760
    %829 = vmatpush1.msra.mxu0 %v828
    %830 = vmatprep.subr.mxu0 0.0
    %v831 = vand.u32 %v56, 4294901760
    %v832 = vsub.f32 %v56, %v831
    %v833 = vand.u32 %v832, 4294901760
    %834 = vmatpush1.msra.mxu0 %v833
    %835 = vmatprep.subr.mxu0 0.0
    %v836 = vand.u32 %v57, 4294901760
    %v837 = vsub.f32 %v57, %v836
    %v838 = vand.u32 %v837, 4294901760
    %839 = vmatpush1.msra.mxu0 %v838
    %840 = vmatprep.subr.mxu0 0.0
    %v841 = vand.u32 %v58, 4294901760
    %v842 = vsub.f32 %v58, %v841
    %v843 = vand.u32 %v842, 4294901760
    %844 = vmatpush1.msra.mxu0 %v843
    %845 = vmatprep.subr.mxu0 0.0
    %v846 = vand.u32 %v59, 4294901760
    %v847 = vsub.f32 %v59, %v846
    %v848 = vand.u32 %v847, 4294901760
    %849 = vmatpush1.msra.mxu0 %v848
    %850 = vmatprep.subr.mxu0 0.0
    %v851 = vand.u32 %v60, 4294901760
    %v852 = vsub.f32 %v60, %v851
    %v853 = vand.u32 %v852, 4294901760
    %854 = vmatpush1.msra.mxu0 %v853
    %855 = vmatprep.subr.mxu0 0.0
    %v856 = vand.u32 %v61, 4294901760
    %v857 = vsub.f32 %v61, %v856
    %v858 = vand.u32 %v857, 4294901760
    %859 = vmatpush1.msra.mxu0 %v858
    %860 = vmatprep.subr.mxu0 0.0
    %v861 = vand.u32 %v62, 4294901760
    %v862 = vsub.f32 %v62, %v861
    %v863 = vand.u32 %v862, 4294901760
    %864 = vmatpush1.msra.mxu0 %v863
    %865 = vmatprep.subr.mxu0 0.0
    %v866 = vand.u32 %v63, 4294901760
    %v867 = vsub.f32 %v63, %v866
    %v868 = vand.u32 %v867, 4294901760
    %869 = vmatpush1.msra.mxu0 %v868
    %870 = vmatprep.subr.mxu0 0.0
    %v871 = vand.u32 %v64, 4294901760
    %v872 = vsub.f32 %v64, %v871
    %v873 = vand.u32 %v872, 4294901760
    %874 = vmatpush1.msra.mxu0 %v873
    %875 = vmatprep.subr.mxu0 0.0
    %v876 = vand.u32 %v65, 4294901760
    %v877 = vsub.f32 %v65, %v876
    %v878 = vand.u32 %v877, 4294901760
    %879 = vmatpush1.msra.mxu0 %v878
    %880 = vmatprep.subr.mxu0 0.0
    %v881 = vand.u32 %v66, 4294901760
    %v882 = vsub.f32 %v66, %v881
    %v883 = vand.u32 %v882, 4294901760
    %884 = vmatpush1.msra.mxu0 %v883
    %885 = vmatprep.subr.mxu0 0.0
    %v886 = vand.u32 %v67, 4294901760
    %v887 = vsub.f32 %v67, %v886
    %v888 = vand.u32 %v887, 4294901760
    %889 = vmatpush1.msra.mxu0 %v888
    %890 = vmatprep.subr.mxu0 0.0
    %v891 = vand.u32 %v68, 4294901760
    %v892 = vsub.f32 %v68, %v891
    %v893 = vand.u32 %v892, 4294901760
    %894 = vmatpush1.msra.mxu0 %v893
    %v895 = vand.u32 %v31, 4294901760
    %896 = vmatprep.mubr.f32.mxu0 %v895
    %v897 = vand.u32 %v30, 4294901760
    %898 = vmatmul.mubr.f32.gmra.mrb[0].mxu0 %v897
    %v899 = vpop.f32.mrb[0].mxu0
    %v900 = vadd.f32 %v732, %v899
    %v901 = vpop.f32.mrb[0].mxu0
    %902 = vdwg.mxu0
    %903 = vmatprep.subr.mxu0 0.0
    %v904 = vand.u32 %v37, 4294901760
    %905 = vmatpush1.msra.mxu0 %v904
    %906 = vmatprep.subr.mxu0 0.0
    %v907 = vand.u32 %v38, 4294901760
    %908 = vmatpush1.msra.mxu0 %v907
    %909 = vmatprep.subr.mxu0 0.0
    %v910 = vand.u32 %v39, 4294901760
    %911 = vmatpush1.msra.mxu0 %v910
    %912 = vmatprep.subr.mxu0 0.0
    %v913 = vand.u32 %v40, 4294901760
    %914 = vmatpush1.msra.mxu0 %v913
    %915 = vmatprep.subr.mxu0 0.0
    %v916 = vand.u32 %v41, 4294901760
    %917 = vmatpush1.msra.mxu0 %v916
    %918 = vmatprep.subr.mxu0 0.0
    %v919 = vand.u32 %v42, 4294901760
    %920 = vmatpush1.msra.mxu0 %v919
    %921 = vmatprep.subr.mxu0 0.0
    %v922 = vand.u32 %v43, 4294901760
    %923 = vmatpush1.msra.mxu0 %v922
    %924 = vmatprep.subr.mxu0 0.0
    %v925 = vand.u32 %v44, 4294901760
    %926 = vmatpush1.msra.mxu0 %v925
    %927 = vmatprep.subr.mxu0 0.0
    %v928 = vand.u32 %v45, 4294901760
    %929 = vmatpush1.msra.mxu0 %v928
    %930 = vmatprep.subr.mxu0 0.0
    %v931 = vand.u32 %v46, 4294901760
    %932 = vmatpush1.msra.mxu0 %v931
    %933 = vmatprep.subr.mxu0 0.0
    %v934 = vand.u32 %v47, 4294901760
    %935 = vmatpush1.msra.mxu0 %v934
    %936 = vmatprep.subr.mxu0 0.0
    %v937 = vand.u32 %v48, 4294901760
    %938 = vmatpush1.msra.mxu0 %v937
    %939 = vmatprep.subr.mxu0 0.0
    %v940 = vand.u32 %v49, 4294901760
    %941 = vmatpush1.msra.mxu0 %v940
    %942 = vmatprep.subr.mxu0 0.0
    %v943 = vand.u32 %v50, 4294901760
    %944 = vmatpush1.msra.mxu0 %v943
    %945 = vmatprep.subr.mxu0 0.0
    %v946 = vand.u32 %v51, 4294901760
    %947 = vmatpush1.msra.mxu0 %v946
    %948 = vmatprep.subr.mxu0 0.0
    %v949 = vand.u32 %v52, 4294901760
    %950 = vmatpush1.msra.mxu0 %v949
    %951 = vmatprep.subr.mxu0 0.0
    %v952 = vand.u32 %v53, 4294901760
    %953 = vmatpush1.msra.mxu0 %v952
    %954 = vmatprep.subr.mxu0 0.0
    %v955 = vand.u32 %v54, 4294901760
    %956 = vmatpush1.msra.mxu0 %v955
    %957 = vmatprep.subr.mxu0 0.0
    %v958 = vand.u32 %v55, 4294901760
    %959 = vmatpush1.msra.mxu0 %v958
    %960 = vmatprep.subr.mxu0 0.0
    %v961 = vand.u32 %v56, 4294901760
    %962 = vmatpush1.msra.mxu0 %v961
    %963 = vmatprep.subr.mxu0 0.0
    %v964 = vand.u32 %v57, 4294901760
    %965 = vmatpush1.msra.mxu0 %v964
    %966 = vmatprep.subr.mxu0 0.0
    %v967 = vand.u32 %v58, 4294901760
    %968 = vmatpush1.msra.mxu0 %v967
    %969 = vmatprep.subr.mxu0 0.0
    %v970 = vand.u32 %v59, 4294901760
    %971 = vmatpush1.msra.mxu0 %v970
    %972 = vmatprep.subr.mxu0 0.0
    %v973 = vand.u32 %v60, 4294901760
    %974 = vmatpush1.msra.mxu0 %v973
    %975 = vmatprep.subr.mxu0 0.0
    %v976 = vand.u32 %v61, 4294901760
    %977 = vmatpush1.msra.mxu0 %v976
    %978 = vmatprep.subr.mxu0 0.0
    %v979 = vand.u32 %v62, 4294901760
    %980 = vmatpush1.msra.mxu0 %v979
    %981 = vmatprep.subr.mxu0 0.0
    %v982 = vand.u32 %v63, 4294901760
    %983 = vmatpush1.msra.mxu0 %v982
    %984 = vmatprep.subr.mxu0 0.0
    %v985 = vand.u32 %v64, 4294901760
    %986 = vmatpush1.msra.mxu0 %v985
    %987 = vmatprep.subr.mxu0 0.0
    %v988 = vand.u32 %v65, 4294901760
    %989 = vmatpush1.msra.mxu0 %v988
    %990 = vmatprep.subr.mxu0 0.0
    %v991 = vand.u32 %v66, 4294901760
    %992 = vmatpush1.msra.mxu0 %v991
    %993 = vmatprep.subr.mxu0 0.0
    %v994 = vand.u32 %v67, 4294901760
    %995 = vmatpush1.msra.mxu0 %v994
    %996 = vmatprep.subr.mxu0 0.0
    %v997 = vand.u32 %v68, 4294901760
    %998 = vmatpush1.msra.mxu0 %v997
    %v999 = vand.u32 %v31, 4294901760
    %1000 = vmatprep.mubr.f32.mxu0 %v999
    %v1001 = vand.u32 %v30, 4294901760
    %1002 = vmatmul.mubr.f32.gmra.mrb[0].mxu0 %v1001
    %v1003 = vpop.f32.mrb[0].mxu0
    %v1004 = vadd.f32 %v900, %v1003
    %v1005 = vpop.f32.mrb[0].mxu0
    %1006 = vdwg.mxu0
    %1007 = vmatprep.subr.mxu0 0.0
    %v1008 = vand.u32 %v69, 4294901760
    %1009 = vmatpush1.msra.mxu0 %v1008
    %1010 = vmatprep.subr.mxu0 0.0
    %v1011 = vand.u32 %v70, 4294901760
    %1012 = vmatpush1.msra.mxu0 %v1011
    %1013 = vmatprep.subr.mxu0 0.0
    %v1014 = vand.u32 %v71, 4294901760
    %1015 = vmatpush1.msra.mxu0 %v1014
    %1016 = vmatprep.subr.mxu0 0.0
    %v1017 = vand.u32 %v72, 4294901760
    %1018 = vmatpush1.msra.mxu0 %v1017
    %1019 = vmatprep.subr.mxu0 0.0
    %v1020 = vand.u32 %v73, 4294901760
    %1021 = vmatpush1.msra.mxu0 %v1020
    %1022 = vmatprep.subr.mxu0 0.0
    %v1023 = vand.u32 %v74, 4294901760
    %1024 = vmatpush1.msra.mxu0 %v1023
    %1025 = vmatprep.subr.mxu0 0.0
    %v1026 = vand.u32 %v75, 4294901760
    %1027 = vmatpush1.msra.mxu0 %v1026
    %1028 = vmatprep.subr.mxu0 0.0
    %v1029 = vand.u32 %v76, 4294901760
    %1030 = vmatpush1.msra.mxu0 %v1029
    %1031 = vmatprep.subr.mxu0 0.0
    %v1032 = vand.u32 %v77, 4294901760
    %1033 = vmatpush1.msra.mxu0 %v1032
    %1034 = vmatprep.subr.mxu0 0.0
    %v1035 = vand.u32 %v78, 4294901760
    %1036 = vmatpush1.msra.mxu0 %v1035
    %1037 = vmatprep.subr.mxu0 0.0
    %v1038 = vand.u32 %v79, 4294901760
    %1039 = vmatpush1.msra.mxu0 %v1038
    %1040 = vmatprep.subr.mxu0 0.0
    %v1041 = vand.u32 %v80, 4294901760
    %1042 = vmatpush1.msra.mxu0 %v1041
    %1043 = vmatprep.subr.mxu0 0.0
    %v1044 = vand.u32 %v81, 4294901760
    %1045 = vmatpush1.msra.mxu0 %v1044
    %1046 = vmatprep.subr.mxu0 0.0
    %v1047 = vand.u32 %v82, 4294901760
    %1048 = vmatpush1.msra.mxu0 %v1047
    %1049 = vmatprep.subr.mxu0 0.0
    %v1050 = vand.u32 %v83, 4294901760
    %1051 = vmatpush1.msra.mxu0 %v1050
    %1052 = vmatprep.subr.mxu0 0.0
    %v1053 = vand.u32 %v84, 4294901760
    %1054 = vmatpush1.msra.mxu0 %v1053
    %1055 = vmatprep.subr.mxu0 0.0
    %v1056 = vand.u32 %v85, 4294901760
    %1057 = vmatpush1.msra.mxu0 %v1056
    %1058 = vmatprep.subr.mxu0 0.0
    %v1059 = vand.u32 %v86, 4294901760
    %1060 = vmatpush1.msra.mxu0 %v1059
    %1061 = vmatprep.subr.mxu0 0.0
    %v1062 = vand.u32 %v87, 4294901760
    %1063 = vmatpush1.msra.mxu0 %v1062
    %1064 = vmatprep.subr.mxu0 0.0
    %v1065 = vand.u32 %v88, 4294901760
    %1066 = vmatpush1.msra.mxu0 %v1065
    %1067 = vmatprep.subr.mxu0 0.0
    %v1068 = vand.u32 %v89, 4294901760
    %1069 = vmatpush1.msra.mxu0 %v1068
    %1070 = vmatprep.subr.mxu0 0.0
    %v1071 = vand.u32 %v90, 4294901760
    %1072 = vmatpush1.msra.mxu0 %v1071
    %1073 = vmatprep.subr.mxu0 0.0
    %v1074 = vand.u32 %v91, 4294901760
    %1075 = vmatpush1.msra.mxu0 %v1074
    %1076 = vmatprep.subr.mxu0 0.0
    %v1077 = vand.u32 %v92, 4294901760
    %1078 = vmatpush1.msra.mxu0 %v1077
    %1079 = vmatprep.subr.mxu0 0.0
    %v1080 = vand.u32 %v93, 4294901760
    %1081 = vmatpush1.msra.mxu0 %v1080
    %1082 = vmatprep.subr.mxu0 0.0
    %v1083 = vand.u32 %v94, 4294901760
    %1084 = vmatpush1.msra.mxu0 %v1083
    %1085 = vmatprep.subr.mxu0 0.0
    %v1086 = vand.u32 %v95, 4294901760
    %1087 = vmatpush1.msra.mxu0 %v1086
    %1088 = vmatprep.subr.mxu0 0.0
    %v1089 = vand.u32 %v96, 4294901760
    %1090 = vmatpush1.msra.mxu0 %v1089
    %1091 = vmatprep.subr.mxu0 0.0
    %v1092 = vand.u32 %v97, 4294901760
    %1093 = vmatpush1.msra.mxu0 %v1092
    %1094 = vmatprep.subr.mxu0 0.0
    %v1095 = vand.u32 %v98, 4294901760
    %1096 = vmatpush1.msra.mxu0 %v1095
    %1097 = vmatprep.subr.mxu0 0.0
    %v1098 = vand.u32 %v99, 4294901760
    %1099 = vmatpush1.msra.mxu0 %v1098
    %1100 = vmatprep.subr.mxu0 0.0
    %v1101 = vand.u32 %v100, 4294901760
    %1102 = vmatpush1.msra.mxu0 %v1101
    %v1103 = vand.u32 %v33, 4294901760
    %v1104 = vsub.f32 %v33, %v1103
    %v1105 = vand.u32 %v1104, 4294901760
    %v1106 = vsub.f32 %v1104, %v1105
    %v1107 = vand.u32 %v1106, 4294901760
    %1108 = vmatprep.mubr.f32.mxu0 %v1107
    %v1109 = vand.u32 %v32, 4294901760
    %v1110 = vsub.f32 %v32, %v1109
    %v1111 = vand.u32 %v1110, 4294901760
    %v1112 = vsub.f32 %v1110, %v1111
    %v1113 = vand.u32 %v1112, 4294901760
    %1114 = vmatmul.mubr.f32.gmra.mrb[0].mxu0 %v1113
    %v1115 = vpop.f32.mrb[0].mxu0
    %v1116 = vadd.f32 %v1004, %v1115
    %v1117 = vpop.f32.mrb[0].mxu0
    %1118 = vdwg.mxu0
    %1119 = vmatprep.subr.mxu0 0.0
    %v1120 = vand.u32 %v69, 4294901760
    %v1121 = vsub.f32 %v69, %v1120
    %v1122 = vand.u32 %v1121, 4294901760
    %v1123 = vsub.f32 %v1121, %v1122
    %v1124 = vand.u32 %v1123, 4294901760
    %1125 = vmatpush1.msra.mxu0 %v1124
    %1126 = vmatprep.subr.mxu0 0.0
    %v1127 = vand.u32 %v70, 4294901760
    %v1128 = vsub.f32 %v70, %v1127
    %v1129 = vand.u32 %v1128, 4294901760
    %v1130 = vsub.f32 %v1128, %v1129
    %v1131 = vand.u32 %v1130, 4294901760
    %1132 = vmatpush1.msra.mxu0 %v1131
    %1133 = vmatprep.subr.mxu0 0.0
    %v1134 = vand.u32 %v71, 4294901760
    %v1135 = vsub.f32 %v71, %v1134
    %v1136 = vand.u32 %v1135, 4294901760
    %v1137 = vsub.f32 %v1135, %v1136
    %v1138 = vand.u32 %v1137, 4294901760
    %1139 = vmatpush1.msra.mxu0 %v1138
    %1140 = vmatprep.subr.mxu0 0.0
    %v1141 = vand.u32 %v72, 4294901760
    %v1142 = vsub.f32 %v72, %v1141
    %v1143 = vand.u32 %v1142, 4294901760
    %v1144 = vsub.f32 %v1142, %v1143
    %v1145 = vand.u32 %v1144, 4294901760
    %1146 = vmatpush1.msra.mxu0 %v1145
    %1147 = vmatprep.subr.mxu0 0.0
    %v1148 = vand.u32 %v73, 4294901760
    %v1149 = vsub.f32 %v73, %v1148
    %v1150 = vand.u32 %v1149, 4294901760
    %v1151 = vsub.f32 %v1149, %v1150
    %v1152 = vand.u32 %v1151, 4294901760
    %1153 = vmatpush1.msra.mxu0 %v1152
    %1154 = vmatprep.subr.mxu0 0.0
    %v1155 = vand.u32 %v74, 4294901760
    %v1156 = vsub.f32 %v74, %v1155
    %v1157 = vand.u32 %v1156, 4294901760
    %v1158 = vsub.f32 %v1156, %v1157
    %v1159 = vand.u32 %v1158, 4294901760
    %1160 = vmatpush1.msra.mxu0 %v1159
    %1161 = vmatprep.subr.mxu0 0.0
    %v1162 = vand.u32 %v75, 4294901760
    %v1163 = vsub.f32 %v75, %v1162
    %v1164 = vand.u32 %v1163, 4294901760
    %v1165 = vsub.f32 %v1163, %v1164
    %v1166 = vand.u32 %v1165, 4294901760
    %1167 = vmatpush1.msra.mxu0 %v1166
    %1168 = vmatprep.subr.mxu0 0.0
    %v1169 = vand.u32 %v76, 4294901760
    %v1170 = vsub.f32 %v76, %v1169
    %v1171 = vand.u32 %v1170, 4294901760
    %v1172 = vsub.f32 %v1170, %v1171
    %v1173 = vand.u32 %v1172, 4294901760
    %1174 = vmatpush1.msra.mxu0 %v1173
    %1175 = vmatprep.subr.mxu0 0.0
    %v1176 = vand.u32 %v77, 4294901760
    %v1177 = vsub.f32 %v77, %v1176
    %v1178 = vand.u32 %v1177, 4294901760
    %v1179 = vsub.f32 %v1177, %v1178
    %v1180 = vand.u32 %v1179, 4294901760
    %1181 = vmatpush1.msra.mxu0 %v1180
    %1182 = vmatprep.subr.mxu0 0.0
    %v1183 = vand.u32 %v78, 4294901760
    %v1184 = vsub.f32 %v78, %v1183
    %v1185 = vand.u32 %v1184, 4294901760
    %v1186 = vsub.f32 %v1184, %v1185
    %v1187 = vand.u32 %v1186, 4294901760
    %1188 = vmatpush1.msra.mxu0 %v1187
    %1189 = vmatprep.subr.mxu0 0.0
    %v1190 = vand.u32 %v79, 4294901760
    %v1191 = vsub.f32 %v79, %v1190
    %v1192 = vand.u32 %v1191, 4294901760
    %v1193 = vsub.f32 %v1191, %v1192
    %v1194 = vand.u32 %v1193, 4294901760
    %1195 = vmatpush1.msra.mxu0 %v1194
    %1196 = vmatprep.subr.mxu0 0.0
    %v1197 = vand.u32 %v80, 4294901760
    %v1198 = vsub.f32 %v80, %v1197
    %v1199 = vand.u32 %v1198, 4294901760
    %v1200 = vsub.f32 %v1198, %v1199
    %v1201 = vand.u32 %v1200, 4294901760
    %1202 = vmatpush1.msra.mxu0 %v1201
    %1203 = vmatprep.subr.mxu0 0.0
    %v1204 = vand.u32 %v81, 4294901760
    %v1205 = vsub.f32 %v81, %v1204
    %v1206 = vand.u32 %v1205, 4294901760
    %v1207 = vsub.f32 %v1205, %v1206
    %v1208 = vand.u32 %v1207, 4294901760
    %1209 = vmatpush1.msra.mxu0 %v1208
    %1210 = vmatprep.subr.mxu0 0.0
    %v1211 = vand.u32 %v82, 4294901760
    %v1212 = vsub.f32 %v82, %v1211
    %v1213 = vand.u32 %v1212, 4294901760
    %v1214 = vsub.f32 %v1212, %v1213
    %v1215 = vand.u32 %v1214, 4294901760
    %1216 = vmatpush1.msra.mxu0 %v1215
    %1217 = vmatprep.subr.mxu0 0.0
    %v1218 = vand.u32 %v83, 4294901760
    %v1219 = vsub.f32 %v83, %v1218
    %v1220 = vand.u32 %v1219, 4294901760
    %v1221 = vsub.f32 %v1219, %v1220
    %v1222 = vand.u32 %v1221, 4294901760
    %1223 = vmatpush1.msra.mxu0 %v1222
    %1224 = vmatprep.subr.mxu0 0.0
    %v1225 = vand.u32 %v84, 4294901760
    %v1226 = vsub.f32 %v84, %v1225
    %v1227 = vand.u32 %v1226, 4294901760
    %v1228 = vsub.f32 %v1226, %v1227
    %v1229 = vand.u32 %v1228, 4294901760
    %1230 = vmatpush1.msra.mxu0 %v1229
    %1231 = vmatprep.subr.mxu0 0.0
    %v1232 = vand.u32 %v85, 4294901760
    %v1233 = vsub.f32 %v85, %v1232
    %v1234 = vand.u32 %v1233, 4294901760
    %v1235 = vsub.f32 %v1233, %v1234
    %v1236 = vand.u32 %v1235, 4294901760
    %1237 = vmatpush1.msra.mxu0 %v1236
    %1238 = vmatprep.subr.mxu0 0.0
    %v1239 = vand.u32 %v86, 4294901760
    %v1240 = vsub.f32 %v86, %v1239
    %v1241 = vand.u32 %v1240, 4294901760
    %v1242 = vsub.f32 %v1240, %v1241
    %v1243 = vand.u32 %v1242, 4294901760
    %1244 = vmatpush1.msra.mxu0 %v1243
    %1245 = vmatprep.subr.mxu0 0.0
    %v1246 = vand.u32 %v87, 4294901760
    %v1247 = vsub.f32 %v87, %v1246
    %v1248 = vand.u32 %v1247, 4294901760
    %v1249 = vsub.f32 %v1247, %v1248
    %v1250 = vand.u32 %v1249, 4294901760
    %1251 = vmatpush1.msra.mxu0 %v1250
    %1252 = vmatprep.subr.mxu0 0.0
    %v1253 = vand.u32 %v88, 4294901760
    %v1254 = vsub.f32 %v88, %v1253
    %v1255 = vand.u32 %v1254, 4294901760
    %v1256 = vsub.f32 %v1254, %v1255
    %v1257 = vand.u32 %v1256, 4294901760
    %1258 = vmatpush1.msra.mxu0 %v1257
    %1259 = vmatprep.subr.mxu0 0.0
    %v1260 = vand.u32 %v89, 4294901760
    %v1261 = vsub.f32 %v89, %v1260
    %v1262 = vand.u32 %v1261, 4294901760
    %v1263 = vsub.f32 %v1261, %v1262
    %v1264 = vand.u32 %v1263, 4294901760
    %1265 = vmatpush1.msra.mxu0 %v1264
    %1266 = vmatprep.subr.mxu0 0.0
    %v1267 = vand.u32 %v90, 4294901760
    %v1268 = vsub.f32 %v90, %v1267
    %v1269 = vand.u32 %v1268, 4294901760
    %v1270 = vsub.f32 %v1268, %v1269
    %v1271 = vand.u32 %v1270, 4294901760
    %1272 = vmatpush1.msra.mxu0 %v1271
    %1273 = vmatprep.subr.mxu0 0.0
    %v1274 = vand.u32 %v91, 4294901760
    %v1275 = vsub.f32 %v91, %v1274
    %v1276 = vand.u32 %v1275, 4294901760
    %v1277 = vsub.f32 %v1275, %v1276
    %v1278 = vand.u32 %v1277, 4294901760
    %1279 = vmatpush1.msra.mxu0 %v1278
    %1280 = vmatprep.subr.mxu0 0.0
    %v1281 = vand.u32 %v92, 4294901760
    %v1282 = vsub.f32 %v92, %v1281
    %v1283 = vand.u32 %v1282, 4294901760
    %v1284 = vsub.f32 %v1282, %v1283
    %v1285 = vand.u32 %v1284, 4294901760
    %1286 = vmatpush1.msra.mxu0 %v1285
    %1287 = vmatprep.subr.mxu0 0.0
    %v1288 = vand.u32 %v93, 4294901760
    %v1289 = vsub.f32 %v93, %v1288
    %v1290 = vand.u32 %v1289, 4294901760
    %v1291 = vsub.f32 %v1289, %v1290
    %v1292 = vand.u32 %v1291, 4294901760
    %1293 = vmatpush1.msra.mxu0 %v1292
    %1294 = vmatprep.subr.mxu0 0.0
    %v1295 = vand.u32 %v94, 4294901760
    %v1296 = vsub.f32 %v94, %v1295
    %v1297 = vand.u32 %v1296, 4294901760
    %v1298 = vsub.f32 %v1296, %v1297
    %v1299 = vand.u32 %v1298, 4294901760
    %1300 = vmatpush1.msra.mxu0 %v1299
    %1301 = vmatprep.subr.mxu0 0.0
    %v1302 = vand.u32 %v95, 4294901760
    %v1303 = vsub.f32 %v95, %v1302
    %v1304 = vand.u32 %v1303, 4294901760
    %v1305 = vsub.f32 %v1303, %v1304
    %v1306 = vand.u32 %v1305, 4294901760
    %1307 = vmatpush1.msra.mxu0 %v1306
    %1308 = vmatprep.subr.mxu0 0.0
    %v1309 = vand.u32 %v96, 4294901760
    %v1310 = vsub.f32 %v96, %v1309
    %v1311 = vand.u32 %v1310, 4294901760
    %v1312 = vsub.f32 %v1310, %v1311
    %v1313 = vand.u32 %v1312, 4294901760
    %1314 = vmatpush1.msra.mxu0 %v1313
    %1315 = vmatprep.subr.mxu0 0.0
    %v1316 = vand.u32 %v97, 4294901760
    %v1317 = vsub.f32 %v97, %v1316
    %v1318 = vand.u32 %v1317, 4294901760
    %v1319 = vsub.f32 %v1317, %v1318
    %v1320 = vand.u32 %v1319, 4294901760
    %1321 = vmatpush1.msra.mxu0 %v1320
    %1322 = vmatprep.subr.mxu0 0.0
    %v1323 = vand.u32 %v98, 4294901760
    %v1324 = vsub.f32 %v98, %v1323
    %v1325 = vand.u32 %v1324, 4294901760
    %v1326 = vsub.f32 %v1324, %v1325
    %v1327 = vand.u32 %v1326, 4294901760
    %1328 = vmatpush1.msra.mxu0 %v1327
    %1329 = vmatprep.subr.mxu0 0.0
    %v1330 = vand.u32 %v99, 4294901760
    %v1331 = vsub.f32 %v99, %v1330
    %v1332 = vand.u32 %v1331, 4294901760
    %v1333 = vsub.f32 %v1331, %v1332
    %v1334 = vand.u32 %v1333, 4294901760
    %1335 = vmatpush1.msra.mxu0 %v1334
    %1336 = vmatprep.subr.mxu0 0.0
    %v1337 = vand.u32 %v100, 4294901760
    %v1338 = vsub.f32 %v100, %v1337
    %v1339 = vand.u32 %v1338, 4294901760
    %v1340 = vsub.f32 %v1338, %v1339
    %v1341 = vand.u32 %v1340, 4294901760
    %1342 = vmatpush1.msra.mxu0 %v1341
    %v1343 = vand.u32 %v33, 4294901760
    %1344 = vmatprep.mubr.f32.mxu0 %v1343
    %v1345 = vand.u32 %v32, 4294901760
    %1346 = vmatmul.mubr.f32.gmra.mrb[0].mxu0 %v1345
    %v1347 = vpop.f32.mrb[0].mxu0
    %v1348 = vadd.f32 %v1116, %v1347
    %v1349 = vpop.f32.mrb[0].mxu0
    %1350 = vdwg.mxu0
    %1351 = vmatprep.subr.mxu0 0.0
    %v1352 = vand.u32 %v69, 4294901760
    %v1353 = vsub.f32 %v69, %v1352
    %1354 = vmatpush1.msra.mxu0 %v1353
    %1355 = vmatprep.subr.mxu0 0.0
    %v1356 = vand.u32 %v70, 4294901760
    %v1357 = vsub.f32 %v70, %v1356
    %1358 = vmatpush1.msra.mxu0 %v1357
    %1359 = vmatprep.subr.mxu0 0.0
    %v1360 = vand.u32 %v71, 4294901760
    %v1361 = vsub.f32 %v71, %v1360
    %1362 = vmatpush1.msra.mxu0 %v1361
    %1363 = vmatprep.subr.mxu0 0.0
    %v1364 = vand.u32 %v72, 4294901760
    %v1365 = vsub.f32 %v72, %v1364
    %1366 = vmatpush1.msra.mxu0 %v1365
    %1367 = vmatprep.subr.mxu0 0.0
    %v1368 = vand.u32 %v73, 4294901760
    %v1369 = vsub.f32 %v73, %v1368
    %1370 = vmatpush1.msra.mxu0 %v1369
    %1371 = vmatprep.subr.mxu0 0.0
    %v1372 = vand.u32 %v74, 4294901760
    %v1373 = vsub.f32 %v74, %v1372
    %1374 = vmatpush1.msra.mxu0 %v1373
    %1375 = vmatprep.subr.mxu0 0.0
    %v1376 = vand.u32 %v75, 4294901760
    %v1377 = vsub.f32 %v75, %v1376
    %1378 = vmatpush1.msra.mxu0 %v1377
    %1379 = vmatprep.subr.mxu0 0.0
    %v1380 = vand.u32 %v76, 4294901760
    %v1381 = vsub.f32 %v76, %v1380
    %1382 = vmatpush1.msra.mxu0 %v1381
    %1383 = vmatprep.subr.mxu0 0.0
    %v1384 = vand.u32 %v77, 4294901760
    %v1385 = vsub.f32 %v77, %v1384
    %1386 = vmatpush1.msra.mxu0 %v1385
    %1387 = vmatprep.subr.mxu0 0.0
    %v1388 = vand.u32 %v78, 4294901760
    %v1389 = vsub.f32 %v78, %v1388
    %1390 = vmatpush1.msra.mxu0 %v1389
    %1391 = vmatprep.subr.mxu0 0.0
    %v1392 = vand.u32 %v79, 4294901760
    %v1393 = vsub.f32 %v79, %v1392
    %1394 = vmatpush1.msra.mxu0 %v1393
    %1395 = vmatprep.subr.mxu0 0.0
    %v1396 = vand.u32 %v80, 4294901760
    %v1397 = vsub.f32 %v80, %v1396
    %1398 = vmatpush1.msra.mxu0 %v1397
    %1399 = vmatprep.subr.mxu0 0.0
    %v1400 = vand.u32 %v81, 4294901760
    %v1401 = vsub.f32 %v81, %v1400
    %1402 = vmatpush1.msra.mxu0 %v1401
    %1403 = vmatprep.subr.mxu0 0.0
    %v1404 = vand.u32 %v82, 4294901760
    %v1405 = vsub.f32 %v82, %v1404
    %1406 = vmatpush1.msra.mxu0 %v1405
    %1407 = vmatprep.subr.mxu0 0.0
    %v1408 = vand.u32 %v83, 4294901760
    %v1409 = vsub.f32 %v83, %v1408
    %1410 = vmatpush1.msra.mxu0 %v1409
    %1411 = vmatprep.subr.mxu0 0.0
    %v1412 = vand.u32 %v84, 4294901760
    %v1413 = vsub.f32 %v84, %v1412
    %1414 = vmatpush1.msra.mxu0 %v1413
    %1415 = vmatprep.subr.mxu0 0.0
    %v1416 = vand.u32 %v85, 4294901760
    %v1417 = vsub.f32 %v85, %v1416
    %1418 = vmatpush1.msra.mxu0 %v1417
    %1419 = vmatprep.subr.mxu0 0.0
    %v1420 = vand.u32 %v86, 4294901760
    %v1421 = vsub.f32 %v86, %v1420
    %1422 = vmatpush1.msra.mxu0 %v1421
    %1423 = vmatprep.subr.mxu0 0.0
    %v1424 = vand.u32 %v87, 4294901760
    %v1425 = vsub.f32 %v87, %v1424
    %1426 = vmatpush1.msra.mxu0 %v1425
    %1427 = vmatprep.subr.mxu0 0.0
    %v1428 = vand.u32 %v88, 4294901760
    %v1429 = vsub.f32 %v88, %v1428
    %1430 = vmatpush1.msra.mxu0 %v1429
    %1431 = vmatprep.subr.mxu0 0.0
    %v1432 = vand.u32 %v89, 4294901760
    %v1433 = vsub.f32 %v89, %v1432
    %1434 = vmatpush1.msra.mxu0 %v1433
    %1435 = vmatprep.subr.mxu0 0.0
    %v1436 = vand.u32 %v90, 4294901760
    %v1437 = vsub.f32 %v90, %v1436
    %1438 = vmatpush1.msra.mxu0 %v1437
    %1439 = vmatprep.subr.mxu0 0.0
    %v1440 = vand.u32 %v91, 4294901760
    %v1441 = vsub.f32 %v91, %v1440
    %1442 = vmatpush1.msra.mxu0 %v1441
    %1443 = vmatprep.subr.mxu0 0.0
    %v1444 = vand.u32 %v92, 4294901760
    %v1445 = vsub.f32 %v92, %v1444
    %1446 = vmatpush1.msra.mxu0 %v1445
    %1447 = vmatprep.subr.mxu0 0.0
    %v1448 = vand.u32 %v93, 4294901760
    %v1449 = vsub.f32 %v93, %v1448
    %1450 = vmatpush1.msra.mxu0 %v1449
    %1451 = vmatprep.subr.mxu0 0.0
    %v1452 = vand.u32 %v94, 4294901760
    %v1453 = vsub.f32 %v94, %v1452
    %1454 = vmatpush1.msra.mxu0 %v1453
    %1455 = vmatprep.subr.mxu0 0.0
    %v1456 = vand.u32 %v95, 4294901760
    %v1457 = vsub.f32 %v95, %v1456
    %1458 = vmatpush1.msra.mxu0 %v1457
    %1459 = vmatprep.subr.mxu0 0.0
    %v1460 = vand.u32 %v96, 4294901760
    %v1461 = vsub.f32 %v96, %v1460
    %1462 = vmatpush1.msra.mxu0 %v1461
    %1463 = vmatprep.subr.mxu0 0.0
    %v1464 = vand.u32 %v97, 4294901760
    %v1465 = vsub.f32 %v97, %v1464
    %1466 = vmatpush1.msra.mxu0 %v1465
    %1467 = vmatprep.subr.mxu0 0.0
    %v1468 = vand.u32 %v98, 4294901760
    %v1469 = vsub.f32 %v98, %v1468
    %1470 = vmatpush1.msra.mxu0 %v1469
    %1471 = vmatprep.subr.mxu0 0.0
    %v1472 = vand.u32 %v99, 4294901760
    %v1473 = vsub.f32 %v99, %v1472
    %1474 = vmatpush1.msra.mxu0 %v1473
    %1475 = vmatprep.subr.mxu0 0.0
    %v1476 = vand.u32 %v100, 4294901760
    %v1477 = vsub.f32 %v100, %v1476
    %1478 = vmatpush1.msra.mxu0 %v1477
    %v1479 = vand.u32 %v33, 4294901760
    %v1480 = vsub.f32 %v33, %v1479
    %1481 = vmatprep.mubr.f32.mxu0 %v1480
    %v1482 = vand.u32 %v32, 4294901760
    %v1483 = vsub.f32 %v32, %v1482
    %1484 = vmatmul.mubr.f32.gmra.mrb[0].mxu0 %v1483
    %v1485 = vpop.f32.mrb[0].mxu0
    %v1486 = vadd.f32 %v1348, %v1485
    %v1487 = vpop.f32.mrb[0].mxu0
    %1488 = vdwg.mxu0
    %1489 = vmatprep.subr.mxu0 0.0
    %v1490 = vand.u32 %v69, 4294901760
    %1491 = vmatpush1.msra.mxu0 %v1490
    %1492 = vmatprep.subr.mxu0 0.0
    %v1493 = vand.u32 %v70, 4294901760
    %1494 = vmatpush1.msra.mxu0 %v1493
    %1495 = vmatprep.subr.mxu0 0.0
    %v1496 = vand.u32 %v71, 4294901760
    %1497 = vmatpush1.msra.mxu0 %v1496
    %1498 = vmatprep.subr.mxu0 0.0
    %v1499 = vand.u32 %v72, 4294901760
    %1500 = vmatpush1.msra.mxu0 %v1499
    %1501 = vmatprep.subr.mxu0 0.0
    %v1502 = vand.u32 %v73, 4294901760
    %1503 = vmatpush1.msra.mxu0 %v1502
    %1504 = vmatprep.subr.mxu0 0.0
    %v1505 = vand.u32 %v74, 4294901760
    %1506 = vmatpush1.msra.mxu0 %v1505
    %1507 = vmatprep.subr.mxu0 0.0
    %v1508 = vand.u32 %v75, 4294901760
    %1509 = vmatpush1.msra.mxu0 %v1508
    %1510 = vmatprep.subr.mxu0 0.0
    %v1511 = vand.u32 %v76, 4294901760
    %1512 = vmatpush1.msra.mxu0 %v1511
    %1513 = vmatprep.subr.mxu0 0.0
    %v1514 = vand.u32 %v77, 4294901760
    %1515 = vmatpush1.msra.mxu0 %v1514
    %1516 = vmatprep.subr.mxu0 0.0
    %v1517 = vand.u32 %v78, 4294901760
    %1518 = vmatpush1.msra.mxu0 %v1517
    %1519 = vmatprep.subr.mxu0 0.0
    %v1520 = vand.u32 %v79, 4294901760
    %1521 = vmatpush1.msra.mxu0 %v1520
    %1522 = vmatprep.subr.mxu0 0.0
    %v1523 = vand.u32 %v80, 4294901760
    %1524 = vmatpush1.msra.mxu0 %v1523
    %1525 = vmatprep.subr.mxu0 0.0
    %v1526 = vand.u32 %v81, 4294901760
    %1527 = vmatpush1.msra.mxu0 %v1526
    %1528 = vmatprep.subr.mxu0 0.0
    %v1529 = vand.u32 %v82, 4294901760
    %1530 = vmatpush1.msra.mxu0 %v1529
    %1531 = vmatprep.subr.mxu0 0.0
    %v1532 = vand.u32 %v83, 4294901760
    %1533 = vmatpush1.msra.mxu0 %v1532
    %1534 = vmatprep.subr.mxu0 0.0
    %v1535 = vand.u32 %v84, 4294901760
    %1536 = vmatpush1.msra.mxu0 %v1535
    %1537 = vmatprep.subr.mxu0 0.0
    %v1538 = vand.u32 %v85, 4294901760
    %1539 = vmatpush1.msra.mxu0 %v1538
    %1540 = vmatprep.subr.mxu0 0.0
    %v1541 = vand.u32 %v86, 4294901760
    %1542 = vmatpush1.msra.mxu0 %v1541
    %1543 = vmatprep.subr.mxu0 0.0
    %v1544 = vand.u32 %v87, 4294901760
    %1545 = vmatpush1.msra.mxu0 %v1544
    %1546 = vmatprep.subr.mxu0 0.0
    %v1547 = vand.u32 %v88, 4294901760
    %1548 = vmatpush1.msra.mxu0 %v1547
    %1549 = vmatprep.subr.mxu0 0.0
    %v1550 = vand.u32 %v89, 4294901760
    %1551 = vmatpush1.msra.mxu0 %v1550
    %1552 = vmatprep.subr.mxu0 0.0
    %v1553 = vand.u32 %v90, 4294901760
    %1554 = vmatpush1.msra.mxu0 %v1553
    %1555 = vmatprep.subr.mxu0 0.0
    %v1556 = vand.u32 %v91, 4294901760
    %1557 = vmatpush1.msra.mxu0 %v1556
    %1558 = vmatprep.subr.mxu0 0.0
    %v1559 = vand.u32 %v92, 4294901760
    %1560 = vmatpush1.msra.mxu0 %v1559
    %1561 = vmatprep.subr.mxu0 0.0
    %v1562 = vand.u32 %v93, 4294901760
    %1563 = vmatpush1.msra.mxu0 %v1562
    %1564 = vmatprep.subr.mxu0 0.0
    %v1565 = vand.u32 %v94, 4294901760
    %1566 = vmatpush1.msra.mxu0 %v1565
    %1567 = vmatprep.subr.mxu0 0.0
    %v1568 = vand.u32 %v95, 4294901760
    %1569 = vmatpush1.msra.mxu0 %v1568
    %1570 = vmatprep.subr.mxu0 0.0
    %v1571 = vand.u32 %v96, 4294901760
    %1572 = vmatpush1.msra.mxu0 %v1571
    %1573 = vmatprep.subr.mxu0 0.0
    %v1574 = vand.u32 %v97, 4294901760
    %1575 = vmatpush1.msra.mxu0 %v1574
    %1576 = vmatprep.subr.mxu0 0.0
    %v1577 = vand.u32 %v98, 4294901760
    %1578 = vmatpush1.msra.mxu0 %v1577
    %1579 = vmatprep.subr.mxu0 0.0
    %v1580 = vand.u32 %v99, 4294901760
    %1581 = vmatpush1.msra.mxu0 %v1580
    %1582 = vmatprep.subr.mxu0 0.0
    %v1583 = vand.u32 %v100, 4294901760
    %1584 = vmatpush1.msra.mxu0 %v1583
    %v1585 = vand.u32 %v33, 4294901760
    %v1586 = vsub.f32 %v33, %v1585
    %v1587 = vand.u32 %v1586, 4294901760
    %1588 = vmatprep.mubr.f32.mxu0 %v1587
    %v1589 = vand.u32 %v32, 4294901760
    %v1590 = vsub.f32 %v32, %v1589
    %v1591 = vand.u32 %v1590, 4294901760
    %1592 = vmatmul.mubr.f32.gmra.mrb[0].mxu0 %v1591
    %v1593 = vpop.f32.mrb[0].mxu0
    %v1594 = vadd.f32 %v1486, %v1593
    %v1595 = vpop.f32.mrb[0].mxu0
    %1596 = vdwg.mxu0
    %1597 = vmatprep.subr.mxu0 0.0
    %v1598 = vand.u32 %v69, 4294901760
    %v1599 = vsub.f32 %v69, %v1598
    %v1600 = vand.u32 %v1599, 4294901760
    %1601 = vmatpush1.msra.mxu0 %v1600
    %1602 = vmatprep.subr.mxu0 0.0
    %v1603 = vand.u32 %v70, 4294901760
    %v1604 = vsub.f32 %v70, %v1603
    %v1605 = vand.u32 %v1604, 4294901760
    %1606 = vmatpush1.msra.mxu0 %v1605
    %1607 = vmatprep.subr.mxu0 0.0
    %v1608 = vand.u32 %v71, 4294901760
    %v1609 = vsub.f32 %v71, %v1608
    %v1610 = vand.u32 %v1609, 4294901760
    %1611 = vmatpush1.msra.mxu0 %v1610
    %1612 = vmatprep.subr.mxu0 0.0
    %v1613 = vand.u32 %v72, 4294901760
    %v1614 = vsub.f32 %v72, %v1613
    %v1615 = vand.u32 %v1614, 4294901760
    %1616 = vmatpush1.msra.mxu0 %v1615
    %1617 = vmatprep.subr.mxu0 0.0
    %v1618 = vand.u32 %v73, 4294901760
    %v1619 = vsub.f32 %v73, %v1618
    %v1620 = vand.u32 %v1619, 4294901760
    %1621 = vmatpush1.msra.mxu0 %v1620
    %1622 = vmatprep.subr.mxu0 0.0
    %v1623 = vand.u32 %v74, 4294901760
    %v1624 = vsub.f32 %v74, %v1623
    %v1625 = vand.u32 %v1624, 4294901760
    %1626 = vmatpush1.msra.mxu0 %v1625
    %1627 = vmatprep.subr.mxu0 0.0
    %v1628 = vand.u32 %v75, 4294901760
    %v1629 = vsub.f32 %v75, %v1628
    %v1630 = vand.u32 %v1629, 4294901760
    %1631 = vmatpush1.msra.mxu0 %v1630
    %1632 = vmatprep.subr.mxu0 0.0
    %v1633 = vand.u32 %v76, 4294901760
    %v1634 = vsub.f32 %v76, %v1633
    %v1635 = vand.u32 %v1634, 4294901760
    %1636 = vmatpush1.msra.mxu0 %v1635
    %1637 = vmatprep.subr.mxu0 0.0
    %v1638 = vand.u32 %v77, 4294901760
    %v1639 = vsub.f32 %v77, %v1638
    %v1640 = vand.u32 %v1639, 4294901760
    %1641 = vmatpush1.msra.mxu0 %v1640
    %1642 = vmatprep.subr.mxu0 0.0
    %v1643 = vand.u32 %v78, 4294901760
    %v1644 = vsub.f32 %v78, %v1643
    %v1645 = vand.u32 %v1644, 4294901760
    %1646 = vmatpush1.msra.mxu0 %v1645
    %1647 = vmatprep.subr.mxu0 0.0
    %v1648 = vand.u32 %v79, 4294901760
    %v1649 = vsub.f32 %v79, %v1648
    %v1650 = vand.u32 %v1649, 4294901760
    %1651 = vmatpush1.msra.mxu0 %v1650
    %1652 = vmatprep.subr.mxu0 0.0
    %v1653 = vand.u32 %v80, 4294901760
    %v1654 = vsub.f32 %v80, %v1653
    %v1655 = vand.u32 %v1654, 4294901760
    %1656 = vmatpush1.msra.mxu0 %v1655
    %1657 = vmatprep.subr.mxu0 0.0
    %v1658 = vand.u32 %v81, 4294901760
    %v1659 = vsub.f32 %v81, %v1658
    %v1660 = vand.u32 %v1659, 4294901760
    %1661 = vmatpush1.msra.mxu0 %v1660
    %1662 = vmatprep.subr.mxu0 0.0
    %v1663 = vand.u32 %v82, 4294901760
    %v1664 = vsub.f32 %v82, %v1663
    %v1665 = vand.u32 %v1664, 4294901760
    %1666 = vmatpush1.msra.mxu0 %v1665
    %1667 = vmatprep.subr.mxu0 0.0
    %v1668 = vand.u32 %v83, 4294901760
    %v1669 = vsub.f32 %v83, %v1668
    %v1670 = vand.u32 %v1669, 4294901760
    %1671 = vmatpush1.msra.mxu0 %v1670
    %1672 = vmatprep.subr.mxu0 0.0
    %v1673 = vand.u32 %v84, 4294901760
    %v1674 = vsub.f32 %v84, %v1673
    %v1675 = vand.u32 %v1674, 4294901760
    %1676 = vmatpush1.msra.mxu0 %v1675
    %1677 = vmatprep.subr.mxu0 0.0
    %v1678 = vand.u32 %v85, 4294901760
    %v1679 = vsub.f32 %v85, %v1678
    %v1680 = vand.u32 %v1679, 4294901760
    %1681 = vmatpush1.msra.mxu0 %v1680
    %1682 = vmatprep.subr.mxu0 0.0
    %v1683 = vand.u32 %v86, 4294901760
    %v1684 = vsub.f32 %v86, %v1683
    %v1685 = vand.u32 %v1684, 4294901760
    %1686 = vmatpush1.msra.mxu0 %v1685
    %1687 = vmatprep.subr.mxu0 0.0
    %v1688 = vand.u32 %v87, 4294901760
    %v1689 = vsub.f32 %v87, %v1688
    %v1690 = vand.u32 %v1689, 4294901760
    %1691 = vmatpush1.msra.mxu0 %v1690
    %1692 = vmatprep.subr.mxu0 0.0
    %v1693 = vand.u32 %v88, 4294901760
    %v1694 = vsub.f32 %v88, %v1693
    %v1695 = vand.u32 %v1694, 4294901760
    %1696 = vmatpush1.msra.mxu0 %v1695
    %1697 = vmatprep.subr.mxu0 0.0
    %v1698 = vand.u32 %v89, 4294901760
    %v1699 = vsub.f32 %v89, %v1698
    %v1700 = vand.u32 %v1699, 4294901760
    %1701 = vmatpush1.msra.mxu0 %v1700
    %1702 = vmatprep.subr.mxu0 0.0
    %v1703 = vand.u32 %v90, 4294901760
    %v1704 = vsub.f32 %v90, %v1703
    %v1705 = vand.u32 %v1704, 4294901760
    %1706 = vmatpush1.msra.mxu0 %v1705
    %1707 = vmatprep.subr.mxu0 0.0
    %v1708 = vand.u32 %v91, 4294901760
    %v1709 = vsub.f32 %v91, %v1708
    %v1710 = vand.u32 %v1709, 4294901760
    %1711 = vmatpush1.msra.mxu0 %v1710
    %1712 = vmatprep.subr.mxu0 0.0
    %v1713 = vand.u32 %v92, 4294901760
    %v1714 = vsub.f32 %v92, %v1713
    %v1715 = vand.u32 %v1714, 4294901760
    %1716 = vmatpush1.msra.mxu0 %v1715
    %1717 = vmatprep.subr.mxu0 0.0
    %v1718 = vand.u32 %v93, 4294901760
    %v1719 = vsub.f32 %v93, %v1718
    %v1720 = vand.u32 %v1719, 4294901760
    %1721 = vmatpush1.msra.mxu0 %v1720
    %1722 = vmatprep.subr.mxu0 0.0
    %v1723 = vand.u32 %v94, 4294901760
    %v1724 = vsub.f32 %v94, %v1723
    %v1725 = vand.u32 %v1724, 4294901760
    %1726 = vmatpush1.msra.mxu0 %v1725
    %1727 = vmatprep.subr.mxu0 0.0
    %v1728 = vand.u32 %v95, 4294901760
    %v1729 = vsub.f32 %v95, %v1728
    %v1730 = vand.u32 %v1729, 4294901760
    %1731 = vmatpush1.msra.mxu0 %v1730
    %1732 = vmatprep.subr.mxu0 0.0
    %v1733 = vand.u32 %v96, 4294901760
    %v1734 = vsub.f32 %v96, %v1733
    %v1735 = vand.u32 %v1734, 4294901760
    %1736 = vmatpush1.msra.mxu0 %v1735
    %1737 = vmatprep.subr.mxu0 0.0
    %v1738 = vand.u32 %v97, 4294901760
    %v1739 = vsub.f32 %v97, %v1738
    %v1740 = vand.u32 %v1739, 4294901760
    %1741 = vmatpush1.msra.mxu0 %v1740
    %1742 = vmatprep.subr.mxu0 0.0
    %v1743 = vand.u32 %v98, 4294901760
    %v1744 = vsub.f32 %v98, %v1743
    %v1745 = vand.u32 %v1744, 4294901760
    %1746 = vmatpush1.msra.mxu0 %v1745
    %1747 = vmatprep.subr.mxu0 0.0
    %v1748 = vand.u32 %v99, 4294901760
    %v1749 = vsub.f32 %v99, %v1748
    %v1750 = vand.u32 %v1749, 4294901760
    %1751 = vmatpush1.msra.mxu0 %v1750
    %1752 = vmatprep.subr.mxu0 0.0
    %v1753 = vand.u32 %v100, 4294901760
    %v1754 = vsub.f32 %v100, %v1753
    %v1755 = vand.u32 %v1754, 4294901760
    %1756 = vmatpush1.msra.mxu0 %v1755
    %v1757 = vand.u32 %v33, 4294901760
    %1758 = vmatprep.mubr.f32.mxu0 %v1757
    %v1759 = vand.u32 %v32, 4294901760
    %1760 = vmatmul.mubr.f32.gmra.mrb[0].mxu0 %v1759
    %v1761 = vpop.f32.mrb[0].mxu0
    %v1762 = vadd.f32 %v1594, %v1761
    %v1763 = vpop.f32.mrb[0].mxu0
    %1764 = vdwg.mxu0
    %1765 = vmatprep.subr.mxu0 0.0
    %v1766 = vand.u32 %v69, 4294901760
    %1767 = vmatpush1.msra.mxu0 %v1766
    %1768 = vmatprep.subr.mxu0 0.0
    %v1769 = vand.u32 %v70, 4294901760
    %1770 = vmatpush1.msra.mxu0 %v1769
    %1771 = vmatprep.subr.mxu0 0.0
    %v1772 = vand.u32 %v71, 4294901760
    %1773 = vmatpush1.msra.mxu0 %v1772
    %1774 = vmatprep.subr.mxu0 0.0
    %v1775 = vand.u32 %v72, 4294901760
    %1776 = vmatpush1.msra.mxu0 %v1775
    %1777 = vmatprep.subr.mxu0 0.0
    %v1778 = vand.u32 %v73, 4294901760
    %1779 = vmatpush1.msra.mxu0 %v1778
    %1780 = vmatprep.subr.mxu0 0.0
    %v1781 = vand.u32 %v74, 4294901760
    %1782 = vmatpush1.msra.mxu0 %v1781
    %1783 = vmatprep.subr.mxu0 0.0
    %v1784 = vand.u32 %v75, 4294901760
    %1785 = vmatpush1.msra.mxu0 %v1784
    %1786 = vmatprep.subr.mxu0 0.0
    %v1787 = vand.u32 %v76, 4294901760
    %1788 = vmatpush1.msra.mxu0 %v1787
    %1789 = vmatprep.subr.mxu0 0.0
    %v1790 = vand.u32 %v77, 4294901760
    %1791 = vmatpush1.msra.mxu0 %v1790
    %1792 = vmatprep.subr.mxu0 0.0
    %v1793 = vand.u32 %v78, 4294901760
    %1794 = vmatpush1.msra.mxu0 %v1793
    %1795 = vmatprep.subr.mxu0 0.0
    %v1796 = vand.u32 %v79, 4294901760
    %1797 = vmatpush1.msra.mxu0 %v1796
    %1798 = vmatprep.subr.mxu0 0.0
    %v1799 = vand.u32 %v80, 4294901760
    %1800 = vmatpush1.msra.mxu0 %v1799
    %1801 = vmatprep.subr.mxu0 0.0
    %v1802 = vand.u32 %v81, 4294901760
    %1803 = vmatpush1.msra.mxu0 %v1802
    %1804 = vmatprep.subr.mxu0 0.0
    %v1805 = vand.u32 %v82, 4294901760
    %1806 = vmatpush1.msra.mxu0 %v1805
    %1807 = vmatprep.subr.mxu0 0.0
    %v1808 = vand.u32 %v83, 4294901760
    %1809 = vmatpush1.msra.mxu0 %v1808
    %1810 = vmatprep.subr.mxu0 0.0
    %v1811 = vand.u32 %v84, 4294901760
    %1812 = vmatpush1.msra.mxu0 %v1811
    %1813 = vmatprep.subr.mxu0 0.0
    %v1814 = vand.u32 %v85, 4294901760
    %1815 = vmatpush1.msra.mxu0 %v1814
    %1816 = vmatprep.subr.mxu0 0.0
    %v1817 = vand.u32 %v86, 4294901760
    %1818 = vmatpush1.msra.mxu0 %v1817
    %1819 = vmatprep.subr.mxu0 0.0
    %v1820 = vand.u32 %v87, 4294901760
    %1821 = vmatpush1.msra.mxu0 %v1820
    %1822 = vmatprep.subr.mxu0 0.0
    %v1823 = vand.u32 %v88, 4294901760
    %1824 = vmatpush1.msra.mxu0 %v1823
    %1825 = vmatprep.subr.mxu0 0.0
    %v1826 = vand.u32 %v89, 4294901760
    %1827 = vmatpush1.msra.mxu0 %v1826
    %1828 = vmatprep.subr.mxu0 0.0
    %v1829 = vand.u32 %v90, 4294901760
    %1830 = vmatpush1.msra.mxu0 %v1829
    %1831 = vmatprep.subr.mxu0 0.0
    %v1832 = vand.u32 %v91, 4294901760
    %1833 = vmatpush1.msra.mxu0 %v1832
    %1834 = vmatprep.subr.mxu0 0.0
    %v1835 = vand.u32 %v92, 4294901760
    %1836 = vmatpush1.msra.mxu0 %v1835
    %1837 = vmatprep.subr.mxu0 0.0
    %v1838 = vand.u32 %v93, 4294901760
    %1839 = vmatpush1.msra.mxu0 %v1838
    %1840 = vmatprep.subr.mxu0 0.0
    %v1841 = vand.u32 %v94, 4294901760
    %1842 = vmatpush1.msra.mxu0 %v1841
    %1843 = vmatprep.subr.mxu0 0.0
    %v1844 = vand.u32 %v95, 4294901760
    %1845 = vmatpush1.msra.mxu0 %v1844
    %1846 = vmatprep.subr.mxu0 0.0
    %v1847 = vand.u32 %v96, 4294901760
    %1848 = vmatpush1.msra.mxu0 %v1847
    %1849 = vmatprep.subr.mxu0 0.0
    %v1850 = vand.u32 %v97, 4294901760
    %1851 = vmatpush1.msra.mxu0 %v1850
    %1852 = vmatprep.subr.mxu0 0.0
    %v1853 = vand.u32 %v98, 4294901760
    %1854 = vmatpush1.msra.mxu0 %v1853
    %1855 = vmatprep.subr.mxu0 0.0
    %v1856 = vand.u32 %v99, 4294901760
    %1857 = vmatpush1.msra.mxu0 %v1856
    %1858 = vmatprep.subr.mxu0 0.0
    %v1859 = vand.u32 %v100, 4294901760
    %1860 = vmatpush1.msra.mxu0 %v1859
    %v1861 = vand.u32 %v33, 4294901760
    %1862 = vmatprep.mubr.f32.mxu0 %v1861
    %v1863 = vand.u32 %v32, 4294901760
    %1864 = vmatmul.mubr.f32.gmra.mrb[0].mxu0 %v1863
    %v1865 = vpop.f32.mrb[0].mxu0
    %v1866 = vadd.f32 %v1762, %v1865
    %v1867 = vpop.f32.mrb[0].mxu0
    %1868 = vdwg.mxu0
    %1869 = vmatprep.subr.mxu0 0.0
    %v1870 = vand.u32 %v101, 4294901760
    %1871 = vmatpush1.msra.mxu0 %v1870
    %1872 = vmatprep.subr.mxu0 0.0
    %v1873 = vand.u32 %v102, 4294901760
    %1874 = vmatpush1.msra.mxu0 %v1873
    %1875 = vmatprep.subr.mxu0 0.0
    %v1876 = vand.u32 %v103, 4294901760
    %1877 = vmatpush1.msra.mxu0 %v1876
    %1878 = vmatprep.subr.mxu0 0.0
    %v1879 = vand.u32 %v104, 4294901760
    %1880 = vmatpush1.msra.mxu0 %v1879
    %1881 = vmatprep.subr.mxu0 0.0
    %v1882 = vand.u32 %v105, 4294901760
    %1883 = vmatpush1.msra.mxu0 %v1882
    %1884 = vmatprep.subr.mxu0 0.0
    %v1885 = vand.u32 %v106, 4294901760
    %1886 = vmatpush1.msra.mxu0 %v1885
    %1887 = vmatprep.subr.mxu0 0.0
    %v1888 = vand.u32 %v107, 4294901760
    %1889 = vmatpush1.msra.mxu0 %v1888
    %1890 = vmatprep.subr.mxu0 0.0
    %v1891 = vand.u32 %v108, 4294901760
    %1892 = vmatpush1.msra.mxu0 %v1891
    %1893 = vmatprep.subr.mxu0 0.0
    %v1894 = vand.u32 %v109, 4294901760
    %1895 = vmatpush1.msra.mxu0 %v1894
    %1896 = vmatprep.subr.mxu0 0.0
    %v1897 = vand.u32 %v110, 4294901760
    %1898 = vmatpush1.msra.mxu0 %v1897
    %1899 = vmatprep.subr.mxu0 0.0
    %v1900 = vand.u32 %v111, 4294901760
    %1901 = vmatpush1.msra.mxu0 %v1900
    %1902 = vmatprep.subr.mxu0 0.0
    %v1903 = vand.u32 %v112, 4294901760
    %1904 = vmatpush1.msra.mxu0 %v1903
    %1905 = vmatprep.subr.mxu0 0.0
    %v1906 = vand.u32 %v113, 4294901760
    %1907 = vmatpush1.msra.mxu0 %v1906
    %1908 = vmatprep.subr.mxu0 0.0
    %v1909 = vand.u32 %v114, 4294901760
    %1910 = vmatpush1.msra.mxu0 %v1909
    %1911 = vmatprep.subr.mxu0 0.0
    %v1912 = vand.u32 %v115, 4294901760
    %1913 = vmatpush1.msra.mxu0 %v1912
    %1914 = vmatprep.subr.mxu0 0.0
    %v1915 = vand.u32 %v116, 4294901760
    %1916 = vmatpush1.msra.mxu0 %v1915
    %1917 = vmatprep.subr.mxu0 0.0
    %v1918 = vand.u32 %v117, 4294901760
    %1919 = vmatpush1.msra.mxu0 %v1918
    %1920 = vmatprep.subr.mxu0 0.0
    %v1921 = vand.u32 %v118, 4294901760
    %1922 = vmatpush1.msra.mxu0 %v1921
    %1923 = vmatprep.subr.mxu0 0.0
    %v1924 = vand.u32 %v119, 4294901760
    %1925 = vmatpush1.msra.mxu0 %v1924
    %1926 = vmatprep.subr.mxu0 0.0
    %v1927 = vand.u32 %v120, 4294901760
    %1928 = vmatpush1.msra.mxu0 %v1927
    %1929 = vmatprep.subr.mxu0 0.0
    %v1930 = vand.u32 %v121, 4294901760
    %1931 = vmatpush1.msra.mxu0 %v1930
    %1932 = vmatprep.subr.mxu0 0.0
    %v1933 = vand.u32 %v122, 4294901760
    %1934 = vmatpush1.msra.mxu0 %v1933
    %1935 = vmatprep.subr.mxu0 0.0
    %v1936 = vand.u32 %v123, 4294901760
    %1937 = vmatpush1.msra.mxu0 %v1936
    %1938 = vmatprep.subr.mxu0 0.0
    %v1939 = vand.u32 %v124, 4294901760
    %1940 = vmatpush1.msra.mxu0 %v1939
    %1941 = vmatprep.subr.mxu0 0.0
    %v1942 = vand.u32 %v125, 4294901760
    %1943 = vmatpush1.msra.mxu0 %v1942
    %1944 = vmatprep.subr.mxu0 0.0
    %v1945 = vand.u32 %v126, 4294901760
    %1946 = vmatpush1.msra.mxu0 %v1945
    %1947 = vmatprep.subr.mxu0 0.0
    %v1948 = vand.u32 %v127, 4294901760
    %1949 = vmatpush1.msra.mxu0 %v1948
    %1950 = vmatprep.subr.mxu0 0.0
    %v1951 = vand.u32 %v128, 4294901760
    %1952 = vmatpush1.msra.mxu0 %v1951
    %1953 = vmatprep.subr.mxu0 0.0
    %v1954 = vand.u32 %v129, 4294901760
    %1955 = vmatpush1.msra.mxu0 %v1954
    %1956 = vmatprep.subr.mxu0 0.0
    %v1957 = vand.u32 %v130, 4294901760
    %1958 = vmatpush1.msra.mxu0 %v1957
    %1959 = vmatprep.subr.mxu0 0.0
    %v1960 = vand.u32 %v131, 4294901760
    %1961 = vmatpush1.msra.mxu0 %v1960
    %1962 = vmatprep.subr.mxu0 0.0
    %v1963 = vand.u32 %v132, 4294901760
    %1964 = vmatpush1.msra.mxu0 %v1963
    %v1965 = vand.u32 %v35, 4294901760
    %v1966 = vsub.f32 %v35, %v1965
    %v1967 = vand.u32 %v1966, 4294901760
    %v1968 = vsub.f32 %v1966, %v1967
    %v1969 = vand.u32 %v1968, 4294901760
    %1970 = vmatprep.mubr.f32.mxu0 %v1969
    %v1971 = vand.u32 %v34, 4294901760
    %v1972 = vsub.f32 %v34, %v1971
    %v1973 = vand.u32 %v1972, 4294901760
    %v1974 = vsub.f32 %v1972, %v1973
    %v1975 = vand.u32 %v1974, 4294901760
    %1976 = vmatmul.mubr.f32.gmra.mrb[0].mxu0 %v1975
    %v1977 = vpop.f32.mrb[0].mxu0
    %v1978 = vadd.f32 %v1866, %v1977
    %v1979 = vpop.f32.mrb[0].mxu0
    %1980 = vdwg.mxu0
    %1981 = vmatprep.subr.mxu0 0.0
    %v1982 = vand.u32 %v101, 4294901760
    %v1983 = vsub.f32 %v101, %v1982
    %v1984 = vand.u32 %v1983, 4294901760
    %v1985 = vsub.f32 %v1983, %v1984
    %v1986 = vand.u32 %v1985, 4294901760
    %1987 = vmatpush1.msra.mxu0 %v1986
    %1988 = vmatprep.subr.mxu0 0.0
    %v1989 = vand.u32 %v102, 4294901760
    %v1990 = vsub.f32 %v102, %v1989
    %v1991 = vand.u32 %v1990, 4294901760
    %v1992 = vsub.f32 %v1990, %v1991
    %v1993 = vand.u32 %v1992, 4294901760
    %1994 = vmatpush1.msra.mxu0 %v1993
    %1995 = vmatprep.subr.mxu0 0.0
    %v1996 = vand.u32 %v103, 4294901760
    %v1997 = vsub.f32 %v103, %v1996
    %v1998 = vand.u32 %v1997, 4294901760
    %v1999 = vsub.f32 %v1997, %v1998
    %v2000 = vand.u32 %v1999, 4294901760
    %2001 = vmatpush1.msra.mxu0 %v2000
    %2002 = vmatprep.subr.mxu0 0.0
    %v2003 = vand.u32 %v104, 4294901760
    %v2004 = vsub.f32 %v104, %v2003
    %v2005 = vand.u32 %v2004, 4294901760
    %v2006 = vsub.f32 %v2004, %v2005
    %v2007 = vand.u32 %v2006, 4294901760
    %2008 = vmatpush1.msra.mxu0 %v2007
    %2009 = vmatprep.subr.mxu0 0.0
    %v2010 = vand.u32 %v105, 4294901760
    %v2011 = vsub.f32 %v105, %v2010
    %v2012 = vand.u32 %v2011, 4294901760
    %v2013 = vsub.f32 %v2011, %v2012
    %v2014 = vand.u32 %v2013, 4294901760
    %2015 = vmatpush1.msra.mxu0 %v2014
    %2016 = vmatprep.subr.mxu0 0.0
    %v2017 = vand.u32 %v106, 4294901760
    %v2018 = vsub.f32 %v106, %v2017
    %v2019 = vand.u32 %v2018, 4294901760
    %v2020 = vsub.f32 %v2018, %v2019
    %v2021 = vand.u32 %v2020, 4294901760
    %2022 = vmatpush1.msra.mxu0 %v2021
    %2023 = vmatprep.subr.mxu0 0.0
    %v2024 = vand.u32 %v107, 4294901760
    %v2025 = vsub.f32 %v107, %v2024
    %v2026 = vand.u32 %v2025, 4294901760
    %v2027 = vsub.f32 %v2025, %v2026
    %v2028 = vand.u32 %v2027, 4294901760
    %2029 = vmatpush1.msra.mxu0 %v2028
    %2030 = vmatprep.subr.mxu0 0.0
    %v2031 = vand.u32 %v108, 4294901760
    %v2032 = vsub.f32 %v108, %v2031
    %v2033 = vand.u32 %v2032, 4294901760
    %v2034 = vsub.f32 %v2032, %v2033
    %v2035 = vand.u32 %v2034, 4294901760
    %2036 = vmatpush1.msra.mxu0 %v2035
    %2037 = vmatprep.subr.mxu0 0.0
    %v2038 = vand.u32 %v109, 4294901760
    %v2039 = vsub.f32 %v109, %v2038
    %v2040 = vand.u32 %v2039, 4294901760
    %v2041 = vsub.f32 %v2039, %v2040
    %v2042 = vand.u32 %v2041, 4294901760
    %2043 = vmatpush1.msra.mxu0 %v2042
    %2044 = vmatprep.subr.mxu0 0.0
    %v2045 = vand.u32 %v110, 4294901760
    %v2046 = vsub.f32 %v110, %v2045
    %v2047 = vand.u32 %v2046, 4294901760
    %v2048 = vsub.f32 %v2046, %v2047
    %v2049 = vand.u32 %v2048, 4294901760
    %2050 = vmatpush1.msra.mxu0 %v2049
    %2051 = vmatprep.subr.mxu0 0.0
    %v2052 = vand.u32 %v111, 4294901760
    %v2053 = vsub.f32 %v111, %v2052
    %v2054 = vand.u32 %v2053, 4294901760
    %v2055 = vsub.f32 %v2053, %v2054
    %v2056 = vand.u32 %v2055, 4294901760
    %2057 = vmatpush1.msra.mxu0 %v2056
    %2058 = vmatprep.subr.mxu0 0.0
    %v2059 = vand.u32 %v112, 4294901760
    %v2060 = vsub.f32 %v112, %v2059
    %v2061 = vand.u32 %v2060, 4294901760
    %v2062 = vsub.f32 %v2060, %v2061
    %v2063 = vand.u32 %v2062, 4294901760
    %2064 = vmatpush1.msra.mxu0 %v2063
    %2065 = vmatprep.subr.mxu0 0.0
    %v2066 = vand.u32 %v113, 4294901760
    %v2067 = vsub.f32 %v113, %v2066
    %v2068 = vand.u32 %v2067, 4294901760
    %v2069 = vsub.f32 %v2067, %v2068
    %v2070 = vand.u32 %v2069, 4294901760
    %2071 = vmatpush1.msra.mxu0 %v2070
    %2072 = vmatprep.subr.mxu0 0.0
    %v2073 = vand.u32 %v114, 4294901760
    %v2074 = vsub.f32 %v114, %v2073
    %v2075 = vand.u32 %v2074, 4294901760
    %v2076 = vsub.f32 %v2074, %v2075
    %v2077 = vand.u32 %v2076, 4294901760
    %2078 = vmatpush1.msra.mxu0 %v2077
    %2079 = vmatprep.subr.mxu0 0.0
    %v2080 = vand.u32 %v115, 4294901760
    %v2081 = vsub.f32 %v115, %v2080
    %v2082 = vand.u32 %v2081, 4294901760
    %v2083 = vsub.f32 %v2081, %v2082
    %v2084 = vand.u32 %v2083, 4294901760
    %2085 = vmatpush1.msra.mxu0 %v2084
    %2086 = vmatprep.subr.mxu0 0.0
    %v2087 = vand.u32 %v116, 4294901760
    %v2088 = vsub.f32 %v116, %v2087
    %v2089 = vand.u32 %v2088, 4294901760
    %v2090 = vsub.f32 %v2088, %v2089
    %v2091 = vand.u32 %v2090, 4294901760
    %2092 = vmatpush1.msra.mxu0 %v2091
    %2093 = vmatprep.subr.mxu0 0.0
    %v2094 = vand.u32 %v117, 4294901760
    %v2095 = vsub.f32 %v117, %v2094
    %v2096 = vand.u32 %v2095, 4294901760
    %v2097 = vsub.f32 %v2095, %v2096
    %v2098 = vand.u32 %v2097, 4294901760
    %2099 = vmatpush1.msra.mxu0 %v2098
    %2100 = vmatprep.subr.mxu0 0.0
    %v2101 = vand.u32 %v118, 4294901760
    %v2102 = vsub.f32 %v118, %v2101
    %v2103 = vand.u32 %v2102, 4294901760
    %v2104 = vsub.f32 %v2102, %v2103
    %v2105 = vand.u32 %v2104, 4294901760
    %2106 = vmatpush1.msra.mxu0 %v2105
    %2107 = vmatprep.subr.mxu0 0.0
    %v2108 = vand.u32 %v119, 4294901760
    %v2109 = vsub.f32 %v119, %v2108
    %v2110 = vand.u32 %v2109, 4294901760
    %v2111 = vsub.f32 %v2109, %v2110
    %v2112 = vand.u32 %v2111, 4294901760
    %2113 = vmatpush1.msra.mxu0 %v2112
    %2114 = vmatprep.subr.mxu0 0.0
    %v2115 = vand.u32 %v120, 4294901760
    %v2116 = vsub.f32 %v120, %v2115
    %v2117 = vand.u32 %v2116, 4294901760
    %v2118 = vsub.f32 %v2116, %v2117
    %v2119 = vand.u32 %v2118, 4294901760
    %2120 = vmatpush1.msra.mxu0 %v2119
    %2121 = vmatprep.subr.mxu0 0.0
    %v2122 = vand.u32 %v121, 4294901760
    %v2123 = vsub.f32 %v121, %v2122
    %v2124 = vand.u32 %v2123, 4294901760
    %v2125 = vsub.f32 %v2123, %v2124
    %v2126 = vand.u32 %v2125, 4294901760
    %2127 = vmatpush1.msra.mxu0 %v2126
    %2128 = vmatprep.subr.mxu0 0.0
    %v2129 = vand.u32 %v122, 4294901760
    %v2130 = vsub.f32 %v122, %v2129
    %v2131 = vand.u32 %v2130, 4294901760
    %v2132 = vsub.f32 %v2130, %v2131
    %v2133 = vand.u32 %v2132, 4294901760
    %2134 = vmatpush1.msra.mxu0 %v2133
    %2135 = vmatprep.subr.mxu0 0.0
    %v2136 = vand.u32 %v123, 4294901760
    %v2137 = vsub.f32 %v123, %v2136
    %v2138 = vand.u32 %v2137, 4294901760
    %v2139 = vsub.f32 %v2137, %v2138
    %v2140 = vand.u32 %v2139, 4294901760
    %2141 = vmatpush1.msra.mxu0 %v2140
    %2142 = vmatprep.subr.mxu0 0.0
    %v2143 = vand.u32 %v124, 4294901760
    %v2144 = vsub.f32 %v124, %v2143
    %v2145 = vand.u32 %v2144, 4294901760
    %v2146 = vsub.f32 %v2144, %v2145
    %v2147 = vand.u32 %v2146, 4294901760
    %2148 = vmatpush1.msra.mxu0 %v2147
    %2149 = vmatprep.subr.mxu0 0.0
    %v2150 = vand.u32 %v125, 4294901760
    %v2151 = vsub.f32 %v125, %v2150
    %v2152 = vand.u32 %v2151, 4294901760
    %v2153 = vsub.f32 %v2151, %v2152
    %v2154 = vand.u32 %v2153, 4294901760
    %2155 = vmatpush1.msra.mxu0 %v2154
    %2156 = vmatprep.subr.mxu0 0.0
    %v2157 = vand.u32 %v126, 4294901760
    %v2158 = vsub.f32 %v126, %v2157
    %v2159 = vand.u32 %v2158, 4294901760
    %v2160 = vsub.f32 %v2158, %v2159
    %v2161 = vand.u32 %v2160, 4294901760
    %2162 = vmatpush1.msra.mxu0 %v2161
    %2163 = vmatprep.subr.mxu0 0.0
    %v2164 = vand.u32 %v127, 4294901760
    %v2165 = vsub.f32 %v127, %v2164
    %v2166 = vand.u32 %v2165, 4294901760
    %v2167 = vsub.f32 %v2165, %v2166
    %v2168 = vand.u32 %v2167, 4294901760
    %2169 = vmatpush1.msra.mxu0 %v2168
    %2170 = vmatprep.subr.mxu0 0.0
    %v2171 = vand.u32 %v128, 4294901760
    %v2172 = vsub.f32 %v128, %v2171
    %v2173 = vand.u32 %v2172, 4294901760
    %v2174 = vsub.f32 %v2172, %v2173
    %v2175 = vand.u32 %v2174, 4294901760
    %2176 = vmatpush1.msra.mxu0 %v2175
    %2177 = vmatprep.subr.mxu0 0.0
    %v2178 = vand.u32 %v129, 4294901760
    %v2179 = vsub.f32 %v129, %v2178
    %v2180 = vand.u32 %v2179, 4294901760
    %v2181 = vsub.f32 %v2179, %v2180
    %v2182 = vand.u32 %v2181, 4294901760
    %2183 = vmatpush1.msra.mxu0 %v2182
    %2184 = vmatprep.subr.mxu0 0.0
    %v2185 = vand.u32 %v130, 4294901760
    %v2186 = vsub.f32 %v130, %v2185
    %v2187 = vand.u32 %v2186, 4294901760
    %v2188 = vsub.f32 %v2186, %v2187
    %v2189 = vand.u32 %v2188, 4294901760
    %2190 = vmatpush1.msra.mxu0 %v2189
    %2191 = vmatprep.subr.mxu0 0.0
    %v2192 = vand.u32 %v131, 4294901760
    %v2193 = vsub.f32 %v131, %v2192
    %v2194 = vand.u32 %v2193, 4294901760
    %v2195 = vsub.f32 %v2193, %v2194
    %v2196 = vand.u32 %v2195, 4294901760
    %2197 = vmatpush1.msra.mxu0 %v2196
    %2198 = vmatprep.subr.mxu0 0.0
    %v2199 = vand.u32 %v132, 4294901760
    %v2200 = vsub.f32 %v132, %v2199
    %v2201 = vand.u32 %v2200, 4294901760
    %v2202 = vsub.f32 %v2200, %v2201
    %v2203 = vand.u32 %v2202, 4294901760
    %2204 = vmatpush1.msra.mxu0 %v2203
    %v2205 = vand.u32 %v35, 4294901760
    %2206 = vmatprep.mubr.f32.mxu0 %v2205
    %v2207 = vand.u32 %v34, 4294901760
    %2208 = vmatmul.mubr.f32.gmra.mrb[0].mxu0 %v2207
    %v2209 = vpop.f32.mrb[0].mxu0
    %v2210 = vadd.f32 %v1978, %v2209
    %v2211 = vpop.f32.mrb[0].mxu0
    %2212 = vdwg.mxu0
    %2213 = vmatprep.subr.mxu0 0.0
    %v2214 = vand.u32 %v101, 4294901760
    %v2215 = vsub.f32 %v101, %v2214
    %2216 = vmatpush1.msra.mxu0 %v2215
    %2217 = vmatprep.subr.mxu0 0.0
    %v2218 = vand.u32 %v102, 4294901760
    %v2219 = vsub.f32 %v102, %v2218
    %2220 = vmatpush1.msra.mxu0 %v2219
    %2221 = vmatprep.subr.mxu0 0.0
    %v2222 = vand.u32 %v103, 4294901760
    %v2223 = vsub.f32 %v103, %v2222
    %2224 = vmatpush1.msra.mxu0 %v2223
    %2225 = vmatprep.subr.mxu0 0.0
    %v2226 = vand.u32 %v104, 4294901760
    %v2227 = vsub.f32 %v104, %v2226
    %2228 = vmatpush1.msra.mxu0 %v2227
    %2229 = vmatprep.subr.mxu0 0.0
    %v2230 = vand.u32 %v105, 4294901760
    %v2231 = vsub.f32 %v105, %v2230
    %2232 = vmatpush1.msra.mxu0 %v2231
    %2233 = vmatprep.subr.mxu0 0.0
    %v2234 = vand.u32 %v106, 4294901760
    %v2235 = vsub.f32 %v106, %v2234
    %2236 = vmatpush1.msra.mxu0 %v2235
    %2237 = vmatprep.subr.mxu0 0.0
    %v2238 = vand.u32 %v107, 4294901760
    %v2239 = vsub.f32 %v107, %v2238
    %2240 = vmatpush1.msra.mxu0 %v2239
    %2241 = vmatprep.subr.mxu0 0.0
    %v2242 = vand.u32 %v108, 4294901760
    %v2243 = vsub.f32 %v108, %v2242
    %2244 = vmatpush1.msra.mxu0 %v2243
    %2245 = vmatprep.subr.mxu0 0.0
    %v2246 = vand.u32 %v109, 4294901760
    %v2247 = vsub.f32 %v109, %v2246
    %2248 = vmatpush1.msra.mxu0 %v2247
    %2249 = vmatprep.subr.mxu0 0.0
    %v2250 = vand.u32 %v110, 4294901760
    %v2251 = vsub.f32 %v110, %v2250
    %2252 = vmatpush1.msra.mxu0 %v2251
    %2253 = vmatprep.subr.mxu0 0.0
    %v2254 = vand.u32 %v111, 4294901760
    %v2255 = vsub.f32 %v111, %v2254
    %2256 = vmatpush1.msra.mxu0 %v2255
    %2257 = vmatprep.subr.mxu0 0.0
    %v2258 = vand.u32 %v112, 4294901760
    %v2259 = vsub.f32 %v112, %v2258
    %2260 = vmatpush1.msra.mxu0 %v2259
    %2261 = vmatprep.subr.mxu0 0.0
    %v2262 = vand.u32 %v113, 4294901760
    %v2263 = vsub.f32 %v113, %v2262
    %2264 = vmatpush1.msra.mxu0 %v2263
    %2265 = vmatprep.subr.mxu0 0.0
    %v2266 = vand.u32 %v114, 4294901760
    %v2267 = vsub.f32 %v114, %v2266
    %2268 = vmatpush1.msra.mxu0 %v2267
    %2269 = vmatprep.subr.mxu0 0.0
    %v2270 = vand.u32 %v115, 4294901760
    %v2271 = vsub.f32 %v115, %v2270
    %2272 = vmatpush1.msra.mxu0 %v2271
    %2273 = vmatprep.subr.mxu0 0.0
    %v2274 = vand.u32 %v116, 4294901760
    %v2275 = vsub.f32 %v116, %v2274
    %2276 = vmatpush1.msra.mxu0 %v2275
    %2277 = vmatprep.subr.mxu0 0.0
    %v2278 = vand.u32 %v117, 4294901760
    %v2279 = vsub.f32 %v117, %v2278
    %2280 = vmatpush1.msra.mxu0 %v2279
    %2281 = vmatprep.subr.mxu0 0.0
    %v2282 = vand.u32 %v118, 4294901760
    %v2283 = vsub.f32 %v118, %v2282
    %2284 = vmatpush1.msra.mxu0 %v2283
    %2285 = vmatprep.subr.mxu0 0.0
    %v2286 = vand.u32 %v119, 4294901760
    %v2287 = vsub.f32 %v119, %v2286
    %2288 = vmatpush1.msra.mxu0 %v2287
    %2289 = vmatprep.subr.mxu0 0.0
    %v2290 = vand.u32 %v120, 4294901760
    %v2291 = vsub.f32 %v120, %v2290
    %2292 = vmatpush1.msra.mxu0 %v2291
    %2293 = vmatprep.subr.mxu0 0.0
    %v2294 = vand.u32 %v121, 4294901760
    %v2295 = vsub.f32 %v121, %v2294
    %2296 = vmatpush1.msra.mxu0 %v2295
    %2297 = vmatprep.subr.mxu0 0.0
    %v2298 = vand.u32 %v122, 4294901760
    %v2299 = vsub.f32 %v122, %v2298
    %2300 = vmatpush1.msra.mxu0 %v2299
    %2301 = vmatprep.subr.mxu0 0.0
    %v2302 = vand.u32 %v123, 4294901760
    %v2303 = vsub.f32 %v123, %v2302
    %2304 = vmatpush1.msra.mxu0 %v2303
    %2305 = vmatprep.subr.mxu0 0.0
    %v2306 = vand.u32 %v124, 4294901760
    %v2307 = vsub.f32 %v124, %v2306
    %2308 = vmatpush1.msra.mxu0 %v2307
    %2309 = vmatprep.subr.mxu0 0.0
    %v2310 = vand.u32 %v125, 4294901760
    %v2311 = vsub.f32 %v125, %v2310
    %2312 = vmatpush1.msra.mxu0 %v2311
    %2313 = vmatprep.subr.mxu0 0.0
    %v2314 = vand.u32 %v126, 4294901760
    %v2315 = vsub.f32 %v126, %v2314
    %2316 = vmatpush1.msra.mxu0 %v2315
    %2317 = vmatprep.subr.mxu0 0.0
    %v2318 = vand.u32 %v127, 4294901760
    %v2319 = vsub.f32 %v127, %v2318
    %2320 = vmatpush1.msra.mxu0 %v2319
    %2321 = vmatprep.subr.mxu0 0.0
    %v2322 = vand.u32 %v128, 4294901760
    %v2323 = vsub.f32 %v128, %v2322
    %2324 = vmatpush1.msra.mxu0 %v2323
    %2325 = vmatprep.subr.mxu0 0.0
    %v2326 = vand.u32 %v129, 4294901760
    %v2327 = vsub.f32 %v129, %v2326
    %2328 = vmatpush1.msra.mxu0 %v2327
    %2329 = vmatprep.subr.mxu0 0.0
    %v2330 = vand.u32 %v130, 4294901760
    %v2331 = vsub.f32 %v130, %v2330
    %2332 = vmatpush1.msra.mxu0 %v2331
    %2333 = vmatprep.subr.mxu0 0.0
    %v2334 = vand.u32 %v131, 4294901760
    %v2335 = vsub.f32 %v131, %v2334
    %2336 = vmatpush1.msra.mxu0 %v2335
    %2337 = vmatprep.subr.mxu0 0.0
    %v2338 = vand.u32 %v132, 4294901760
    %v2339 = vsub.f32 %v132, %v2338
    %2340 = vmatpush1.msra.mxu0 %v2339
    %v2341 = vand.u32 %v35, 4294901760
    %v2342 = vsub.f32 %v35, %v2341
    %2343 = vmatprep.mubr.f32.mxu0 %v2342
    %v2344 = vand.u32 %v34, 4294901760
    %v2345 = vsub.f32 %v34, %v2344
    %2346 = vmatmul.mubr.f32.gmra.mrb[0].mxu0 %v2345
    %v2347 = vpop.f32.mrb[0].mxu0
    %v2348 = vadd.f32 %v2210, %v2347
    %v2349 = vpop.f32.mrb[0].mxu0
    %2350 = vdwg.mxu0
    %2351 = vmatprep.subr.mxu0 0.0
    %v2352 = vand.u32 %v101, 4294901760
    %2353 = vmatpush1.msra.mxu0 %v2352
    %2354 = vmatprep.subr.mxu0 0.0
    %v2355 = vand.u32 %v102, 4294901760
    %2356 = vmatpush1.msra.mxu0 %v2355
    %2357 = vmatprep.subr.mxu0 0.0
    %v2358 = vand.u32 %v103, 4294901760
    %2359 = vmatpush1.msra.mxu0 %v2358
    %2360 = vmatprep.subr.mxu0 0.0
    %v2361 = vand.u32 %v104, 4294901760
    %2362 = vmatpush1.msra.mxu0 %v2361
    %2363 = vmatprep.subr.mxu0 0.0
    %v2364 = vand.u32 %v105, 4294901760
    %2365 = vmatpush1.msra.mxu0 %v2364
    %2366 = vmatprep.subr.mxu0 0.0
    %v2367 = vand.u32 %v106, 4294901760
    %2368 = vmatpush1.msra.mxu0 %v2367
    %2369 = vmatprep.subr.mxu0 0.0
    %v2370 = vand.u32 %v107, 4294901760
    %2371 = vmatpush1.msra.mxu0 %v2370
    %2372 = vmatprep.subr.mxu0 0.0
    %v2373 = vand.u32 %v108, 4294901760
    %2374 = vmatpush1.msra.mxu0 %v2373
    %2375 = vmatprep.subr.mxu0 0.0
    %v2376 = vand.u32 %v109, 4294901760
    %2377 = vmatpush1.msra.mxu0 %v2376
    %2378 = vmatprep.subr.mxu0 0.0
    %v2379 = vand.u32 %v110, 4294901760
    %2380 = vmatpush1.msra.mxu0 %v2379
    %2381 = vmatprep.subr.mxu0 0.0
    %v2382 = vand.u32 %v111, 4294901760
    %2383 = vmatpush1.msra.mxu0 %v2382
    %2384 = vmatprep.subr.mxu0 0.0
    %v2385 = vand.u32 %v112, 4294901760
    %2386 = vmatpush1.msra.mxu0 %v2385
    %2387 = vmatprep.subr.mxu0 0.0
    %v2388 = vand.u32 %v113, 4294901760
    %2389 = vmatpush1.msra.mxu0 %v2388
    %2390 = vmatprep.subr.mxu0 0.0
    %v2391 = vand.u32 %v114, 4294901760
    %2392 = vmatpush1.msra.mxu0 %v2391
    %2393 = vmatprep.subr.mxu0 0.0
    %v2394 = vand.u32 %v115, 4294901760
    %2395 = vmatpush1.msra.mxu0 %v2394
    %2396 = vmatprep.subr.mxu0 0.0
    %v2397 = vand.u32 %v116, 4294901760
    %2398 = vmatpush1.msra.mxu0 %v2397
    %2399 = vmatprep.subr.mxu0 0.0
    %v2400 = vand.u32 %v117, 4294901760
    %2401 = vmatpush1.msra.mxu0 %v2400
    %2402 = vmatprep.subr.mxu0 0.0
    %v2403 = vand.u32 %v118, 4294901760
    %2404 = vmatpush1.msra.mxu0 %v2403
    %2405 = vmatprep.subr.mxu0 0.0
    %v2406 = vand.u32 %v119, 4294901760
    %2407 = vmatpush1.msra.mxu0 %v2406
    %2408 = vmatprep.subr.mxu0 0.0
    %v2409 = vand.u32 %v120, 4294901760
    %2410 = vmatpush1.msra.mxu0 %v2409
    %2411 = vmatprep.subr.mxu0 0.0
    %v2412 = vand.u32 %v121, 4294901760
    %2413 = vmatpush1.msra.mxu0 %v2412
    %2414 = vmatprep.subr.mxu0 0.0
    %v2415 = vand.u32 %v122, 4294901760
    %2416 = vmatpush1.msra.mxu0 %v2415
    %2417 = vmatprep.subr.mxu0 0.0
    %v2418 = vand.u32 %v123, 4294901760
    %2419 = vmatpush1.msra.mxu0 %v2418
    %2420 = vmatprep.subr.mxu0 0.0
    %v2421 = vand.u32 %v124, 4294901760
    %2422 = vmatpush1.msra.mxu0 %v2421
    %2423 = vmatprep.subr.mxu0 0.0
    %v2424 = vand.u32 %v125, 4294901760
    %2425 = vmatpush1.msra.mxu0 %v2424
    %2426 = vmatprep.subr.mxu0 0.0
    %v2427 = vand.u32 %v126, 4294901760
    %2428 = vmatpush1.msra.mxu0 %v2427
    %2429 = vmatprep.subr.mxu0 0.0
    %v2430 = vand.u32 %v127, 4294901760
    %2431 = vmatpush1.msra.mxu0 %v2430
    %2432 = vmatprep.subr.mxu0 0.0
    %v2433 = vand.u32 %v128, 4294901760
    %2434 = vmatpush1.msra.mxu0 %v2433
    %2435 = vmatprep.subr.mxu0 0.0
    %v2436 = vand.u32 %v129, 4294901760
    %2437 = vmatpush1.msra.mxu0 %v2436
    %2438 = vmatprep.subr.mxu0 0.0
    %v2439 = vand.u32 %v130, 4294901760
    %2440 = vmatpush1.msra.mxu0 %v2439
    %2441 = vmatprep.subr.mxu0 0.0
    %v2442 = vand.u32 %v131, 4294901760
    %2443 = vmatpush1.msra.mxu0 %v2442
    %2444 = vmatprep.subr.mxu0 0.0
    %v2445 = vand.u32 %v132, 4294901760
    %2446 = vmatpush1.msra.mxu0 %v2445
    %v2447 = vand.u32 %v35, 4294901760
    %v2448 = vsub.f32 %v35, %v2447
    %v2449 = vand.u32 %v2448, 4294901760
    %2450 = vmatprep.mubr.f32.mxu0 %v2449
    %v2451 = vand.u32 %v34, 4294901760
    %v2452 = vsub.f32 %v34, %v2451
    %v2453 = vand.u32 %v2452, 4294901760
    %2454 = vmatmul.mubr.f32.gmra.mrb[0].mxu0 %v2453
    %v2455 = vpop.f32.mrb[0].mxu0
    %v2456 = vadd.f32 %v2348, %v2455
    %v2457 = vpop.f32.mrb[0].mxu0
    %2458 = vdwg.mxu0
    %2459 = vmatprep.subr.mxu0 0.0
    %v2460 = vand.u32 %v101, 4294901760
    %v2461 = vsub.f32 %v101, %v2460
    %v2462 = vand.u32 %v2461, 4294901760
    %2463 = vmatpush1.msra.mxu0 %v2462
    %2464 = vmatprep.subr.mxu0 0.0
    %v2465 = vand.u32 %v102, 4294901760
    %v2466 = vsub.f32 %v102, %v2465
    %v2467 = vand.u32 %v2466, 4294901760
    %2468 = vmatpush1.msra.mxu0 %v2467
    %2469 = vmatprep.subr.mxu0 0.0
    %v2470 = vand.u32 %v103, 4294901760
    %v2471 = vsub.f32 %v103, %v2470
    %v2472 = vand.u32 %v2471, 4294901760
    %2473 = vmatpush1.msra.mxu0 %v2472
    %2474 = vmatprep.subr.mxu0 0.0
    %v2475 = vand.u32 %v104, 4294901760
    %v2476 = vsub.f32 %v104, %v2475
    %v2477 = vand.u32 %v2476, 4294901760
    %2478 = vmatpush1.msra.mxu0 %v2477
    %2479 = vmatprep.subr.mxu0 0.0
    %v2480 = vand.u32 %v105, 4294901760
    %v2481 = vsub.f32 %v105, %v2480
    %v2482 = vand.u32 %v2481, 4294901760
    %2483 = vmatpush1.msra.mxu0 %v2482
    %2484 = vmatprep.subr.mxu0 0.0
    %v2485 = vand.u32 %v106, 4294901760
    %v2486 = vsub.f32 %v106, %v2485
    %v2487 = vand.u32 %v2486, 4294901760
    %2488 = vmatpush1.msra.mxu0 %v2487
    %2489 = vmatprep.subr.mxu0 0.0
    %v2490 = vand.u32 %v107, 4294901760
    %v2491 = vsub.f32 %v107, %v2490
    %v2492 = vand.u32 %v2491, 4294901760
    %2493 = vmatpush1.msra.mxu0 %v2492
    %2494 = vmatprep.subr.mxu0 0.0
    %v2495 = vand.u32 %v108, 4294901760
    %v2496 = vsub.f32 %v108, %v2495
    %v2497 = vand.u32 %v2496, 4294901760
    %2498 = vmatpush1.msra.mxu0 %v2497
    %2499 = vmatprep.subr.mxu0 0.0
    %v2500 = vand.u32 %v109, 4294901760
    %v2501 = vsub.f32 %v109, %v2500
    %v2502 = vand.u32 %v2501, 4294901760
    %2503 = vmatpush1.msra.mxu0 %v2502
    %2504 = vmatprep.subr.mxu0 0.0
    %v2505 = vand.u32 %v110, 4294901760
    %v2506 = vsub.f32 %v110, %v2505
    %v2507 = vand.u32 %v2506, 4294901760
    %2508 = vmatpush1.msra.mxu0 %v2507
    %2509 = vmatprep.subr.mxu0 0.0
    %v2510 = vand.u32 %v111, 4294901760
    %v2511 = vsub.f32 %v111, %v2510
    %v2512 = vand.u32 %v2511, 4294901760
    %2513 = vmatpush1.msra.mxu0 %v2512
    %2514 = vmatprep.subr.mxu0 0.0
    %v2515 = vand.u32 %v112, 4294901760
    %v2516 = vsub.f32 %v112, %v2515
    %v2517 = vand.u32 %v2516, 4294901760
    %2518 = vmatpush1.msra.mxu0 %v2517
    %2519 = vmatprep.subr.mxu0 0.0
    %v2520 = vand.u32 %v113, 4294901760
    %v2521 = vsub.f32 %v113, %v2520
    %v2522 = vand.u32 %v2521, 4294901760
    %2523 = vmatpush1.msra.mxu0 %v2522
    %2524 = vmatprep.subr.mxu0 0.0
    %v2525 = vand.u32 %v114, 4294901760
    %v2526 = vsub.f32 %v114, %v2525
    %v2527 = vand.u32 %v2526, 4294901760
    %2528 = vmatpush1.msra.mxu0 %v2527
    %2529 = vmatprep.subr.mxu0 0.0
    %v2530 = vand.u32 %v115, 4294901760
    %v2531 = vsub.f32 %v115, %v2530
    %v2532 = vand.u32 %v2531, 4294901760
    %2533 = vmatpush1.msra.mxu0 %v2532
    %2534 = vmatprep.subr.mxu0 0.0
    %v2535 = vand.u32 %v116, 4294901760
    %v2536 = vsub.f32 %v116, %v2535
    %v2537 = vand.u32 %v2536, 4294901760
    %2538 = vmatpush1.msra.mxu0 %v2537
    %2539 = vmatprep.subr.mxu0 0.0
    %v2540 = vand.u32 %v117, 4294901760
    %v2541 = vsub.f32 %v117, %v2540
    %v2542 = vand.u32 %v2541, 4294901760
    %2543 = vmatpush1.msra.mxu0 %v2542
    %2544 = vmatprep.subr.mxu0 0.0
    %v2545 = vand.u32 %v118, 4294901760
    %v2546 = vsub.f32 %v118, %v2545
    %v2547 = vand.u32 %v2546, 4294901760
    %2548 = vmatpush1.msra.mxu0 %v2547
    %2549 = vmatprep.subr.mxu0 0.0
    %v2550 = vand.u32 %v119, 4294901760
    %v2551 = vsub.f32 %v119, %v2550
    %v2552 = vand.u32 %v2551, 4294901760
    %2553 = vmatpush1.msra.mxu0 %v2552
    %2554 = vmatprep.subr.mxu0 0.0
    %v2555 = vand.u32 %v120, 4294901760
    %v2556 = vsub.f32 %v120, %v2555
    %v2557 = vand.u32 %v2556, 4294901760
    %2558 = vmatpush1.msra.mxu0 %v2557
    %2559 = vmatprep.subr.mxu0 0.0
    %v2560 = vand.u32 %v121, 4294901760
    %v2561 = vsub.f32 %v121, %v2560
    %v2562 = vand.u32 %v2561, 4294901760
    %2563 = vmatpush1.msra.mxu0 %v2562
    %2564 = vmatprep.subr.mxu0 0.0
    %v2565 = vand.u32 %v122, 4294901760
    %v2566 = vsub.f32 %v122, %v2565
    %v2567 = vand.u32 %v2566, 4294901760
    %2568 = vmatpush1.msra.mxu0 %v2567
    %2569 = vmatprep.subr.mxu0 0.0
    %v2570 = vand.u32 %v123, 4294901760
    %v2571 = vsub.f32 %v123, %v2570
    %v2572 = vand.u32 %v2571, 4294901760
    %2573 = vmatpush1.msra.mxu0 %v2572
    %2574 = vmatprep.subr.mxu0 0.0
    %v2575 = vand.u32 %v124, 4294901760
    %v2576 = vsub.f32 %v124, %v2575
    %v2577 = vand.u32 %v2576, 4294901760
    %2578 = vmatpush1.msra.mxu0 %v2577
    %2579 = vmatprep.subr.mxu0 0.0
    %v2580 = vand.u32 %v125, 4294901760
    %v2581 = vsub.f32 %v125, %v2580
    %v2582 = vand.u32 %v2581, 4294901760
    %2583 = vmatpush1.msra.mxu0 %v2582
    %2584 = vmatprep.subr.mxu0 0.0
    %v2585 = vand.u32 %v126, 4294901760
    %v2586 = vsub.f32 %v126, %v2585
    %v2587 = vand.u32 %v2586, 4294901760
    %2588 = vmatpush1.msra.mxu0 %v2587
    %2589 = vmatprep.subr.mxu0 0.0
    %v2590 = vand.u32 %v127, 4294901760
    %v2591 = vsub.f32 %v127, %v2590
    %v2592 = vand.u32 %v2591, 4294901760
    %2593 = vmatpush1.msra.mxu0 %v2592
    %2594 = vmatprep.subr.mxu0 0.0
    %v2595 = vand.u32 %v128, 4294901760
    %v2596 = vsub.f32 %v128, %v2595
    %v2597 = vand.u32 %v2596, 4294901760
    %2598 = vmatpush1.msra.mxu0 %v2597
    %2599 = vmatprep.subr.mxu0 0.0
    %v2600 = vand.u32 %v129, 4294901760
    %v2601 = vsub.f32 %v129, %v2600
    %v2602 = vand.u32 %v2601, 4294901760
    %2603 = vmatpush1.msra.mxu0 %v2602
    %2604 = vmatprep.subr.mxu0 0.0
    %v2605 = vand.u32 %v130, 4294901760
    %v2606 = vsub.f32 %v130, %v2605
    %v2607 = vand.u32 %v2606, 4294901760
    %2608 = vmatpush1.msra.mxu0 %v2607
    %2609 = vmatprep.subr.mxu0 0.0
    %v2610 = vand.u32 %v131, 4294901760
    %v2611 = vsub.f32 %v131, %v2610
    %v2612 = vand.u32 %v2611, 4294901760
    %2613 = vmatpush1.msra.mxu0 %v2612
    %2614 = vmatprep.subr.mxu0 0.0
    %v2615 = vand.u32 %v132, 4294901760
    %v2616 = vsub.f32 %v132, %v2615
    %v2617 = vand.u32 %v2616, 4294901760
    %2618 = vmatpush1.msra.mxu0 %v2617
    %v2619 = vand.u32 %v35, 4294901760
    %2620 = vmatprep.mubr.f32.mxu0 %v2619
    %v2621 = vand.u32 %v34, 4294901760
    %2622 = vmatmul.mubr.f32.gmra.mrb[0].mxu0 %v2621
    %v2623 = vpop.f32.mrb[0].mxu0
    %v2624 = vadd.f32 %v2456, %v2623
    %v2625 = vpop.f32.mrb[0].mxu0
    %2626 = vdwg.mxu0
    %2627 = vmatprep.subr.mxu0 0.0
    %v2628 = vand.u32 %v101, 4294901760
    %2629 = vmatpush1.msra.mxu0 %v2628
    %2630 = vmatprep.subr.mxu0 0.0
    %v2631 = vand.u32 %v102, 4294901760
    %2632 = vmatpush1.msra.mxu0 %v2631
    %2633 = vmatprep.subr.mxu0 0.0
    %v2634 = vand.u32 %v103, 4294901760
    %2635 = vmatpush1.msra.mxu0 %v2634
    %2636 = vmatprep.subr.mxu0 0.0
    %v2637 = vand.u32 %v104, 4294901760
    %2638 = vmatpush1.msra.mxu0 %v2637
    %2639 = vmatprep.subr.mxu0 0.0
    %v2640 = vand.u32 %v105, 4294901760
    %2641 = vmatpush1.msra.mxu0 %v2640
    %2642 = vmatprep.subr.mxu0 0.0
    %v2643 = vand.u32 %v106, 4294901760
    %2644 = vmatpush1.msra.mxu0 %v2643
    %2645 = vmatprep.subr.mxu0 0.0
    %v2646 = vand.u32 %v107, 4294901760
    %2647 = vmatpush1.msra.mxu0 %v2646
    %2648 = vmatprep.subr.mxu0 0.0
    %v2649 = vand.u32 %v108, 4294901760
    %2650 = vmatpush1.msra.mxu0 %v2649
    %2651 = vmatprep.subr.mxu0 0.0
    %v2652 = vand.u32 %v109, 4294901760
    %2653 = vmatpush1.msra.mxu0 %v2652
    %2654 = vmatprep.subr.mxu0 0.0
    %v2655 = vand.u32 %v110, 4294901760
    %2656 = vmatpush1.msra.mxu0 %v2655
    %2657 = vmatprep.subr.mxu0 0.0
    %v2658 = vand.u32 %v111, 4294901760
    %2659 = vmatpush1.msra.mxu0 %v2658
    %2660 = vmatprep.subr.mxu0 0.0
    %v2661 = vand.u32 %v112, 4294901760
    %2662 = vmatpush1.msra.mxu0 %v2661
    %2663 = vmatprep.subr.mxu0 0.0
    %v2664 = vand.u32 %v113, 4294901760
    %2665 = vmatpush1.msra.mxu0 %v2664
    %2666 = vmatprep.subr.mxu0 0.0
    %v2667 = vand.u32 %v114, 4294901760
    %2668 = vmatpush1.msra.mxu0 %v2667
    %2669 = vmatprep.subr.mxu0 0.0
    %v2670 = vand.u32 %v115, 4294901760
    %2671 = vmatpush1.msra.mxu0 %v2670
    %2672 = vmatprep.subr.mxu0 0.0
    %v2673 = vand.u32 %v116, 4294901760
    %2674 = vmatpush1.msra.mxu0 %v2673
    %2675 = vmatprep.subr.mxu0 0.0
    %v2676 = vand.u32 %v117, 4294901760
    %2677 = vmatpush1.msra.mxu0 %v2676
    %2678 = vmatprep.subr.mxu0 0.0
    %v2679 = vand.u32 %v118, 4294901760
    %2680 = vmatpush1.msra.mxu0 %v2679
    %2681 = vmatprep.subr.mxu0 0.0
    %v2682 = vand.u32 %v119, 4294901760
    %2683 = vmatpush1.msra.mxu0 %v2682
    %2684 = vmatprep.subr.mxu0 0.0
    %v2685 = vand.u32 %v120, 4294901760
    %2686 = vmatpush1.msra.mxu0 %v2685
    %2687 = vmatprep.subr.mxu0 0.0
    %v2688 = vand.u32 %v121, 4294901760
    %2689 = vmatpush1.msra.mxu0 %v2688
    %2690 = vmatprep.subr.mxu0 0.0
    %v2691 = vand.u32 %v122, 4294901760
    %2692 = vmatpush1.msra.mxu0 %v2691
    %2693 = vmatprep.subr.mxu0 0.0
    %v2694 = vand.u32 %v123, 4294901760
    %2695 = vmatpush1.msra.mxu0 %v2694
    %2696 = vmatprep.subr.mxu0 0.0
    %v2697 = vand.u32 %v124, 4294901760
    %2698 = vmatpush1.msra.mxu0 %v2697
    %2699 = vmatprep.subr.mxu0 0.0
    %v2700 = vand.u32 %v125, 4294901760
    %2701 = vmatpush1.msra.mxu0 %v2700
    %2702 = vmatprep.subr.mxu0 0.0
    %v2703 = vand.u32 %v126, 4294901760
    %2704 = vmatpush1.msra.mxu0 %v2703
    %2705 = vmatprep.subr.mxu0 0.0
    %v2706 = vand.u32 %v127, 4294901760
    %2707 = vmatpush1.msra.mxu0 %v2706
    %2708 = vmatprep.subr.mxu0 0.0
    %v2709 = vand.u32 %v128, 4294901760
    %2710 = vmatpush1.msra.mxu0 %v2709
    %2711 = vmatprep.subr.mxu0 0.0
    %v2712 = vand.u32 %v129, 4294901760
    %2713 = vmatpush1.msra.mxu0 %v2712
    %2714 = vmatprep.subr.mxu0 0.0
    %v2715 = vand.u32 %v130, 4294901760
    %2716 = vmatpush1.msra.mxu0 %v2715
    %2717 = vmatprep.subr.mxu0 0.0
    %v2718 = vand.u32 %v131, 4294901760
    %2719 = vmatpush1.msra.mxu0 %v2718
    %2720 = vmatprep.subr.mxu0 0.0
    %v2721 = vand.u32 %v132, 4294901760
    %2722 = vmatpush1.msra.mxu0 %v2721
    %v2723 = vand.u32 %v35, 4294901760
    %2724 = vmatprep.mubr.f32.mxu0 %v2723
    %v2725 = vand.u32 %v34, 4294901760
    %2726 = vmatmul.mubr.f32.gmra.mrb[0].mxu0 %v2725
    %v2727 = vpop.f32.mrb[0].mxu0
    %v2728 = vadd.f32 %v2624, %v2727
    %v2729 = vpop.f32.mrb[0].mxu0
    %2730 = vdwg.mxu0
    %2731 = vmatprep.subr.mxu0 0.0
    %v2732 = vand.u32 %v133, 4294901760
    %2733 = vmatpush1.msra.mxu0 %v2732
    %2734 = vmatprep.subr.mxu0 0.0
    %v2735 = vand.u32 %v134, 4294901760
    %2736 = vmatpush1.msra.mxu0 %v2735
    %2737 = vmatprep.subr.mxu0 0.0
    %2738 = vmatpush1.msra.mxu0 0.0
    %2739 = vmatprep.subr.mxu0 0.0
    %2740 = vmatpush1.msra.mxu0 0.0
    %2741 = vmatprep.subr.mxu0 0.0
    %2742 = vmatpush1.msra.mxu0 0.0
    %2743 = vmatprep.subr.mxu0 0.0
    %2744 = vmatpush1.msra.mxu0 0.0
    %2745 = vmatprep.subr.mxu0 0.0
    %2746 = vmatpush1.msra.mxu0 0.0
    %2747 = vmatprep.subr.mxu0 0.0
    %2748 = vmatpush1.msra.mxu0 0.0
    %2749 = vmatprep.subr.mxu0 0.0
    %2750 = vmatpush1.msra.mxu0 0.0
    %2751 = vmatprep.subr.mxu0 0.0
    %2752 = vmatpush1.msra.mxu0 0.0
    %2753 = vmatprep.subr.mxu0 0.0
    %2754 = vmatpush1.msra.mxu0 0.0
    %2755 = vmatprep.subr.mxu0 0.0
    %2756 = vmatpush1.msra.mxu0 0.0
    %2757 = vmatprep.subr.mxu0 0.0
    %2758 = vmatpush1.msra.mxu0 0.0
    %2759 = vmatprep.subr.mxu0 0.0
    %2760 = vmatpush1.msra.mxu0 0.0
    %2761 = vmatprep.subr.mxu0 0.0
    %2762 = vmatpush1.msra.mxu0 0.0
    %2763 = vmatprep.subr.mxu0 0.0
    %2764 = vmatpush1.msra.mxu0 0.0
    %2765 = vmatprep.subr.mxu0 0.0
    %2766 = vmatpush1.msra.mxu0 0.0
    %2767 = vmatprep.subr.mxu0 0.0
    %2768 = vmatpush1.msra.mxu0 0.0
    %2769 = vmatprep.subr.mxu0 0.0
    %2770 = vmatpush1.msra.mxu0 0.0
    %2771 = vmatprep.subr.mxu0 0.0
    %2772 = vmatpush1.msra.mxu0 0.0
    %2773 = vmatprep.subr.mxu0 0.0
    %2774 = vmatpush1.msra.mxu0 0.0
    %2775 = vmatprep.subr.mxu0 0.0
    %2776 = vmatpush1.msra.mxu0 0.0
    %2777 = vmatprep.subr.mxu0 0.0
    %2778 = vmatpush1.msra.mxu0 0.0
    %2779 = vmatprep.subr.mxu0 0.0
    %2780 = vmatpush1.msra.mxu0 0.0
    %2781 = vmatprep.subr.mxu0 0.0
    %2782 = vmatpush1.msra.mxu0 0.0
    %2783 = vmatprep.subr.mxu0 0.0
    %2784 = vmatpush1.msra.mxu0 0.0
    %2785 = vmatprep.subr.mxu0 0.0
    %2786 = vmatpush1.msra.mxu0 0.0
    %2787 = vmatprep.subr.mxu0 0.0
    %2788 = vmatpush1.msra.mxu0 0.0
    %2789 = vmatprep.subr.mxu0 0.0
    %2790 = vmatpush1.msra.mxu0 0.0
    %2791 = vmatprep.subr.mxu0 0.0
    %2792 = vmatpush1.msra.mxu0 0.0
    %2793 = vmatprep.subr.mxu0 0.0
    %2794 = vmatpush1.msra.mxu0 0.0
    %2795 = vmatprep.subr.mxu0 0.0
    %2796 = vmatpush1.msra.mxu0 0.0
    %2797 = vmatprep.mubr.f32.mxu0 0.0
    %v2798 = vand.u32 %v143, 4294901760
    %v2799 = vsub.f32 %v143, %v2798
    %v2800 = vand.u32 %v2799, 4294901760
    %v2801 = vsub.f32 %v2799, %v2800
    %v2802 = vand.u32 %v2801, 4294901760
    %2803 = vmatmul.mubr.f32.gmra.mrb[0].mxu0 %v2802
    %v2804 = vpop.f32.mrb[0].mxu0
    %v2805 = vadd.f32 %v2728, %v2804
    %v2806 = vpop.f32.mrb[0].mxu0
    %2807 = vdwg.mxu0
    %2808 = vmatprep.subr.mxu0 0.0
    %v2809 = vand.u32 %v133, 4294901760
    %v2810 = vsub.f32 %v133, %v2809
    %v2811 = vand.u32 %v2810, 4294901760
    %v2812 = vsub.f32 %v2810, %v2811
    %v2813 = vand.u32 %v2812, 4294901760
    %2814 = vmatpush1.msra.mxu0 %v2813
    %2815 = vmatprep.subr.mxu0 0.0
    %v2816 = vand.u32 %v134, 4294901760
    %v2817 = vsub.f32 %v134, %v2816
    %v2818 = vand.u32 %v2817, 4294901760
    %v2819 = vsub.f32 %v2817, %v2818
    %v2820 = vand.u32 %v2819, 4294901760
    %2821 = vmatpush1.msra.mxu0 %v2820
    %2822 = vmatprep.subr.mxu0 0.0
    %2823 = vmatpush1.msra.mxu0 0.0
    %2824 = vmatprep.subr.mxu0 0.0
    %2825 = vmatpush1.msra.mxu0 0.0
    %2826 = vmatprep.subr.mxu0 0.0
    %2827 = vmatpush1.msra.mxu0 0.0
    %2828 = vmatprep.subr.mxu0 0.0
    %2829 = vmatpush1.msra.mxu0 0.0
    %2830 = vmatprep.subr.mxu0 0.0
    %2831 = vmatpush1.msra.mxu0 0.0
    %2832 = vmatprep.subr.mxu0 0.0
    %2833 = vmatpush1.msra.mxu0 0.0
    %2834 = vmatprep.subr.mxu0 0.0
    %2835 = vmatpush1.msra.mxu0 0.0
    %2836 = vmatprep.subr.mxu0 0.0
    %2837 = vmatpush1.msra.mxu0 0.0
    %2838 = vmatprep.subr.mxu0 0.0
    %2839 = vmatpush1.msra.mxu0 0.0
    %2840 = vmatprep.subr.mxu0 0.0
    %2841 = vmatpush1.msra.mxu0 0.0
    %2842 = vmatprep.subr.mxu0 0.0
    %2843 = vmatpush1.msra.mxu0 0.0
    %2844 = vmatprep.subr.mxu0 0.0
    %2845 = vmatpush1.msra.mxu0 0.0
    %2846 = vmatprep.subr.mxu0 0.0
    %2847 = vmatpush1.msra.mxu0 0.0
    %2848 = vmatprep.subr.mxu0 0.0
    %2849 = vmatpush1.msra.mxu0 0.0
    %2850 = vmatprep.subr.mxu0 0.0
    %2851 = vmatpush1.msra.mxu0 0.0
    %2852 = vmatprep.subr.mxu0 0.0
    %2853 = vmatpush1.msra.mxu0 0.0
    %2854 = vmatprep.subr.mxu0 0.0
    %2855 = vmatpush1.msra.mxu0 0.0
    %2856 = vmatprep.subr.mxu0 0.0
    %2857 = vmatpush1.msra.mxu0 0.0
    %2858 = vmatprep.subr.mxu0 0.0
    %2859 = vmatpush1.msra.mxu0 0.0
    %2860 = vmatprep.subr.mxu0 0.0
    %2861 = vmatpush1.msra.mxu0 0.0
    %2862 = vmatprep.subr.mxu0 0.0
    %2863 = vmatpush1.msra.mxu0 0.0
    %2864 = vmatprep.subr.mxu0 0.0
    %2865 = vmatpush1.msra.mxu0 0.0
    %2866 = vmatprep.subr.mxu0 0.0
    %2867 = vmatpush1.msra.mxu0 0.0
    %2868 = vmatprep.subr.mxu0 0.0
    %2869 = vmatpush1.msra.mxu0 0.0
    %2870 = vmatprep.subr.mxu0 0.0
    %2871 = vmatpush1.msra.mxu0 0.0
    %2872 = vmatprep.subr.mxu0 0.0
    %2873 = vmatpush1.msra.mxu0 0.0
    %2874 = vmatprep.subr.mxu0 0.0
    %2875 = vmatpush1.msra.mxu0 0.0
    %2876 = vmatprep.subr.mxu0 0.0
    %2877 = vmatpush1.msra.mxu0 0.0
    %2878 = vmatprep.subr.mxu0 0.0
    %2879 = vmatpush1.msra.mxu0 0.0
    %2880 = vmatprep.subr.mxu0 0.0
    %2881 = vmatpush1.msra.mxu0 0.0
    %2882 = vmatprep.mubr.f32.mxu0 0.0
    %v2883 = vand.u32 %v143, 4294901760
    %2884 = vmatmul.mubr.f32.gmra.mrb[0].mxu0 %v2883
    %v2885 = vpop.f32.mrb[0].mxu0
    %v2886 = vadd.f32 %v2805, %v2885
    %v2887 = vpop.f32.mrb[0].mxu0
    %2888 = vdwg.mxu0
    %2889 = vmatprep.subr.mxu0 0.0
    %v2890 = vand.u32 %v133, 4294901760
    %v2891 = vsub.f32 %v133, %v2890
    %2892 = vmatpush1.msra.mxu0 %v2891
    %2893 = vmatprep.subr.mxu0 0.0
    %v2894 = vand.u32 %v134, 4294901760
    %v2895 = vsub.f32 %v134, %v2894
    %2896 = vmatpush1.msra.mxu0 %v2895
    %2897 = vmatprep.subr.mxu0 0.0
    %2898 = vmatpush1.msra.mxu0 0.0
    %2899 = vmatprep.subr.mxu0 0.0
    %2900 = vmatpush1.msra.mxu0 0.0
    %2901 = vmatprep.subr.mxu0 0.0
    %2902 = vmatpush1.msra.mxu0 0.0
    %2903 = vmatprep.subr.mxu0 0.0
    %2904 = vmatpush1.msra.mxu0 0.0
    %2905 = vmatprep.subr.mxu0 0.0
    %2906 = vmatpush1.msra.mxu0 0.0
    %2907 = vmatprep.subr.mxu0 0.0
    %2908 = vmatpush1.msra.mxu0 0.0
    %2909 = vmatprep.subr.mxu0 0.0
    %2910 = vmatpush1.msra.mxu0 0.0
    %2911 = vmatprep.subr.mxu0 0.0
    %2912 = vmatpush1.msra.mxu0 0.0
    %2913 = vmatprep.subr.mxu0 0.0
    %2914 = vmatpush1.msra.mxu0 0.0
    %2915 = vmatprep.subr.mxu0 0.0
    %2916 = vmatpush1.msra.mxu0 0.0
    %2917 = vmatprep.subr.mxu0 0.0
    %2918 = vmatpush1.msra.mxu0 0.0
    %2919 = vmatprep.subr.mxu0 0.0
    %2920 = vmatpush1.msra.mxu0 0.0
    %2921 = vmatprep.subr.mxu0 0.0
    %2922 = vmatpush1.msra.mxu0 0.0
    %2923 = vmatprep.subr.mxu0 0.0
    %2924 = vmatpush1.msra.mxu0 0.0
    %2925 = vmatprep.subr.mxu0 0.0
    %2926 = vmatpush1.msra.mxu0 0.0
    %2927 = vmatprep.subr.mxu0 0.0
    %2928 = vmatpush1.msra.mxu0 0.0
    %2929 = vmatprep.subr.mxu0 0.0
    %2930 = vmatpush1.msra.mxu0 0.0
    %2931 = vmatprep.subr.mxu0 0.0
    %2932 = vmatpush1.msra.mxu0 0.0
    %2933 = vmatprep.subr.mxu0 0.0
    %2934 = vmatpush1.msra.mxu0 0.0
    %2935 = vmatprep.subr.mxu0 0.0
    %2936 = vmatpush1.msra.mxu0 0.0
    %2937 = vmatprep.subr.mxu0 0.0
    %2938 = vmatpush1.msra.mxu0 0.0
    %2939 = vmatprep.subr.mxu0 0.0
    %2940 = vmatpush1.msra.mxu0 0.0
    %2941 = vmatprep.subr.mxu0 0.0
    %2942 = vmatpush1.msra.mxu0 0.0
    %2943 = vmatprep.subr.mxu0 0.0
    %2944 = vmatpush1.msra.mxu0 0.0
    %2945 = vmatprep.subr.mxu0 0.0
    %2946 = vmatpush1.msra.mxu0 0.0
    %2947 = vmatprep.subr.mxu0 0.0
    %2948 = vmatpush1.msra.mxu0 0.0
    %2949 = vmatprep.subr.mxu0 0.0
    %2950 = vmatpush1.msra.mxu0 0.0
    %2951 = vmatprep.subr.mxu0 0.0
    %2952 = vmatpush1.msra.mxu0 0.0
    %2953 = vmatprep.subr.mxu0 0.0
    %2954 = vmatpush1.msra.mxu0 0.0
    %2955 = vmatprep.subr.mxu0 0.0
    %2956 = vmatpush1.msra.mxu0 0.0
    %2957 = vmatprep.mubr.f32.mxu0 0.0
    %v2958 = vand.u32 %v143, 4294901760
    %v2959 = vsub.f32 %v143, %v2958
    %2960 = vmatmul.mubr.f32.gmra.mrb[0].mxu0 %v2959
    %v2961 = vpop.f32.mrb[0].mxu0
    %v2962 = vadd.f32 %v2886, %v2961
    %v2963 = vpop.f32.mrb[0].mxu0
    %2964 = vdwg.mxu0
    %2965 = vmatprep.subr.mxu0 0.0
    %v2966 = vand.u32 %v133, 4294901760
    %2967 = vmatpush1.msra.mxu0 %v2966
    %2968 = vmatprep.subr.mxu0 0.0
    %v2969 = vand.u32 %v134, 4294901760
    %2970 = vmatpush1.msra.mxu0 %v2969
    %2971 = vmatprep.subr.mxu0 0.0
    %2972 = vmatpush1.msra.mxu0 0.0
    %2973 = vmatprep.subr.mxu0 0.0
    %2974 = vmatpush1.msra.mxu0 0.0
    %2975 = vmatprep.subr.mxu0 0.0
    %2976 = vmatpush1.msra.mxu0 0.0
    %2977 = vmatprep.subr.mxu0 0.0
    %2978 = vmatpush1.msra.mxu0 0.0
    %2979 = vmatprep.subr.mxu0 0.0
    %2980 = vmatpush1.msra.mxu0 0.0
    %2981 = vmatprep.subr.mxu0 0.0
    %2982 = vmatpush1.msra.mxu0 0.0
    %2983 = vmatprep.subr.mxu0 0.0
    %2984 = vmatpush1.msra.mxu0 0.0
    %2985 = vmatprep.subr.mxu0 0.0
    %2986 = vmatpush1.msra.mxu0 0.0
    %2987 = vmatprep.subr.mxu0 0.0
    %2988 = vmatpush1.msra.mxu0 0.0
    %2989 = vmatprep.subr.mxu0 0.0
    %2990 = vmatpush1.msra.mxu0 0.0
    %2991 = vmatprep.subr.mxu0 0.0
    %2992 = vmatpush1.msra.mxu0 0.0
    %2993 = vmatprep.subr.mxu0 0.0
    %2994 = vmatpush1.msra.mxu0 0.0
    %2995 = vmatprep.subr.mxu0 0.0
    %2996 = vmatpush1.msra.mxu0 0.0
    %2997 = vmatprep.subr.mxu0 0.0
    %2998 = vmatpush1.msra.mxu0 0.0
    %2999 = vmatprep.subr.mxu0 0.0
    %3000 = vmatpush1.msra.mxu0 0.0
    %3001 = vmatprep.subr.mxu0 0.0
    %3002 = vmatpush1.msra.mxu0 0.0
    %3003 = vmatprep.subr.mxu0 0.0
    %3004 = vmatpush1.msra.mxu0 0.0
    %3005 = vmatprep.subr.mxu0 0.0
    %3006 = vmatpush1.msra.mxu0 0.0
    %3007 = vmatprep.subr.mxu0 0.0
    %3008 = vmatpush1.msra.mxu0 0.0
    %3009 = vmatprep.subr.mxu0 0.0
    %3010 = vmatpush1.msra.mxu0 0.0
    %3011 = vmatprep.subr.mxu0 0.0
    %3012 = vmatpush1.msra.mxu0 0.0
    %3013 = vmatprep.subr.mxu0 0.0
    %3014 = vmatpush1.msra.mxu0 0.0
    %3015 = vmatprep.subr.mxu0 0.0
    %3016 = vmatpush1.msra.mxu0 0.0
    %3017 = vmatprep.subr.mxu0 0.0
    %3018 = vmatpush1.msra.mxu0 0.0
    %3019 = vmatprep.subr.mxu0 0.0
    %3020 = vmatpush1.msra.mxu0 0.0
    %3021 = vmatprep.subr.mxu0 0.0
    %3022 = vmatpush1.msra.mxu0 0.0
    %3023 = vmatprep.subr.mxu0 0.0
    %3024 = vmatpush1.msra.mxu0 0.0
    %3025 = vmatprep.subr.mxu0 0.0
    %3026 = vmatpush1.msra.mxu0 0.0
    %3027 = vmatprep.subr.mxu0 0.0
    %3028 = vmatpush1.msra.mxu0 0.0
    %3029 = vmatprep.subr.mxu0 0.0
    %3030 = vmatpush1.msra.mxu0 0.0
    %3031 = vmatprep.mubr.f32.mxu0 0.0
    %v3032 = vand.u32 %v143, 4294901760
    %v3033 = vsub.f32 %v143, %v3032
    %v3034 = vand.u32 %v3033, 4294901760
    %3035 = vmatmul.mubr.f32.gmra.mrb[0].mxu0 %v3034
    %v3036 = vpop.f32.mrb[0].mxu0
    %v3037 = vadd.f32 %v2962, %v3036
    %v3038 = vpop.f32.mrb[0].mxu0
    %3039 = vdwg.mxu0
    %3040 = vmatprep.subr.mxu0 0.0
    %v3041 = vand.u32 %v133, 4294901760
    %v3042 = vsub.f32 %v133, %v3041
    %v3043 = vand.u32 %v3042, 4294901760
    %3044 = vmatpush1.msra.mxu0 %v3043
    %3045 = vmatprep.subr.mxu0 0.0
    %v3046 = vand.u32 %v134, 4294901760
    %v3047 = vsub.f32 %v134, %v3046
    %v3048 = vand.u32 %v3047, 4294901760
    %3049 = vmatpush1.msra.mxu0 %v3048
    %3050 = vmatprep.subr.mxu0 0.0
    %3051 = vmatpush1.msra.mxu0 0.0
    %3052 = vmatprep.subr.mxu0 0.0
    %3053 = vmatpush1.msra.mxu0 0.0
    %3054 = vmatprep.subr.mxu0 0.0
    %3055 = vmatpush1.msra.mxu0 0.0
    %3056 = vmatprep.subr.mxu0 0.0
    %3057 = vmatpush1.msra.mxu0 0.0
    %3058 = vmatprep.subr.mxu0 0.0
    %3059 = vmatpush1.msra.mxu0 0.0
    %3060 = vmatprep.subr.mxu0 0.0
    %3061 = vmatpush1.msra.mxu0 0.0
    %3062 = vmatprep.subr.mxu0 0.0
    %3063 = vmatpush1.msra.mxu0 0.0
    %3064 = vmatprep.subr.mxu0 0.0
    %3065 = vmatpush1.msra.mxu0 0.0
    %3066 = vmatprep.subr.mxu0 0.0
    %3067 = vmatpush1.msra.mxu0 0.0
    %3068 = vmatprep.subr.mxu0 0.0
    %3069 = vmatpush1.msra.mxu0 0.0
    %3070 = vmatprep.subr.mxu0 0.0
    %3071 = vmatpush1.msra.mxu0 0.0
    %3072 = vmatprep.subr.mxu0 0.0
    %3073 = vmatpush1.msra.mxu0 0.0
    %3074 = vmatprep.subr.mxu0 0.0
    %3075 = vmatpush1.msra.mxu0 0.0
    %3076 = vmatprep.subr.mxu0 0.0
    %3077 = vmatpush1.msra.mxu0 0.0
    %3078 = vmatprep.subr.mxu0 0.0
    %3079 = vmatpush1.msra.mxu0 0.0
    %3080 = vmatprep.subr.mxu0 0.0
    %3081 = vmatpush1.msra.mxu0 0.0
    %3082 = vmatprep.subr.mxu0 0.0
    %3083 = vmatpush1.msra.mxu0 0.0
    %3084 = vmatprep.subr.mxu0 0.0
    %3085 = vmatpush1.msra.mxu0 0.0
    %3086 = vmatprep.subr.mxu0 0.0
    %3087 = vmatpush1.msra.mxu0 0.0
    %3088 = vmatprep.subr.mxu0 0.0
    %3089 = vmatpush1.msra.mxu0 0.0
    %3090 = vmatprep.subr.mxu0 0.0
    %3091 = vmatpush1.msra.mxu0 0.0
    %3092 = vmatprep.subr.mxu0 0.0
    %3093 = vmatpush1.msra.mxu0 0.0
    %3094 = vmatprep.subr.mxu0 0.0
    %3095 = vmatpush1.msra.mxu0 0.0
    %3096 = vmatprep.subr.mxu0 0.0
    %3097 = vmatpush1.msra.mxu0 0.0
    %3098 = vmatprep.subr.mxu0 0.0
    %3099 = vmatpush1.msra.mxu0 0.0
    %3100 = vmatprep.subr.mxu0 0.0
    %3101 = vmatpush1.msra.mxu0 0.0
    %3102 = vmatprep.subr.mxu0 0.0
    %3103 = vmatpush1.msra.mxu0 0.0
    %3104 = vmatprep.subr.mxu0 0.0
    %3105 = vmatpush1.msra.mxu0 0.0
    %3106 = vmatprep.subr.mxu0 0.0
    %3107 = vmatpush1.msra.mxu0 0.0
    %3108 = vmatprep.subr.mxu0 0.0
    %3109 = vmatpush1.msra.mxu0 0.0
    %3110 = vmatprep.mubr.f32.mxu0 0.0
    %v3111 = vand.u32 %v143, 4294901760
    %3112 = vmatmul.mubr.f32.gmra.mrb[0].mxu0 %v3111
    %v3113 = vpop.f32.mrb[0].mxu0
    %v3114 = vadd.f32 %v3037, %v3113
    %v3115 = vpop.f32.mrb[0].mxu0
    %3116 = vdwg.mxu0
    %3117 = vmatprep.subr.mxu0 0.0
    %v3118 = vand.u32 %v133, 4294901760
    %3119 = vmatpush1.msra.mxu0 %v3118
    %3120 = vmatprep.subr.mxu0 0.0
    %v3121 = vand.u32 %v134, 4294901760
    %3122 = vmatpush1.msra.mxu0 %v3121
    %3123 = vmatprep.subr.mxu0 0.0
    %3124 = vmatpush1.msra.mxu0 0.0
    %3125 = vmatprep.subr.mxu0 0.0
    %3126 = vmatpush1.msra.mxu0 0.0
    %3127 = vmatprep.subr.mxu0 0.0
    %3128 = vmatpush1.msra.mxu0 0.0
    %3129 = vmatprep.subr.mxu0 0.0
    %3130 = vmatpush1.msra.mxu0 0.0
    %3131 = vmatprep.subr.mxu0 0.0
    %3132 = vmatpush1.msra.mxu0 0.0
    %3133 = vmatprep.subr.mxu0 0.0
    %3134 = vmatpush1.msra.mxu0 0.0
    %3135 = vmatprep.subr.mxu0 0.0
    %3136 = vmatpush1.msra.mxu0 0.0
    %3137 = vmatprep.subr.mxu0 0.0
    %3138 = vmatpush1.msra.mxu0 0.0
    %3139 = vmatprep.subr.mxu0 0.0
    %3140 = vmatpush1.msra.mxu0 0.0
    %3141 = vmatprep.subr.mxu0 0.0
    %3142 = vmatpush1.msra.mxu0 0.0
    %3143 = vmatprep.subr.mxu0 0.0
    %3144 = vmatpush1.msra.mxu0 0.0
    %3145 = vmatprep.subr.mxu0 0.0
    %3146 = vmatpush1.msra.mxu0 0.0
    %3147 = vmatprep.subr.mxu0 0.0
    %3148 = vmatpush1.msra.mxu0 0.0
    %3149 = vmatprep.subr.mxu0 0.0
    %3150 = vmatpush1.msra.mxu0 0.0
    %3151 = vmatprep.subr.mxu0 0.0
    %3152 = vmatpush1.msra.mxu0 0.0
    %3153 = vmatprep.subr.mxu0 0.0
    %3154 = vmatpush1.msra.mxu0 0.0
    %3155 = vmatprep.subr.mxu0 0.0
    %3156 = vmatpush1.msra.mxu0 0.0
    %3157 = vmatprep.subr.mxu0 0.0
    %3158 = vmatpush1.msra.mxu0 0.0
    %3159 = vmatprep.subr.mxu0 0.0
    %3160 = vmatpush1.msra.mxu0 0.0
    %3161 = vmatprep.subr.mxu0 0.0
    %3162 = vmatpush1.msra.mxu0 0.0
    %3163 = vmatprep.subr.mxu0 0.0
    %3164 = vmatpush1.msra.mxu0 0.0
    %3165 = vmatprep.subr.mxu0 0.0
    %3166 = vmatpush1.msra.mxu0 0.0
    %3167 = vmatprep.subr.mxu0 0.0
    %3168 = vmatpush1.msra.mxu0 0.0
    %3169 = vmatprep.subr.mxu0 0.0
    %3170 = vmatpush1.msra.mxu0 0.0
    %3171 = vmatprep.subr.mxu0 0.0
    %3172 = vmatpush1.msra.mxu0 0.0
    %3173 = vmatprep.subr.mxu0 0.0
    %3174 = vmatpush1.msra.mxu0 0.0
    %3175 = vmatprep.subr.mxu0 0.0
    %3176 = vmatpush1.msra.mxu0 0.0
    %3177 = vmatprep.subr.mxu0 0.0
    %3178 = vmatpush1.msra.mxu0 0.0
    %3179 = vmatprep.subr.mxu0 0.0
    %3180 = vmatpush1.msra.mxu0 0.0
    %3181 = vmatprep.subr.mxu0 0.0
    %3182 = vmatpush1.msra.mxu0 0.0
    %3183 = vmatprep.mubr.f32.mxu0 0.0
    %v3184 = vand.u32 %v143, 4294901760
    %3185 = vmatmul.mubr.f32.gmra.mrb[0].mxu0 %v3184
    %v3186 = vpop.f32.mrb[0].mxu0
    %v3187 = vadd.f32 %v3114, %v3186
    %v3188 = vpop.f32.mrb[0].mxu0
    %3189 = vdwg.mxu0
    %v3190 = vmax.f32 %v3187, 0.0
    %v3191 = vld [vmem:[%s3] sm:$0xff]
    %v3192 = vld [vmem:[%s3 + $0x8] sm:$0xff]
    %v3193 = vld [vmem:[%s3 + $0x10] sm:$0xff]
    %v3194 = vld [vmem:[%s3 + $0x18] sm:$0xff]
    %v3196 = vlaneseq
    %v3197 = vshrl.u32 %v3196, 7
    %v3198 = vsub.s32 0, %v3197
    %v3199 = vrot.slane %v28, %v3198
    %vm3201 = vcmask 261120
    %v3203 = vsel %vm3201, %v3190, 0
    %3205 = vmatprep.subr.mxu0 0.0
    %v3206 = vand.u32 %v3191, 4294901760
    %3207 = vmatpush1.msra.mxu0 %v3206
    %3208 = vmatprep.subr.mxu0 0.0
    %v3209 = vand.u32 %v3192, 4294901760
    %3210 = vmatpush1.msra.mxu0 %v3209
    %3211 = vmatprep.subr.mxu0 0.0
    %v3212 = vand.u32 %v3193, 4294901760
    %3213 = vmatpush1.msra.mxu0 %v3212
    %3214 = vmatprep.subr.mxu0 0.0
    %v3215 = vand.u32 %v3194, 4294901760
    %3216 = vmatpush1.msra.mxu0 %v3215
    %3217 = vmatprep.subr.mxu0 0.0
    %3218 = vmatpush1.msra.mxu0 0.0
    %3219 = vmatprep.subr.mxu0 0.0
    %3220 = vmatpush1.msra.mxu0 0.0
    %3221 = vmatprep.subr.mxu0 0.0
    %3222 = vmatpush1.msra.mxu0 0.0
    %3223 = vmatprep.subr.mxu0 0.0
    %3224 = vmatpush1.msra.mxu0 0.0
    %3225 = vmatprep.subr.mxu0 0.0
    %3226 = vmatpush1.msra.mxu0 0.0
    %3227 = vmatprep.subr.mxu0 0.0
    %3228 = vmatpush1.msra.mxu0 0.0
    %3229 = vmatprep.subr.mxu0 0.0
    %3230 = vmatpush1.msra.mxu0 0.0
    %3231 = vmatprep.subr.mxu0 0.0
    %3232 = vmatpush1.msra.mxu0 0.0
    %3233 = vmatprep.subr.mxu0 0.0
    %3234 = vmatpush1.msra.mxu0 0.0
    %3235 = vmatprep.subr.mxu0 0.0
    %3236 = vmatpush1.msra.mxu0 0.0
    %3237 = vmatprep.subr.mxu0 0.0
    %3238 = vmatpush1.msra.mxu0 0.0
    %3239 = vmatprep.subr.mxu0 0.0
    %3240 = vmatpush1.msra.mxu0 0.0
    %3241 = vmatprep.subr.mxu0 0.0
    %3242 = vmatpush1.msra.mxu0 0.0
    %3243 = vmatprep.subr.mxu0 0.0
    %3244 = vmatpush1.msra.mxu0 0.0
    %3245 = vmatprep.subr.mxu0 0.0
    %3246 = vmatpush1.msra.mxu0 0.0
    %3247 = vmatprep.subr.mxu0 0.0
    %3248 = vmatpush1.msra.mxu0 0.0
    %3249 = vmatprep.subr.mxu0 0.0
    %3250 = vmatpush1.msra.mxu0 0.0
    %3251 = vmatprep.subr.mxu0 0.0
    %3252 = vmatpush1.msra.mxu0 0.0
    %3253 = vmatprep.subr.mxu0 0.0
    %3254 = vmatpush1.msra.mxu0 0.0
    %3255 = vmatprep.subr.mxu0 0.0
    %3256 = vmatpush1.msra.mxu0 0.0
    %3257 = vmatprep.subr.mxu0 0.0
    %3258 = vmatpush1.msra.mxu0 0.0
    %3259 = vmatprep.subr.mxu0 0.0
    %3260 = vmatpush1.msra.mxu0 0.0
    %3261 = vmatprep.subr.mxu0 0.0
    %3262 = vmatpush1.msra.mxu0 0.0
    %3263 = vmatprep.subr.mxu0 0.0
    %3264 = vmatpush1.msra.mxu0 0.0
    %3265 = vmatprep.subr.mxu0 0.0
    %3266 = vmatpush1.msra.mxu0 0.0
    %3267 = vmatprep.subr.mxu0 0.0
    %3268 = vmatpush1.msra.mxu0 0.0
    %3269 = vmatprep.subr.mxu0 0.0
    %3270 = vmatpush1.msra.mxu0 0.0
    %3271 = vmatprep.subr.mxu0 0.0
    %3272 = vmatpush1.msra.mxu0 0.0
    %3273 = vmatprep.mubr.f32.mxu0 0.0
    %v3274 = vand.u32 %v3203, 4294901760
    %v3275 = vsub.f32 %v3203, %v3274
    %v3276 = vand.u32 %v3275, 4294901760
    %v3277 = vsub.f32 %v3275, %v3276
    %v3278 = vand.u32 %v3277, 4294901760
    %3279 = vmatmul.mubr.f32.gmra.mrb[0].mxu0 %v3278
    %v3280 = vpop.f32.mrb[0].mxu0
    %v3281 = vadd.f32 %v3199, %v3280
    %v3282 = vpop.f32.mrb[0].mxu0
    %3283 = vdwg.mxu0
    %3284 = vmatprep.subr.mxu0 0.0
    %v3285 = vand.u32 %v3191, 4294901760
    %v3286 = vsub.f32 %v3191, %v3285
    %v3287 = vand.u32 %v3286, 4294901760
    %v3288 = vsub.f32 %v3286, %v3287
    %v3289 = vand.u32 %v3288, 4294901760
    %3290 = vmatpush1.msra.mxu0 %v3289
    %3291 = vmatprep.subr.mxu0 0.0
    %v3292 = vand.u32 %v3192, 4294901760
    %v3293 = vsub.f32 %v3192, %v3292
    %v3294 = vand.u32 %v3293, 4294901760
    %v3295 = vsub.f32 %v3293, %v3294
    %v3296 = vand.u32 %v3295, 4294901760
    %3297 = vmatpush1.msra.mxu0 %v3296
    %3298 = vmatprep.subr.mxu0 0.0
    %v3299 = vand.u32 %v3193, 4294901760
    %v3300 = vsub.f32 %v3193, %v3299
    %v3301 = vand.u32 %v3300, 4294901760
    %v3302 = vsub.f32 %v3300, %v3301
    %v3303 = vand.u32 %v3302, 4294901760
    %3304 = vmatpush1.msra.mxu0 %v3303
    %3305 = vmatprep.subr.mxu0 0.0
    %v3306 = vand.u32 %v3194, 4294901760
    %v3307 = vsub.f32 %v3194, %v3306
    %v3308 = vand.u32 %v3307, 4294901760
    %v3309 = vsub.f32 %v3307, %v3308
    %v3310 = vand.u32 %v3309, 4294901760
    %3311 = vmatpush1.msra.mxu0 %v3310
    %3312 = vmatprep.subr.mxu0 0.0
    %3313 = vmatpush1.msra.mxu0 0.0
    %3314 = vmatprep.subr.mxu0 0.0
    %3315 = vmatpush1.msra.mxu0 0.0
    %3316 = vmatprep.subr.mxu0 0.0
    %3317 = vmatpush1.msra.mxu0 0.0
    %3318 = vmatprep.subr.mxu0 0.0
    %3319 = vmatpush1.msra.mxu0 0.0
    %3320 = vmatprep.subr.mxu0 0.0
    %3321 = vmatpush1.msra.mxu0 0.0
    %3322 = vmatprep.subr.mxu0 0.0
    %3323 = vmatpush1.msra.mxu0 0.0
    %3324 = vmatprep.subr.mxu0 0.0
    %3325 = vmatpush1.msra.mxu0 0.0
    %3326 = vmatprep.subr.mxu0 0.0
    %3327 = vmatpush1.msra.mxu0 0.0
    %3328 = vmatprep.subr.mxu0 0.0
    %3329 = vmatpush1.msra.mxu0 0.0
    %3330 = vmatprep.subr.mxu0 0.0
    %3331 = vmatpush1.msra.mxu0 0.0
    %3332 = vmatprep.subr.mxu0 0.0
    %3333 = vmatpush1.msra.mxu0 0.0
    %3334 = vmatprep.subr.mxu0 0.0
    %3335 = vmatpush1.msra.mxu0 0.0
    %3336 = vmatprep.subr.mxu0 0.0
    %3337 = vmatpush1.msra.mxu0 0.0
    %3338 = vmatprep.subr.mxu0 0.0
    %3339 = vmatpush1.msra.mxu0 0.0
    %3340 = vmatprep.subr.mxu0 0.0
    %3341 = vmatpush1.msra.mxu0 0.0
    %3342 = vmatprep.subr.mxu0 0.0
    %3343 = vmatpush1.msra.mxu0 0.0
    %3344 = vmatprep.subr.mxu0 0.0
    %3345 = vmatpush1.msra.mxu0 0.0
    %3346 = vmatprep.subr.mxu0 0.0
    %3347 = vmatpush1.msra.mxu0 0.0
    %3348 = vmatprep.subr.mxu0 0.0
    %3349 = vmatpush1.msra.mxu0 0.0
    %3350 = vmatprep.subr.mxu0 0.0
    %3351 = vmatpush1.msra.mxu0 0.0
    %3352 = vmatprep.subr.mxu0 0.0
    %3353 = vmatpush1.msra.mxu0 0.0
    %3354 = vmatprep.subr.mxu0 0.0
    %3355 = vmatpush1.msra.mxu0 0.0
    %3356 = vmatprep.subr.mxu0 0.0
    %3357 = vmatpush1.msra.mxu0 0.0
    %3358 = vmatprep.subr.mxu0 0.0
    %3359 = vmatpush1.msra.mxu0 0.0
    %3360 = vmatprep.subr.mxu0 0.0
    %3361 = vmatpush1.msra.mxu0 0.0
    %3362 = vmatprep.subr.mxu0 0.0
    %3363 = vmatpush1.msra.mxu0 0.0
    %3364 = vmatprep.subr.mxu0 0.0
    %3365 = vmatpush1.msra.mxu0 0.0
    %3366 = vmatprep.subr.mxu0 0.0
    %3367 = vmatpush1.msra.mxu0 0.0
    %3368 = vmatprep.mubr.f32.mxu0 0.0
    %v3369 = vand.u32 %v3203, 4294901760
    %3370 = vmatmul.mubr.f32.gmra.mrb[0].mxu0 %v3369
    %v3371 = vpop.f32.mrb[0].mxu0
    %v3372 = vadd.f32 %v3281, %v3371
    %v3373 = vpop.f32.mrb[0].mxu0
    %3374 = vdwg.mxu0
    %3375 = vmatprep.subr.mxu0 0.0
    %v3376 = vand.u32 %v3191, 4294901760
    %v3377 = vsub.f32 %v3191, %v3376
    %3378 = vmatpush1.msra.mxu0 %v3377
    %3379 = vmatprep.subr.mxu0 0.0
    %v3380 = vand.u32 %v3192, 4294901760
    %v3381 = vsub.f32 %v3192, %v3380
    %3382 = vmatpush1.msra.mxu0 %v3381
    %3383 = vmatprep.subr.mxu0 0.0
    %v3384 = vand.u32 %v3193, 4294901760
    %v3385 = vsub.f32 %v3193, %v3384
    %3386 = vmatpush1.msra.mxu0 %v3385
    %3387 = vmatprep.subr.mxu0 0.0
    %v3388 = vand.u32 %v3194, 4294901760
    %v3389 = vsub.f32 %v3194, %v3388
    %3390 = vmatpush1.msra.mxu0 %v3389
    %3391 = vmatprep.subr.mxu0 0.0
    %3392 = vmatpush1.msra.mxu0 0.0
    %3393 = vmatprep.subr.mxu0 0.0
    %3394 = vmatpush1.msra.mxu0 0.0
    %3395 = vmatprep.subr.mxu0 0.0
    %3396 = vmatpush1.msra.mxu0 0.0
    %3397 = vmatprep.subr.mxu0 0.0
    %3398 = vmatpush1.msra.mxu0 0.0
    %3399 = vmatprep.subr.mxu0 0.0
    %3400 = vmatpush1.msra.mxu0 0.0
    %3401 = vmatprep.subr.mxu0 0.0
    %3402 = vmatpush1.msra.mxu0 0.0
    %3403 = vmatprep.subr.mxu0 0.0
    %3404 = vmatpush1.msra.mxu0 0.0
    %3405 = vmatprep.subr.mxu0 0.0
    %3406 = vmatpush1.msra.mxu0 0.0
    %3407 = vmatprep.subr.mxu0 0.0
    %3408 = vmatpush1.msra.mxu0 0.0
    %3409 = vmatprep.subr.mxu0 0.0
    %3410 = vmatpush1.msra.mxu0 0.0
    %3411 = vmatprep.subr.mxu0 0.0
    %3412 = vmatpush1.msra.mxu0 0.0
    %3413 = vmatprep.subr.mxu0 0.0
    %3414 = vmatpush1.msra.mxu0 0.0
    %3415 = vmatprep.subr.mxu0 0.0
    %3416 = vmatpush1.msra.mxu0 0.0
    %3417 = vmatprep.subr.mxu0 0.0
    %3418 = vmatpush1.msra.mxu0 0.0
    %3419 = vmatprep.subr.mxu0 0.0
    %3420 = vmatpush1.msra.mxu0 0.0
    %3421 = vmatprep.subr.mxu0 0.0
    %3422 = vmatpush1.msra.mxu0 0.0
    %3423 = vmatprep.subr.mxu0 0.0
    %3424 = vmatpush1.msra.mxu0 0.0
    %3425 = vmatprep.subr.mxu0 0.0
    %3426 = vmatpush1.msra.mxu0 0.0
    %3427 = vmatprep.subr.mxu0 0.0
    %3428 = vmatpush1.msra.mxu0 0.0
    %3429 = vmatprep.subr.mxu0 0.0
    %3430 = vmatpush1.msra.mxu0 0.0
    %3431 = vmatprep.subr.mxu0 0.0
    %3432 = vmatpush1.msra.mxu0 0.0
    %3433 = vmatprep.subr.mxu0 0.0
    %3434 = vmatpush1.msra.mxu0 0.0
    %3435 = vmatprep.subr.mxu0 0.0
    %3436 = vmatpush1.msra.mxu0 0.0
    %3437 = vmatprep.subr.mxu0 0.0
    %3438 = vmatpush1.msra.mxu0 0.0
    %3439 = vmatprep.subr.mxu0 0.0
    %3440 = vmatpush1.msra.mxu0 0.0
    %3441 = vmatprep.subr.mxu0 0.0
    %3442 = vmatpush1.msra.mxu0 0.0
    %3443 = vmatprep.subr.mxu0 0.0
    %3444 = vmatpush1.msra.mxu0 0.0
    %3445 = vmatprep.subr.mxu0 0.0
    %3446 = vmatpush1.msra.mxu0 0.0
    %3447 = vmatprep.mubr.f32.mxu0 0.0
    %v3448 = vand.u32 %v3203, 4294901760
    %v3449 = vsub.f32 %v3203, %v3448
    %3450 = vmatmul.mubr.f32.gmra.mrb[0].mxu0 %v3449
    %v3451 = vpop.f32.mrb[0].mxu0
    %v3452 = vadd.f32 %v3372, %v3451
    %v3453 = vpop.f32.mrb[0].mxu0
    %3454 = vdwg.mxu0
    %3455 = vmatprep.subr.mxu0 0.0
    %v3456 = vand.u32 %v3191, 4294901760
    %3457 = vmatpush1.msra.mxu0 %v3456
    %3458 = vmatprep.subr.mxu0 0.0
    %v3459 = vand.u32 %v3192, 4294901760
    %3460 = vmatpush1.msra.mxu0 %v3459
    %3461 = vmatprep.subr.mxu0 0.0
    %v3462 = vand.u32 %v3193, 4294901760
    %3463 = vmatpush1.msra.mxu0 %v3462
    %3464 = vmatprep.subr.mxu0 0.0
    %v3465 = vand.u32 %v3194, 4294901760
    %3466 = vmatpush1.msra.mxu0 %v3465
    %3467 = vmatprep.subr.mxu0 0.0
    %3468 = vmatpush1.msra.mxu0 0.0
    %3469 = vmatprep.subr.mxu0 0.0
    %3470 = vmatpush1.msra.mxu0 0.0
    %3471 = vmatprep.subr.mxu0 0.0
    %3472 = vmatpush1.msra.mxu0 0.0
    %3473 = vmatprep.subr.mxu0 0.0
    %3474 = vmatpush1.msra.mxu0 0.0
    %3475 = vmatprep.subr.mxu0 0.0
    %3476 = vmatpush1.msra.mxu0 0.0
    %3477 = vmatprep.subr.mxu0 0.0
    %3478 = vmatpush1.msra.mxu0 0.0
    %3479 = vmatprep.subr.mxu0 0.0
    %3480 = vmatpush1.msra.mxu0 0.0
    %3481 = vmatprep.subr.mxu0 0.0
    %3482 = vmatpush1.msra.mxu0 0.0
    %3483 = vmatprep.subr.mxu0 0.0
    %3484 = vmatpush1.msra.mxu0 0.0
    %3485 = vmatprep.subr.mxu0 0.0
    %3486 = vmatpush1.msra.mxu0 0.0
    %3487 = vmatprep.subr.mxu0 0.0
    %3488 = vmatpush1.msra.mxu0 0.0
    %3489 = vmatprep.subr.mxu0 0.0
    %3490 = vmatpush1.msra.mxu0 0.0
    %3491 = vmatprep.subr.mxu0 0.0
    %3492 = vmatpush1.msra.mxu0 0.0
    %3493 = vmatprep.subr.mxu0 0.0
    %3494 = vmatpush1.msra.mxu0 0.0
    %3495 = vmatprep.subr.mxu0 0.0
    %3496 = vmatpush1.msra.mxu0 0.0
    %3497 = vmatprep.subr.mxu0 0.0
    %3498 = vmatpush1.msra.mxu0 0.0
    %3499 = vmatprep.subr.mxu0 0.0
    %3500 = vmatpush1.msra.mxu0 0.0
    %3501 = vmatprep.subr.mxu0 0.0
    %3502 = vmatpush1.msra.mxu0 0.0
    %3503 = vmatprep.subr.mxu0 0.0
    %3504 = vmatpush1.msra.mxu0 0.0
    %3505 = vmatprep.subr.mxu0 0.0
    %3506 = vmatpush1.msra.mxu0 0.0
    %3507 = vmatprep.subr.mxu0 0.0
    %3508 = vmatpush1.msra.mxu0 0.0
    %3509 = vmatprep.subr.mxu0 0.0
    %3510 = vmatpush1.msra.mxu0 0.0
    %3511 = vmatprep.subr.mxu0 0.0
    %3512 = vmatpush1.msra.mxu0 0.0
    %3513 = vmatprep.subr.mxu0 0.0
    %3514 = vmatpush1.msra.mxu0 0.0
    %3515 = vmatprep.subr.mxu0 0.0
    %3516 = vmatpush1.msra.mxu0 0.0
    %3517 = vmatprep.subr.mxu0 0.0
    %3518 = vmatpush1.msra.mxu0 0.0
    %3519 = vmatprep.subr.mxu0 0.0
    %3520 = vmatpush1.msra.mxu0 0.0
    %3521 = vmatprep.subr.mxu0 0.0
    %3522 = vmatpush1.msra.mxu0 0.0
    %3523 = vmatprep.mubr.f32.mxu0 0.0
    %v3524 = vand.u32 %v3203, 4294901760
    %v3525 = vsub.f32 %v3203, %v3524
    %v3526 = vand.u32 %v3525, 4294901760
    %3527 = vmatmul.mubr.f32.gmra.mrb[0].mxu0 %v3526
    %v3528 = vpop.f32.mrb[0].mxu0
    %v3529 = vadd.f32 %v3452, %v3528
    %v3530 = vpop.f32.mrb[0].mxu0
    %3531 = vdwg.mxu0
    %3532 = vmatprep.subr.mxu0 0.0
    %v3533 = vand.u32 %v3191, 4294901760
    %v3534 = vsub.f32 %v3191, %v3533
    %v3535 = vand.u32 %v3534, 4294901760
    %3536 = vmatpush1.msra.mxu0 %v3535
    %3537 = vmatprep.subr.mxu0 0.0
    %v3538 = vand.u32 %v3192, 4294901760
    %v3539 = vsub.f32 %v3192, %v3538
    %v3540 = vand.u32 %v3539, 4294901760
    %3541 = vmatpush1.msra.mxu0 %v3540
    %3542 = vmatprep.subr.mxu0 0.0
    %v3543 = vand.u32 %v3193, 4294901760
    %v3544 = vsub.f32 %v3193, %v3543
    %v3545 = vand.u32 %v3544, 4294901760
    %3546 = vmatpush1.msra.mxu0 %v3545
    %3547 = vmatprep.subr.mxu0 0.0
    %v3548 = vand.u32 %v3194, 4294901760
    %v3549 = vsub.f32 %v3194, %v3548
    %v3550 = vand.u32 %v3549, 4294901760
    %3551 = vmatpush1.msra.mxu0 %v3550
    %3552 = vmatprep.subr.mxu0 0.0
    %3553 = vmatpush1.msra.mxu0 0.0
    %3554 = vmatprep.subr.mxu0 0.0
    %3555 = vmatpush1.msra.mxu0 0.0
    %3556 = vmatprep.subr.mxu0 0.0
    %3557 = vmatpush1.msra.mxu0 0.0
    %3558 = vmatprep.subr.mxu0 0.0
    %3559 = vmatpush1.msra.mxu0 0.0
    %3560 = vmatprep.subr.mxu0 0.0
    %3561 = vmatpush1.msra.mxu0 0.0
    %3562 = vmatprep.subr.mxu0 0.0
    %3563 = vmatpush1.msra.mxu0 0.0
    %3564 = vmatprep.subr.mxu0 0.0
    %3565 = vmatpush1.msra.mxu0 0.0
    %3566 = vmatprep.subr.mxu0 0.0
    %3567 = vmatpush1.msra.mxu0 0.0
    %3568 = vmatprep.subr.mxu0 0.0
    %3569 = vmatpush1.msra.mxu0 0.0
    %3570 = vmatprep.subr.mxu0 0.0
    %3571 = vmatpush1.msra.mxu0 0.0
    %3572 = vmatprep.subr.mxu0 0.0
    %3573 = vmatpush1.msra.mxu0 0.0
    %3574 = vmatprep.subr.mxu0 0.0
    %3575 = vmatpush1.msra.mxu0 0.0
    %3576 = vmatprep.subr.mxu0 0.0
    %3577 = vmatpush1.msra.mxu0 0.0
    %3578 = vmatprep.subr.mxu0 0.0
    %3579 = vmatpush1.msra.mxu0 0.0
    %3580 = vmatprep.subr.mxu0 0.0
    %3581 = vmatpush1.msra.mxu0 0.0
    %3582 = vmatprep.subr.mxu0 0.0
    %3583 = vmatpush1.msra.mxu0 0.0
    %3584 = vmatprep.subr.mxu0 0.0
    %3585 = vmatpush1.msra.mxu0 0.0
    %3586 = vmatprep.subr.mxu0 0.0
    %3587 = vmatpush1.msra.mxu0 0.0
    %3588 = vmatprep.subr.mxu0 0.0
    %3589 = vmatpush1.msra.mxu0 0.0
    %3590 = vmatprep.subr.mxu0 0.0
    %3591 = vmatpush1.msra.mxu0 0.0
    %3592 = vmatprep.subr.mxu0 0.0
    %3593 = vmatpush1.msra.mxu0 0.0
    %3594 = vmatprep.subr.mxu0 0.0
    %3595 = vmatpush1.msra.mxu0 0.0
    %3596 = vmatprep.subr.mxu0 0.0
    %3597 = vmatpush1.msra.mxu0 0.0
    %3598 = vmatprep.subr.mxu0 0.0
    %3599 = vmatpush1.msra.mxu0 0.0
    %3600 = vmatprep.subr.mxu0 0.0
    %3601 = vmatpush1.msra.mxu0 0.0
    %3602 = vmatprep.subr.mxu0 0.0
    %3603 = vmatpush1.msra.mxu0 0.0
    %3604 = vmatprep.subr.mxu0 0.0
    %3605 = vmatpush1.msra.mxu0 0.0
    %3606 = vmatprep.subr.mxu0 0.0
    %3607 = vmatpush1.msra.mxu0 0.0
    %3608 = vmatprep.mubr.f32.mxu0 0.0
    %v3609 = vand.u32 %v3203, 4294901760
    %3610 = vmatmul.mubr.f32.gmra.mrb[0].mxu0 %v3609
    %v3611 = vpop.f32.mrb[0].mxu0
    %v3612 = vadd.f32 %v3529, %v3611
    %v3613 = vpop.f32.mrb[0].mxu0
    %3614 = vdwg.mxu0
    %3615 = vmatprep.subr.mxu0 0.0
    %v3616 = vand.u32 %v3191, 4294901760
    %3617 = vmatpush1.msra.mxu0 %v3616
    %3618 = vmatprep.subr.mxu0 0.0
    %v3619 = vand.u32 %v3192, 4294901760
    %3620 = vmatpush1.msra.mxu0 %v3619
    %3621 = vmatprep.subr.mxu0 0.0
    %v3622 = vand.u32 %v3193, 4294901760
    %3623 = vmatpush1.msra.mxu0 %v3622
    %3624 = vmatprep.subr.mxu0 0.0
    %v3625 = vand.u32 %v3194, 4294901760
    %3626 = vmatpush1.msra.mxu0 %v3625
    %3627 = vmatprep.subr.mxu0 0.0
    %3628 = vmatpush1.msra.mxu0 0.0
    %3629 = vmatprep.subr.mxu0 0.0
    %3630 = vmatpush1.msra.mxu0 0.0
    %3631 = vmatprep.subr.mxu0 0.0
    %3632 = vmatpush1.msra.mxu0 0.0
    %3633 = vmatprep.subr.mxu0 0.0
    %3634 = vmatpush1.msra.mxu0 0.0
    %3635 = vmatprep.subr.mxu0 0.0
    %3636 = vmatpush1.msra.mxu0 0.0
    %3637 = vmatprep.subr.mxu0 0.0
    %3638 = vmatpush1.msra.mxu0 0.0
    %3639 = vmatprep.subr.mxu0 0.0
    %3640 = vmatpush1.msra.mxu0 0.0
    %3641 = vmatprep.subr.mxu0 0.0
    %3642 = vmatpush1.msra.mxu0 0.0
    %3643 = vmatprep.subr.mxu0 0.0
    %3644 = vmatpush1.msra.mxu0 0.0
    %3645 = vmatprep.subr.mxu0 0.0
    %3646 = vmatpush1.msra.mxu0 0.0
    %3647 = vmatprep.subr.mxu0 0.0
    %3648 = vmatpush1.msra.mxu0 0.0
    %3649 = vmatprep.subr.mxu0 0.0
    %3650 = vmatpush1.msra.mxu0 0.0
    %3651 = vmatprep.subr.mxu0 0.0
    %3652 = vmatpush1.msra.mxu0 0.0
    %3653 = vmatprep.subr.mxu0 0.0
    %3654 = vmatpush1.msra.mxu0 0.0
    %3655 = vmatprep.subr.mxu0 0.0
    %3656 = vmatpush1.msra.mxu0 0.0
    %3657 = vmatprep.subr.mxu0 0.0
    %3658 = vmatpush1.msra.mxu0 0.0
    %3659 = vmatprep.subr.mxu0 0.0
    %3660 = vmatpush1.msra.mxu0 0.0
    %3661 = vmatprep.subr.mxu0 0.0
    %3662 = vmatpush1.msra.mxu0 0.0
    %3663 = vmatprep.subr.mxu0 0.0
    %3664 = vmatpush1.msra.mxu0 0.0
    %3665 = vmatprep.subr.mxu0 0.0
    %3666 = vmatpush1.msra.mxu0 0.0
    %3667 = vmatprep.subr.mxu0 0.0
    %3668 = vmatpush1.msra.mxu0 0.0
    %3669 = vmatprep.subr.mxu0 0.0
    %3670 = vmatpush1.msra.mxu0 0.0
    %3671 = vmatprep.subr.mxu0 0.0
    %3672 = vmatpush1.msra.mxu0 0.0
    %3673 = vmatprep.subr.mxu0 0.0
    %3674 = vmatpush1.msra.mxu0 0.0
    %3675 = vmatprep.subr.mxu0 0.0
    %3676 = vmatpush1.msra.mxu0 0.0
    %3677 = vmatprep.subr.mxu0 0.0
    %3678 = vmatpush1.msra.mxu0 0.0
    %3679 = vmatprep.subr.mxu0 0.0
    %3680 = vmatpush1.msra.mxu0 0.0
    %3681 = vmatprep.subr.mxu0 0.0
    %3682 = vmatpush1.msra.mxu0 0.0
    %3683 = vmatprep.mubr.f32.mxu0 0.0
    %v3684 = vand.u32 %v3203, 4294901760
    %3685 = vmatmul.mubr.f32.gmra.mrb[0].mxu0 %v3684
    %v3686 = vpop.f32.mrb[0].mxu0
    %v3687 = vadd.f32 %v3612, %v3686
    %v3688 = vpop.f32.mrb[0].mxu0
    %3689 = vdwg.mxu0
    %v3690 = vmax.f32 %v3687, 0.0
    %v3691 = vld [vmem:[%s5] sm:$0xff]
    %v3692 = vld [vmem:[%s5 + $0x8] sm:$0xff]
    %v3694 = vlaneseq
    %v3695 = vshrl.u32 %v3694, 7
    %v3696 = vsub.s32 0, %v3695
    %v3697 = vrot.slane %v29, %v3696
    %v3700 = vsel %vm141, %v3690, 0
    %3702 = vmatprep.subr.mxu0 0.0
    %v3703 = vand.u32 %v3691, 4294901760
    %3704 = vmatpush1.msra.mxu0 %v3703
    %3705 = vmatprep.subr.mxu0 0.0
    %v3706 = vand.u32 %v3692, 4294901760
    %3707 = vmatpush1.msra.mxu0 %v3706
    %3708 = vmatprep.subr.mxu0 0.0
    %3709 = vmatpush1.msra.mxu0 0.0
    %3710 = vmatprep.subr.mxu0 0.0
    %3711 = vmatpush1.msra.mxu0 0.0
    %3712 = vmatprep.subr.mxu0 0.0
    %3713 = vmatpush1.msra.mxu0 0.0
    %3714 = vmatprep.subr.mxu0 0.0
    %3715 = vmatpush1.msra.mxu0 0.0
    %3716 = vmatprep.subr.mxu0 0.0
    %3717 = vmatpush1.msra.mxu0 0.0
    %3718 = vmatprep.subr.mxu0 0.0
    %3719 = vmatpush1.msra.mxu0 0.0
    %3720 = vmatprep.subr.mxu0 0.0
    %3721 = vmatpush1.msra.mxu0 0.0
    %3722 = vmatprep.subr.mxu0 0.0
    %3723 = vmatpush1.msra.mxu0 0.0
    %3724 = vmatprep.subr.mxu0 0.0
    %3725 = vmatpush1.msra.mxu0 0.0
    %3726 = vmatprep.subr.mxu0 0.0
    %3727 = vmatpush1.msra.mxu0 0.0
    %3728 = vmatprep.subr.mxu0 0.0
    %3729 = vmatpush1.msra.mxu0 0.0
    %3730 = vmatprep.subr.mxu0 0.0
    %3731 = vmatpush1.msra.mxu0 0.0
    %3732 = vmatprep.subr.mxu0 0.0
    %3733 = vmatpush1.msra.mxu0 0.0
    %3734 = vmatprep.subr.mxu0 0.0
    %3735 = vmatpush1.msra.mxu0 0.0
    %3736 = vmatprep.subr.mxu0 0.0
    %3737 = vmatpush1.msra.mxu0 0.0
    %3738 = vmatprep.subr.mxu0 0.0
    %3739 = vmatpush1.msra.mxu0 0.0
    %3740 = vmatprep.subr.mxu0 0.0
    %3741 = vmatpush1.msra.mxu0 0.0
    %3742 = vmatprep.subr.mxu0 0.0
    %3743 = vmatpush1.msra.mxu0 0.0
    %3744 = vmatprep.subr.mxu0 0.0
    %3745 = vmatpush1.msra.mxu0 0.0
    %3746 = vmatprep.subr.mxu0 0.0
    %3747 = vmatpush1.msra.mxu0 0.0
    %3748 = vmatprep.subr.mxu0 0.0
    %3749 = vmatpush1.msra.mxu0 0.0
    %3750 = vmatprep.subr.mxu0 0.0
    %3751 = vmatpush1.msra.mxu0 0.0
    %3752 = vmatprep.subr.mxu0 0.0
    %3753 = vmatpush1.msra.mxu0 0.0
    %3754 = vmatprep.subr.mxu0 0.0
    %3755 = vmatpush1.msra.mxu0 0.0
    %3756 = vmatprep.subr.mxu0 0.0
    %3757 = vmatpush1.msra.mxu0 0.0
    %3758 = vmatprep.subr.mxu0 0.0
    %3759 = vmatpush1.msra.mxu0 0.0
    %3760 = vmatprep.subr.mxu0 0.0
    %3761 = vmatpush1.msra.mxu0 0.0
    %3762 = vmatprep.subr.mxu0 0.0
    %3763 = vmatpush1.msra.mxu0 0.0
    %3764 = vmatprep.subr.mxu0 0.0
    %3765 = vmatpush1.msra.mxu0 0.0
    %3766 = vmatprep.subr.mxu0 0.0
    %3767 = vmatpush1.msra.mxu0 0.0
    %3768 = vmatprep.mubr.f32.mxu0 0.0
    %v3769 = vand.u32 %v3700, 4294901760
    %v3770 = vsub.f32 %v3700, %v3769
    %v3771 = vand.u32 %v3770, 4294901760
    %v3772 = vsub.f32 %v3770, %v3771
    %v3773 = vand.u32 %v3772, 4294901760
    %3774 = vmatmul.mubr.f32.gmra.mrb[0].mxu0 %v3773
    %v3775 = vpop.f32.mrb[0].mxu0
    %v3776 = vadd.f32 %v3697, %v3775
    %v3777 = vpop.f32.mrb[0].mxu0
    %3778 = vdwg.mxu0
    %3779 = vmatprep.subr.mxu0 0.0
    %v3780 = vand.u32 %v3691, 4294901760
    %v3781 = vsub.f32 %v3691, %v3780
    %v3782 = vand.u32 %v3781, 4294901760
    %v3783 = vsub.f32 %v3781, %v3782
    %v3784 = vand.u32 %v3783, 4294901760
    %3785 = vmatpush1.msra.mxu0 %v3784
    %3786 = vmatprep.subr.mxu0 0.0
    %v3787 = vand.u32 %v3692, 4294901760
    %v3788 = vsub.f32 %v3692, %v3787
    %v3789 = vand.u32 %v3788, 4294901760
    %v3790 = vsub.f32 %v3788, %v3789
    %v3791 = vand.u32 %v3790, 4294901760
    %3792 = vmatpush1.msra.mxu0 %v3791
    %3793 = vmatprep.subr.mxu0 0.0
    %3794 = vmatpush1.msra.mxu0 0.0
    %3795 = vmatprep.subr.mxu0 0.0
    %3796 = vmatpush1.msra.mxu0 0.0
    %3797 = vmatprep.subr.mxu0 0.0
    %3798 = vmatpush1.msra.mxu0 0.0
    %3799 = vmatprep.subr.mxu0 0.0
    %3800 = vmatpush1.msra.mxu0 0.0
    %3801 = vmatprep.subr.mxu0 0.0
    %3802 = vmatpush1.msra.mxu0 0.0
    %3803 = vmatprep.subr.mxu0 0.0
    %3804 = vmatpush1.msra.mxu0 0.0
    %3805 = vmatprep.subr.mxu0 0.0
    %3806 = vmatpush1.msra.mxu0 0.0
    %3807 = vmatprep.subr.mxu0 0.0
    %3808 = vmatpush1.msra.mxu0 0.0
    %3809 = vmatprep.subr.mxu0 0.0
    %3810 = vmatpush1.msra.mxu0 0.0
    %3811 = vmatprep.subr.mxu0 0.0
    %3812 = vmatpush1.msra.mxu0 0.0
    %3813 = vmatprep.subr.mxu0 0.0
    %3814 = vmatpush1.msra.mxu0 0.0
    %3815 = vmatprep.subr.mxu0 0.0
    %3816 = vmatpush1.msra.mxu0 0.0
    %3817 = vmatprep.subr.mxu0 0.0
    %3818 = vmatpush1.msra.mxu0 0.0
    %3819 = vmatprep.subr.mxu0 0.0
    %3820 = vmatpush1.msra.mxu0 0.0
    %3821 = vmatprep.subr.mxu0 0.0
    %3822 = vmatpush1.msra.mxu0 0.0
    %3823 = vmatprep.subr.mxu0 0.0
    %3824 = vmatpush1.msra.mxu0 0.0
    %3825 = vmatprep.subr.mxu0 0.0
    %3826 = vmatpush1.msra.mxu0 0.0
    %3827 = vmatprep.subr.mxu0 0.0
    %3828 = vmatpush1.msra.mxu0 0.0
    %3829 = vmatprep.subr.mxu0 0.0
    %3830 = vmatpush1.msra.mxu0 0.0
    %3831 = vmatprep.subr.mxu0 0.0
    %3832 = vmatpush1.msra.mxu0 0.0
    %3833 = vmatprep.subr.mxu0 0.0
    %3834 = vmatpush1.msra.mxu0 0.0
    %3835 = vmatprep.subr.mxu0 0.0
    %3836 = vmatpush1.msra.mxu0 0.0
    %3837 = vmatprep.subr.mxu0 0.0
    %3838 = vmatpush1.msra.mxu0 0.0
    %3839 = vmatprep.subr.mxu0 0.0
    %3840 = vmatpush1.msra.mxu0 0.0
    %3841 = vmatprep.subr.mxu0 0.0
    %3842 = vmatpush1.msra.mxu0 0.0
    %3843 = vmatprep.subr.mxu0 0.0
    %3844 = vmatpush1.msra.mxu0 0.0
    %3845 = vmatprep.subr.mxu0 0.0
    %3846 = vmatpush1.msra.mxu0 0.0
    %3847 = vmatprep.subr.mxu0 0.0
    %3848 = vmatpush1.msra.mxu0 0.0
    %3849 = vmatprep.subr.mxu0 0.0
    %3850 = vmatpush1.msra.mxu0 0.0
    %3851 = vmatprep.subr.mxu0 0.0
    %3852 = vmatpush1.msra.mxu0 0.0
    %3853 = vmatprep.mubr.f32.mxu0 0.0
    %v3854 = vand.u32 %v3700, 4294901760
    %3855 = vmatmul.mubr.f32.gmra.mrb[0].mxu0 %v3854
    %v3856 = vpop.f32.mrb[0].mxu0
    %v3857 = vadd.f32 %v3776, %v3856
    %v3858 = vpop.f32.mrb[0].mxu0
    %3859 = vdwg.mxu0
    %3860 = vmatprep.subr.mxu0 0.0
    %v3861 = vand.u32 %v3691, 4294901760
    %v3862 = vsub.f32 %v3691, %v3861
    %3863 = vmatpush1.msra.mxu0 %v3862
    %3864 = vmatprep.subr.mxu0 0.0
    %v3865 = vand.u32 %v3692, 4294901760
    %v3866 = vsub.f32 %v3692, %v3865
    %3867 = vmatpush1.msra.mxu0 %v3866
    %3868 = vmatprep.subr.mxu0 0.0
    %3869 = vmatpush1.msra.mxu0 0.0
    %3870 = vmatprep.subr.mxu0 0.0
    %3871 = vmatpush1.msra.mxu0 0.0
    %3872 = vmatprep.subr.mxu0 0.0
    %3873 = vmatpush1.msra.mxu0 0.0
    %3874 = vmatprep.subr.mxu0 0.0
    %3875 = vmatpush1.msra.mxu0 0.0
    %3876 = vmatprep.subr.mxu0 0.0
    %3877 = vmatpush1.msra.mxu0 0.0
    %3878 = vmatprep.subr.mxu0 0.0
    %3879 = vmatpush1.msra.mxu0 0.0
    %3880 = vmatprep.subr.mxu0 0.0
    %3881 = vmatpush1.msra.mxu0 0.0
    %3882 = vmatprep.subr.mxu0 0.0
    %3883 = vmatpush1.msra.mxu0 0.0
    %3884 = vmatprep.subr.mxu0 0.0
    %3885 = vmatpush1.msra.mxu0 0.0
    %3886 = vmatprep.subr.mxu0 0.0
    %3887 = vmatpush1.msra.mxu0 0.0
    %3888 = vmatprep.subr.mxu0 0.0
    %3889 = vmatpush1.msra.mxu0 0.0
    %3890 = vmatprep.subr.mxu0 0.0
    %3891 = vmatpush1.msra.mxu0 0.0
    %3892 = vmatprep.subr.mxu0 0.0
    %3893 = vmatpush1.msra.mxu0 0.0
    %3894 = vmatprep.subr.mxu0 0.0
    %3895 = vmatpush1.msra.mxu0 0.0
    %3896 = vmatprep.subr.mxu0 0.0
    %3897 = vmatpush1.msra.mxu0 0.0
    %3898 = vmatprep.subr.mxu0 0.0
    %3899 = vmatpush1.msra.mxu0 0.0
    %3900 = vmatprep.subr.mxu0 0.0
    %3901 = vmatpush1.msra.mxu0 0.0
    %3902 = vmatprep.subr.mxu0 0.0
    %3903 = vmatpush1.msra.mxu0 0.0
    %3904 = vmatprep.subr.mxu0 0.0
    %3905 = vmatpush1.msra.mxu0 0.0
    %3906 = vmatprep.subr.mxu0 0.0
    %3907 = vmatpush1.msra.mxu0 0.0
    %3908 = vmatprep.subr.mxu0 0.0
    %3909 = vmatpush1.msra.mxu0 0.0
    %3910 = vmatprep.subr.mxu0 0.0
    %3911 = vmatpush1.msra.mxu0 0.0
    %3912 = vmatprep.subr.mxu0 0.0
    %3913 = vmatpush1.msra.mxu0 0.0
    %3914 = vmatprep.subr.mxu0 0.0
    %3915 = vmatpush1.msra.mxu0 0.0
    %3916 = vmatprep.subr.mxu0 0.0
    %3917 = vmatpush1.msra.mxu0 0.0
    %3918 = vmatprep.subr.mxu0 0.0
    %3919 = vmatpush1.msra.mxu0 0.0
    %3920 = vmatprep.subr.mxu0 0.0
    %3921 = vmatpush1.msra.mxu0 0.0
    %3922 = vmatprep.subr.mxu0 0.0
    %3923 = vmatpush1.msra.mxu0 0.0
    %3924 = vmatprep.subr.mxu0 0.0
    %3925 = vmatpush1.msra.mxu0 0.0
    %3926 = vmatprep.subr.mxu0 0.0
    %3927 = vmatpush1.msra.mxu0 0.0
    %3928 = vmatprep.mubr.f32.mxu0 0.0
    %v3929 = vand.u32 %v3700, 4294901760
    %v3930 = vsub.f32 %v3700, %v3929
    %3931 = vmatmul.mubr.f32.gmra.mrb[0].mxu0 %v3930
    %v3932 = vpop.f32.mrb[0].mxu0
    %v3933 = vadd.f32 %v3857, %v3932
    %v3934 = vpop.f32.mrb[0].mxu0
    %3935 = vdwg.mxu0
    %3936 = vmatprep.subr.mxu0 0.0
    %v3937 = vand.u32 %v3691, 4294901760
    %3938 = vmatpush1.msra.mxu0 %v3937
    %3939 = vmatprep.subr.mxu0 0.0
    %v3940 = vand.u32 %v3692, 4294901760
    %3941 = vmatpush1.msra.mxu0 %v3940
    %3942 = vmatprep.subr.mxu0 0.0
    %3943 = vmatpush1.msra.mxu0 0.0
    %3944 = vmatprep.subr.mxu0 0.0
    %3945 = vmatpush1.msra.mxu0 0.0
    %3946 = vmatprep.subr.mxu0 0.0
    %3947 = vmatpush1.msra.mxu0 0.0
    %3948 = vmatprep.subr.mxu0 0.0
    %3949 = vmatpush1.msra.mxu0 0.0
    %3950 = vmatprep.subr.mxu0 0.0
    %3951 = vmatpush1.msra.mxu0 0.0
    %3952 = vmatprep.subr.mxu0 0.0
    %3953 = vmatpush1.msra.mxu0 0.0
    %3954 = vmatprep.subr.mxu0 0.0
    %3955 = vmatpush1.msra.mxu0 0.0
    %3956 = vmatprep.subr.mxu0 0.0
    %3957 = vmatpush1.msra.mxu0 0.0
    %3958 = vmatprep.subr.mxu0 0.0
    %3959 = vmatpush1.msra.mxu0 0.0
    %3960 = vmatprep.subr.mxu0 0.0
    %3961 = vmatpush1.msra.mxu0 0.0
    %3962 = vmatprep.subr.mxu0 0.0
    %3963 = vmatpush1.msra.mxu0 0.0
    %3964 = vmatprep.subr.mxu0 0.0
    %3965 = vmatpush1.msra.mxu0 0.0
    %3966 = vmatprep.subr.mxu0 0.0
    %3967 = vmatpush1.msra.mxu0 0.0
    %3968 = vmatprep.subr.mxu0 0.0
    %3969 = vmatpush1.msra.mxu0 0.0
    %3970 = vmatprep.subr.mxu0 0.0
    %3971 = vmatpush1.msra.mxu0 0.0
    %3972 = vmatprep.subr.mxu0 0.0
    %3973 = vmatpush1.msra.mxu0 0.0
    %3974 = vmatprep.subr.mxu0 0.0
    %3975 = vmatpush1.msra.mxu0 0.0
    %3976 = vmatprep.subr.mxu0 0.0
    %3977 = vmatpush1.msra.mxu0 0.0
    %3978 = vmatprep.subr.mxu0 0.0
    %3979 = vmatpush1.msra.mxu0 0.0
    %3980 = vmatprep.subr.mxu0 0.0
    %3981 = vmatpush1.msra.mxu0 0.0
    %3982 = vmatprep.subr.mxu0 0.0
    %3983 = vmatpush1.msra.mxu0 0.0
    %3984 = vmatprep.subr.mxu0 0.0
    %3985 = vmatpush1.msra.mxu0 0.0
    %3986 = vmatprep.subr.mxu0 0.0
    %3987 = vmatpush1.msra.mxu0 0.0
    %3988 = vmatprep.subr.mxu0 0.0
    %3989 = vmatpush1.msra.mxu0 0.0
    %3990 = vmatprep.subr.mxu0 0.0
    %3991 = vmatpush1.msra.mxu0 0.0
    %3992 = vmatprep.subr.mxu0 0.0
    %3993 = vmatpush1.msra.mxu0 0.0
    %3994 = vmatprep.subr.mxu0 0.0
    %3995 = vmatpush1.msra.mxu0 0.0
    %3996 = vmatprep.subr.mxu0 0.0
    %3997 = vmatpush1.msra.mxu0 0.0
    %3998 = vmatprep.subr.mxu0 0.0
    %3999 = vmatpush1.msra.mxu0 0.0
    %4000 = vmatprep.subr.mxu0 0.0
    %4001 = vmatpush1.msra.mxu0 0.0
    %4002 = vmatprep.mubr.f32.mxu0 0.0
    %v4003 = vand.u32 %v3700, 4294901760
    %v4004 = vsub.f32 %v3700, %v4003
    %v4005 = vand.u32 %v4004, 4294901760
    %4006 = vmatmul.mubr.f32.gmra.mrb[0].mxu0 %v4005
    %v4007 = vpop.f32.mrb[0].mxu0
    %v4008 = vadd.f32 %v3933, %v4007
    %v4009 = vpop.f32.mrb[0].mxu0
    %4010 = vdwg.mxu0
    %4011 = vmatprep.subr.mxu0 0.0
    %v4012 = vand.u32 %v3691, 4294901760
    %v4013 = vsub.f32 %v3691, %v4012
    %v4014 = vand.u32 %v4013, 4294901760
    %4015 = vmatpush1.msra.mxu0 %v4014
    %4016 = vmatprep.subr.mxu0 0.0
    %v4017 = vand.u32 %v3692, 4294901760
    %v4018 = vsub.f32 %v3692, %v4017
    %v4019 = vand.u32 %v4018, 4294901760
    %4020 = vmatpush1.msra.mxu0 %v4019
    %4021 = vmatprep.subr.mxu0 0.0
    %4022 = vmatpush1.msra.mxu0 0.0
    %4023 = vmatprep.subr.mxu0 0.0
    %4024 = vmatpush1.msra.mxu0 0.0
    %4025 = vmatprep.subr.mxu0 0.0
    %4026 = vmatpush1.msra.mxu0 0.0
    %4027 = vmatprep.subr.mxu0 0.0
    %4028 = vmatpush1.msra.mxu0 0.0
    %4029 = vmatprep.subr.mxu0 0.0
    %4030 = vmatpush1.msra.mxu0 0.0
    %4031 = vmatprep.subr.mxu0 0.0
    %4032 = vmatpush1.msra.mxu0 0.0
    %4033 = vmatprep.subr.mxu0 0.0
    %4034 = vmatpush1.msra.mxu0 0.0
    %4035 = vmatprep.subr.mxu0 0.0
    %4036 = vmatpush1.msra.mxu0 0.0
    %4037 = vmatprep.subr.mxu0 0.0
    %4038 = vmatpush1.msra.mxu0 0.0
    %4039 = vmatprep.subr.mxu0 0.0
    %4040 = vmatpush1.msra.mxu0 0.0
    %4041 = vmatprep.subr.mxu0 0.0
    %4042 = vmatpush1.msra.mxu0 0.0
    %4043 = vmatprep.subr.mxu0 0.0
    %4044 = vmatpush1.msra.mxu0 0.0
    %4045 = vmatprep.subr.mxu0 0.0
    %4046 = vmatpush1.msra.mxu0 0.0
    %4047 = vmatprep.subr.mxu0 0.0
    %4048 = vmatpush1.msra.mxu0 0.0
    %4049 = vmatprep.subr.mxu0 0.0
    %4050 = vmatpush1.msra.mxu0 0.0
    %4051 = vmatprep.subr.mxu0 0.0
    %4052 = vmatpush1.msra.mxu0 0.0
    %4053 = vmatprep.subr.mxu0 0.0
    %4054 = vmatpush1.msra.mxu0 0.0
    %4055 = vmatprep.subr.mxu0 0.0
    %4056 = vmatpush1.msra.mxu0 0.0
    %4057 = vmatprep.subr.mxu0 0.0
    %4058 = vmatpush1.msra.mxu0 0.0
    %4059 = vmatprep.subr.mxu0 0.0
    %4060 = vmatpush1.msra.mxu0 0.0
    %4061 = vmatprep.subr.mxu0 0.0
    %4062 = vmatpush1.msra.mxu0 0.0
    %4063 = vmatprep.subr.mxu0 0.0
    %4064 = vmatpush1.msra.mxu0 0.0
    %4065 = vmatprep.subr.mxu0 0.0
    %4066 = vmatpush1.msra.mxu0 0.0
    %4067 = vmatprep.subr.mxu0 0.0
    %4068 = vmatpush1.msra.mxu0 0.0
    %4069 = vmatprep.subr.mxu0 0.0
    %4070 = vmatpush1.msra.mxu0 0.0
    %4071 = vmatprep.subr.mxu0 0.0
    %4072 = vmatpush1.msra.mxu0 0.0
    %4073 = vmatprep.subr.mxu0 0.0
    %4074 = vmatpush1.msra.mxu0 0.0
    %4075 = vmatprep.subr.mxu0 0.0
    %4076 = vmatpush1.msra.mxu0 0.0
    %4077 = vmatprep.subr.mxu0 0.0
    %4078 = vmatpush1.msra.mxu0 0.0
    %4079 = vmatprep.subr.mxu0 0.0
    %4080 = vmatpush1.msra.mxu0 0.0
    %4081 = vmatprep.mubr.f32.mxu0 0.0
    %v4082 = vand.u32 %v3700, 4294901760
    %4083 = vmatmul.mubr.f32.gmra.mrb[0].mxu0 %v4082
    %v4084 = vpop.f32.mrb[0].mxu0
    %v4085 = vadd.f32 %v4008, %v4084
    %v4086 = vpop.f32.mrb[0].mxu0
    %4087 = vdwg.mxu0
    %4088 = vmatprep.subr.mxu0 0.0
    %v4089 = vand.u32 %v3691, 4294901760
    %4090 = vmatpush1.msra.mxu0 %v4089
    %4091 = vmatprep.subr.mxu0 0.0
    %v4092 = vand.u32 %v3692, 4294901760
    %4093 = vmatpush1.msra.mxu0 %v4092
    %4094 = vmatprep.subr.mxu0 0.0
    %4095 = vmatpush1.msra.mxu0 0.0
    %4096 = vmatprep.subr.mxu0 0.0
    %4097 = vmatpush1.msra.mxu0 0.0
    %4098 = vmatprep.subr.mxu0 0.0
    %4099 = vmatpush1.msra.mxu0 0.0
    %4100 = vmatprep.subr.mxu0 0.0
    %4101 = vmatpush1.msra.mxu0 0.0
    %4102 = vmatprep.subr.mxu0 0.0
    %4103 = vmatpush1.msra.mxu0 0.0
    %4104 = vmatprep.subr.mxu0 0.0
    %4105 = vmatpush1.msra.mxu0 0.0
    %4106 = vmatprep.subr.mxu0 0.0
    %4107 = vmatpush1.msra.mxu0 0.0
    %4108 = vmatprep.subr.mxu0 0.0
    %4109 = vmatpush1.msra.mxu0 0.0
    %4110 = vmatprep.subr.mxu0 0.0
    %4111 = vmatpush1.msra.mxu0 0.0
    %4112 = vmatprep.subr.mxu0 0.0
    %4113 = vmatpush1.msra.mxu0 0.0
    %4114 = vmatprep.subr.mxu0 0.0
    %4115 = vmatpush1.msra.mxu0 0.0
    %4116 = vmatprep.subr.mxu0 0.0
    %4117 = vmatpush1.msra.mxu0 0.0
    %4118 = vmatprep.subr.mxu0 0.0
    %4119 = vmatpush1.msra.mxu0 0.0
    %4120 = vmatprep.subr.mxu0 0.0
    %4121 = vmatpush1.msra.mxu0 0.0
    %4122 = vmatprep.subr.mxu0 0.0
    %4123 = vmatpush1.msra.mxu0 0.0
    %4124 = vmatprep.subr.mxu0 0.0
    %4125 = vmatpush1.msra.mxu0 0.0
    %4126 = vmatprep.subr.mxu0 0.0
    %4127 = vmatpush1.msra.mxu0 0.0
    %4128 = vmatprep.subr.mxu0 0.0
    %4129 = vmatpush1.msra.mxu0 0.0
    %4130 = vmatprep.subr.mxu0 0.0
    %4131 = vmatpush1.msra.mxu0 0.0
    %4132 = vmatprep.subr.mxu0 0.0
    %4133 = vmatpush1.msra.mxu0 0.0
    %4134 = vmatprep.subr.mxu0 0.0
    %4135 = vmatpush1.msra.mxu0 0.0
    %4136 = vmatprep.subr.mxu0 0.0
    %4137 = vmatpush1.msra.mxu0 0.0
    %4138 = vmatprep.subr.mxu0 0.0
    %4139 = vmatpush1.msra.mxu0 0.0
    %4140 = vmatprep.subr.mxu0 0.0
    %4141 = vmatpush1.msra.mxu0 0.0
    %4142 = vmatprep.subr.mxu0 0.0
    %4143 = vmatpush1.msra.mxu0 0.0
    %4144 = vmatprep.subr.mxu0 0.0
    %4145 = vmatpush1.msra.mxu0 0.0
    %4146 = vmatprep.subr.mxu0 0.0
    %4147 = vmatpush1.msra.mxu0 0.0
    %4148 = vmatprep.subr.mxu0 0.0
    %4149 = vmatpush1.msra.mxu0 0.0
    %4150 = vmatprep.subr.mxu0 0.0
    %4151 = vmatpush1.msra.mxu0 0.0
    %4152 = vmatprep.subr.mxu0 0.0
    %4153 = vmatpush1.msra.mxu0 0.0
    %4154 = vmatprep.mubr.f32.mxu0 0.0
    %v4155 = vand.u32 %v3700, 4294901760
    %4156 = vmatmul.mubr.f32.gmra.mrb[0].mxu0 %v4155
    %v4157 = vpop.f32.mrb[0].mxu0
    %v4158 = vadd.f32 %v4085, %v4157
    %v4159 = vpop.f32.mrb[0].mxu0
    %4160 = vdwg.mxu0
    %vm4161 = vcmask 80896
    %4162 = vst.msk [vmem:[#allocation2] sm:$0xff] %vm4161, %v4158
    // Predicated region
    $region30: #{tpu_custom_call.1} parent=1 // pred_check
      _
    $region31: #{tpu_custom_call.1} parent=1 // pred_check_branch
      %4164 = sbr.rel (0) target = $region33
    $region32: #{tpu_custom_call.1} parent=1 // pred_region
      %s4166 = ssub.s32 128, 128
      %4167 = vsyncadd [#allocation3], %s4166
      %s4169 = sshll.u32 [#allocation2], 4
      %s4170 = int_to_ptr.vmem [resolvable:$true] %s4169
      %4172 = dma.vmem_to_hbm [thread:$0]  %s4170, 128, %s7, [#allocation3]
    $region33: #{tpu_custom_call.1} parent=1 // pred_fallthru
      _
    // Predicated region
    $region34: #{tpu_custom_call.1} parent=1 // pred_check
      _
    $region35: #{tpu_custom_call.1} parent=1 // pred_check_branch
      %4174 = sbr.rel (0) target = $region37
    $region36: #{tpu_custom_call.1} parent=1 // pred_region
      %4175 = dma.done [#allocation3], 128
    $region37: #{tpu_custom_call.1} parent=1 // pred_fallthru
      _
    %4176 = vsyncpa [#allocation3], 1

</llo_original>
